<compile_context>
chip_gen: v7x
topology: tpu7x:2x2x1
jax: 0.10.0
libtpu: 0.0.40
codegen_flags: <defaults>
</compile_context>

<pallas_src>
import jax
import jax.numpy as jnp
from jax.experimental import pallas as pl
from jax.experimental.pallas import tpu as pltpu

IN_DIM = 400
CHAN_IN = 6                       # implied by reshape to (B, 6, 32, 32)
OUT_DIM = 32 * 32 * CHAN_IN       # 6144
TILE_N = 3072                     # 2 tiles: even count (v7x megacore balance)


def _linear_kernel(x_ref, w_ref, b_ref, o_ref):
    # x_ref: (B, 400) f32       — full activation, resident across the grid
    # w_ref: (400, TILE_N) bf16 — streamed weight column tile
    # b_ref: (1, TILE_N) f32    — per-tile bias
    # o_ref: (B, TILE_N) f32
    x_bf16 = x_ref[...].astype(jnp.bfloat16)
    acc = jnp.dot(x_bf16, w_ref[...], preferred_element_type=jnp.float32)
    o_ref[...] = (acc + b_ref[...]).astype(o_ref.dtype)


def decoder_forward(encs, w_t_bf16, b):
    """encs: (B, 400) f32; w_t_bf16: (400, 6144) bf16; b: (6144,) f32 -> (B, 6, 32, 32)."""
    B = encs.shape[0]
    b2d = b.reshape(1, OUT_DIM)

    bytes_accessed = (
        w_t_bf16.size * w_t_bf16.dtype.itemsize
        + encs.size * encs.dtype.itemsize
        + b2d.size * b2d.dtype.itemsize
        + B * OUT_DIM * 4
    )
    cost = pl.CostEstimate(
        flops=2 * B * IN_DIM * OUT_DIM,
        transcendentals=0,
        bytes_accessed=bytes_accessed,
    )

    out_flat = pl.pallas_call(
        _linear_kernel,
        out_shape=jax.ShapeDtypeStruct((B, OUT_DIM), jnp.float32),
        grid_spec=pltpu.PrefetchScalarGridSpec(
            num_scalar_prefetch=0,
            grid=(OUT_DIM // TILE_N,),
            in_specs=[
                pl.BlockSpec((B, IN_DIM), lambda j: (0, 0)),        # x: resident
                pl.BlockSpec((IN_DIM, TILE_N), lambda j: (0, j)),   # W^T col tile
                pl.BlockSpec((1, TILE_N), lambda j: (0, j)),        # bias col tile
            ],
            out_specs=pl.BlockSpec((B, TILE_N), lambda j: (0, j)),
        ),
        compiler_params=pltpu.CompilerParams(
            dimension_semantics=("parallel",)),
        cost_estimate=cost,
    )(encs, w_t_bf16, b2d)
    return out_flat.reshape(B, CHAN_IN, 32, 32)


def init_params(key):
    """Deterministic init matching nn.Linear(400, 6144) shapes (uniform fan-in)."""
    kw, kb = jax.random.split(key)
    bound = 1.0 / jnp.sqrt(jnp.float32(IN_DIM))
    # PyTorch Linear weight is (out, in); store transposed (in, out) for the kernel.
    w_t = jax.random.uniform(kw, (IN_DIM, OUT_DIM), jnp.float32, -bound, bound)
    b = jax.random.uniform(kb, (OUT_DIM,), jnp.float32, -bound, bound)
    # bf16 weight storage (the only material HBM stream); bias stays f32.
    return w_t.astype(jnp.bfloat16), b


if __name__ == "__main__":
    key = jax.random.PRNGKey(0)
    k_x, k_p = jax.random.split(key)

    B = 2
    encs = jax.random.normal(k_x, (B, IN_DIM), jnp.float32)
    w_t_bf16, b = init_params(k_p)

    decs = decoder_forward(encs, w_t_bf16, b)
    jax.block_until_ready(decs)

    # Reference in plain JAX with the identical bf16-weight / f32-accumulate
    # math (same as torch Linear up to the chosen weight storage precision).
    ref_flat = jnp.dot(encs.astype(jnp.bfloat16), w_t_bf16,
                       preferred_element_type=jnp.float32) + b
    ref = ref_flat.reshape(B, CHAN_IN, 32, 32)

    assert decs.shape == (B, 6, 32, 32)
    assert jnp.allclose(decs, ref, atol=2e-3, rtol=2e-3)

    print("KERNEL_OK")
</pallas_src>

<mosaic_0001>
module attributes {stable_mosaic.version = 11 : i64} {
  func.func @_linear_kernel(%arg0: i32, %arg1: memref<2x400xf32, #tpu.memory_space<vmem>>, %arg2: memref<400x3072xbf16, #tpu.memory_space<vmem>>, %arg3: memref<1x3072xf32, #tpu.memory_space<vmem>>, %arg4: memref<2x3072xf32, #tpu.memory_space<vmem>>) attributes {dimension_semantics = [#tpu.dimension_semantics<parallel>], iteration_bounds = array<i64: 2>, scalar_prefetch = 0 : i64, scratch_operands = 0 : i64, tpu.core_type = #tpu.core_type<tc>, window_params = [{pipeline_mode = #tpu.pipeline_mode<synchronous>, transform_indices = @transform_0, window_bounds = array<i64: 2, 400>}, {transform_indices = @transform_1, window_bounds = array<i64: 400, 3072>}, {transform_indices = @transform_2, window_bounds = array<i64: 1, 3072>}, {transform_indices = @transform_3, window_bounds = array<i64: 2, 3072>}]} {
    %c0 = arith.constant 0 : index
    %c0_0 = arith.constant 0 : index
    %0 = vector.load %arg1[%c0, %c0_0] : memref<2x400xf32, #tpu.memory_space<vmem>>, vector<2x400xf32>
    %1 = arith.truncf %0 : vector<2x400xf32> to vector<2x400xbf16>
    %c0_1 = arith.constant 0 : index
    %c0_2 = arith.constant 0 : index
    %2 = vector.load %arg2[%c0_1, %c0_2] : memref<400x3072xbf16, #tpu.memory_space<vmem>>, vector<400x3072xbf16>
    %cst = arith.constant dense<0.000000e+00> : vector<2x3072xf32>
    %3 = tpu.matmul %1, %2, %cst {dimension_numbers = #tpu.dot_dimension_numbers<[1], [0], [0], [1], [0, 0, 1, 1], [], []>} : vector<2x400xbf16>, vector<400x3072xbf16>, vector<2x3072xf32> -> vector<2x3072xf32>
    %c0_3 = arith.constant 0 : index
    %c0_4 = arith.constant 0 : index
    %4 = vector.load %arg3[%c0_3, %c0_4] : memref<1x3072xf32, #tpu.memory_space<vmem>>, vector<1x3072xf32>
    %5 = vector.broadcast %4 : vector<1x3072xf32> to vector<2x3072xf32>
    %6 = arith.addf %3, %5 : vector<2x3072xf32>
    %c0_5 = arith.constant 0 : index
    %c0_6 = arith.constant 0 : index
    %7 = vector.load %arg4[%c0_5, %c0_6] : memref<2x3072xf32, #tpu.memory_space<vmem>>, vector<2x3072xf32>
    tpu.vector_store %arg4[%c0_5, %c0_6], %6 {strides = array<i32>} : memref<2x3072xf32, #tpu.memory_space<vmem>>, vector<2x3072xf32>,
    return
  }
  func.func @transform_0(%arg0: i32) -> (i32, i32) {
    %c0_i32 = arith.constant 0 : i32
    %c0_i32_0 = arith.constant 0 : i32
    %c0_i32_1 = arith.constant 0 : i32
    return %c0_i32, %c0_i32_0 : i32, i32
  }
  func.func @transform_1(%arg0: i32) -> (i32, i32) {
    %c0_i32 = arith.constant 0 : i32
    %c0_i32_0 = arith.constant 0 : i32
    return %c0_i32, %arg0 : i32, i32
  }
  func.func @transform_2(%arg0: i32) -> (i32, i32) {
    %c0_i32 = arith.constant 0 : i32
    %c0_i32_0 = arith.constant 0 : i32
    return %c0_i32, %arg0 : i32, i32
  }
  func.func @transform_3(%arg0: i32) -> (i32, i32) {
    %c0_i32 = arith.constant 0 : i32
    %c0_i32_0 = arith.constant 0 : i32
    return %c0_i32, %arg0 : i32, i32
  }
}

</mosaic_0001>

<llo_original>
// kernel: tpu_custom_call.1
$region0: #{tpu_custom_call.1}
  #allocation0 [shape = 'u32[]', space=smem, size = 0x4, offset = 0x4, fixed_abs, tag = 'smem constant byte address 0x4 - core index']
  #allocation1 [shape = 'u32[144,128]{1,0:T(1,128)}', space=vmem, size = 0x12000, scoped, tag = 'internal scratch']
  %s0 = inlined_call_operand.hbm [shape: f32[2,400], index: 0, kind: input, shape index: {}]
  %s1 = inlined_call_operand.hbm [shape: bf16[400,6144], index: 1, kind: input, shape index: {}]
  %s2 = inlined_call_operand.hbm [shape: f32[1,6144], index: 2, kind: input, shape index: {}]
  %s3 = inlined_call_operand.hbm [shape: f32[2,6144], index: 3, kind: output, shape index: {}]
  %s4 = sld [smem:[#allocation0]]
  $region57: #{tpu_custom_call.1} parent=0
    _
  %s6 = ssub.s32 1, %s4
  %s7 = scalar_select 0, %s6, %s4
  $region1: #{tpu_custom_call.1} parent=0
    #allocation2 [shape = 'u8[4096]{0}', space=vmem, size = 0x1000, scoped, tag = 'input window, operand 0, single buffered']
    #allocation3 [shape = 's32[2]{0}', space=sflag, size = 0x8, scoped, tag = 'scoped memory for tpu_custom_call.1']
    #allocation4 [shape = 's32[2]{0}', space=sflag, size = 0x8, scoped, tag = 'scoped memory for tpu_custom_call.1']
    #allocation5 [shape = 'u8[4915200]{0}', space=vmem, size = 0x4b0000, scoped, tag = 'input window, operand 1']
    #allocation6 [shape = 's32[2]{0}', space=sflag, size = 0x8, scoped, tag = 'scoped memory for tpu_custom_call.1']
    #allocation7 [shape = 'u8[24576]{0}', space=vmem, size = 0x6000, scoped, tag = 'input window, operand 2']
    #allocation8 [shape = 'u8[49152]{0}', space=vmem, size = 0xc000, scoped, tag = 'output window, operand 0']
    %8 = vsyncpa [#allocation3], 0
    %9 = vsyncpa [#allocation6], 0
    %s10 = scalar_lea.sflag [#allocation6], 1
    %11 = vsyncpa %s10, 0
    %12 = vsyncpa [#allocation4], 0
    %s13 = scalar_lea.sflag [#allocation4], 1
    %14 = vsyncpa %s13, 0
    loop: start=0, step=1, limit=4
    $region2: #{tpu_custom_call.1} parent=1 // loop_pre_header
      _
    $region3: #{tpu_custom_call.1} parent=1 // loop_header
      %s16 = sphi 0, %s20
      %p17 = scmp.ge.s32.totalorder %s16, 4
      %s24 = sphi 0, %s24
      %s26 = sphi 0, %s24
      %s27 = sphi 0, %s26
      %s41 = sphi 0, %s27
      %s47 = sphi 0, %s49
      %s50 = sphi 0, %s47
      %s51 = sphi 0, %s50
      %s67 = sphi 0, %s51
      %s73 = sphi 0, %s75
      %s76 = sphi 0, %s73
      %s77 = sphi 0, %s76
      %s93 = sphi 0, %s77
      %s99 = sphi 0, %s101
      %s102 = sphi 0, %s99
      %s103 = sphi 0, %s102
      %s119 = sphi 0, %s103
    $region4: #{tpu_custom_call.1} parent=1 // loop_header_branch
      %19 = sbr.rel (%p17) target = $region8
    $region5: #{tpu_custom_call.1} parent=1 // loop_body
      %s21 = ssub.s32 %s16, 1
      %s22 = ssub.s32 %s16, 2
      %s23 = sadd.s32 %s16, 1
      %s25 = sadd.s32 %s24, 1
      %p28 = scmp.eq.s32.totalorder %s16, 1
      %p29 = scmp.ne.s32.totalorder %s24, %s26
      %p30 = scmp.eq.s32.totalorder %s16, 0
      %p31 = por %p29, %p30
      %p32 = scmp.ne.s32.totalorder %s24, %s26
      %p33 = scmp.eq.s32.totalorder %s21, 1
      %p34 = por %p32, %p33
      %p35 = scmp.ne.s32.totalorder %s26, %s27
      %p36 = scmp.eq.s32.totalorder %s21, 0
      %p37 = por %p35, %p36
      %p38 = scmp.ne.s32.totalorder %s26, %s27
      %p39 = scmp.eq.s32.totalorder %s22, 1
      %p40 = por %p38, %p39
      %p42 = scmp.ne.s32.totalorder %s27, %s41
      %p43 = scmp.eq.s32.totalorder %s22, 0
      %p44 = por %p42, %p43
      %s45 = ssub.s32 %s16, %s23
      %p46 = scmp.eq.s32.totalorder %s45, 0
      %s48 = sadd.s32 %s47, 1
      %s49 = scalar_select %p46, %s47, %s48
      %p52 = pneg %p46
      %p53 = scmp.eq.s32.totalorder %s16, 1
      %p54 = por %p52, %p53
      %p55 = scmp.ne.s32.totalorder %s47, %s50
      %p56 = scmp.eq.s32.totalorder %s16, 0
      %p57 = por %p55, %p56
      %p58 = scmp.ne.s32.totalorder %s47, %s50
      %p59 = scmp.eq.s32.totalorder %s21, 1
      %p60 = por %p58, %p59
      %p61 = scmp.ne.s32.totalorder %s50, %s51
      %p62 = scmp.eq.s32.totalorder %s21, 0
      %p63 = por %p61, %p62
      %p64 = scmp.ne.s32.totalorder %s50, %s51
      %p65 = scmp.eq.s32.totalorder %s22, 1
      %p66 = por %p64, %p65
      %p68 = scmp.ne.s32.totalorder %s51, %s67
      %p69 = scmp.eq.s32.totalorder %s22, 0
      %p70 = por %p68, %p69
      %s71 = ssub.s32 %s16, %s23
      %p72 = scmp.eq.s32.totalorder %s71, 0
      %s74 = sadd.s32 %s73, 1
      %s75 = scalar_select %p72, %s73, %s74
      %p78 = pneg %p72
      %p79 = scmp.eq.s32.totalorder %s16, 1
      %p80 = por %p78, %p79
      %p81 = scmp.ne.s32.totalorder %s73, %s76
      %p82 = scmp.eq.s32.totalorder %s16, 0
      %p83 = por %p81, %p82
      %p84 = scmp.ne.s32.totalorder %s73, %s76
      %p85 = scmp.eq.s32.totalorder %s21, 1
      %p86 = por %p84, %p85
      %p87 = scmp.ne.s32.totalorder %s76, %s77
      %p88 = scmp.eq.s32.totalorder %s21, 0
      %p89 = por %p87, %p88
      %p90 = scmp.ne.s32.totalorder %s76, %s77
      %p91 = scmp.eq.s32.totalorder %s22, 1
      %p92 = por %p90, %p91
      %p94 = scmp.ne.s32.totalorder %s77, %s93
      %p95 = scmp.eq.s32.totalorder %s22, 0
      %p96 = por %p94, %p95
      %s97 = ssub.s32 %s16, %s23
      %p98 = scmp.eq.s32.totalorder %s97, 0
      %s100 = sadd.s32 %s99, 1
      %s101 = scalar_select %p98, %s99, %s100
      %p104 = pneg %p98
      %p105 = scmp.eq.s32.totalorder %s16, 1
      %p106 = por %p104, %p105
      %p107 = scmp.ne.s32.totalorder %s99, %s102
      %p108 = scmp.eq.s32.totalorder %s16, 0
      %p109 = por %p107, %p108
      %p110 = scmp.ne.s32.totalorder %s99, %s102
      %p111 = scmp.eq.s32.totalorder %s21, 1
      %p112 = por %p110, %p111
      %p113 = scmp.ne.s32.totalorder %s102, %s103
      %p114 = scmp.eq.s32.totalorder %s21, 0
      %p115 = por %p113, %p114
      %p116 = scmp.ne.s32.totalorder %s102, %s103
      %p117 = scmp.eq.s32.totalorder %s22, 1
      %p118 = por %p116, %p117
      %p120 = scmp.ne.s32.totalorder %s103, %s119
      %p121 = scmp.eq.s32.totalorder %s22, 0
      %p122 = por %p120, %p121
      %p123 = scmp.le.s32.totalorder 1, %s16
      %p124 = scmp.lt.s32.totalorder %s16, 3
      %p125 = pnand %p123, %p124
      %p126 = pneg %p125
      // Predicated region
      $region9: #{tpu_custom_call.1} parent=5 // pred_check
        _
      $region10: #{tpu_custom_call.1} parent=5 // pred_check_branch
        %128 = sbr.rel (%p125) target = $region12
      $region11: #{tpu_custom_call.1} parent=5 // pred_region
        %s129 = ssub.s32 %s16, 1
        // Predicated region
        $region13: #{tpu_custom_call.1} parent=11 // pred_check
          %p130 = pneg %p37
        $region14: #{tpu_custom_call.1} parent=11 // pred_check_branch
          %132 = sbr.rel (%p130) target = $region16
        $region15: #{tpu_custom_call.1} parent=11 // pred_region
          %s134 = ssub.s32 128, 128
          %135 = vsyncadd [#allocation3], %s134
          %s137 = sshll.u32 [#allocation2], 4
          %s138 = int_to_ptr.vmem [resolvable:$true] %s137
          %140 = dma.hbm_to_vmem [thread:$0]  %s0, 128, %s138, [#allocation3]
        $region16: #{tpu_custom_call.1} parent=11 // pred_fallthru
          _
      $region12: #{tpu_custom_call.1} parent=5 // pred_fallthru
        _
      %p141 = scmp.lt.s32.totalorder %s16, 2
      // Predicated region
      $region17: #{tpu_custom_call.1} parent=5 // pred_check
        %p142 = pneg %p141
      $region18: #{tpu_custom_call.1} parent=5 // pred_check_branch
        %144 = sbr.rel (%p142) target = $region20
      $region19: #{tpu_custom_call.1} parent=5 // pred_region
        // Predicated region
        $region21: #{tpu_custom_call.1} parent=19 // pred_check
          %p145 = pneg %p57
        $region22: #{tpu_custom_call.1} parent=19 // pred_check_branch
          %147 = sbr.rel (%p145) target = $region24
        $region23: #{tpu_custom_call.1} parent=19 // pred_region
          %s148 = sand.u32 %s16, 1
          %s149 = scalar_lea.sflag [#allocation6], %s148
          %s150 = sand.u32 %s47, 1
          %s151 = smul.addr %s150, 4800
          %s152 = scalar_lea.vmem [#allocation5], %s151
          %s153 = smul.u32 24, %s16
          %s155 = ssub.s32 76800, 76800
          %156 = vsyncadd %s149, %s155
          %s157 = smul.addr %s153, 64
          %s158 = scalar_lea.hbm %s1, %s157
          %s159 = sshll.u32 %s152, 4
          %s160 = int_to_ptr.vmem [resolvable:$true] %s159
          %165 = dma.hbm_to_vmem [thread:$0]  %s158, 76800, %s160, %s149, 3072, 1536, 96
        $region24: #{tpu_custom_call.1} parent=19 // pred_fallthru
          _
        // Predicated region
        $region25: #{tpu_custom_call.1} parent=19 // pred_check
          %p166 = pneg %p83
        $region26: #{tpu_custom_call.1} parent=19 // pred_check_branch
          %168 = sbr.rel (%p166) target = $region28
        $region27: #{tpu_custom_call.1} parent=19 // pred_region
          %s169 = sand.u32 %s16, 1
          %s170 = scalar_lea.sflag [#allocation6], %s169
          %s171 = sand.u32 %s73, 1
          %s172 = smul.addr %s171, 24
          %s173 = scalar_lea.vmem [#allocation7], %s172
          %s174 = smul.u32 24, %s16
          %s176 = ssub.s32 384, 384
          %177 = vsyncadd %s170, %s176
          %s178 = smul.addr %s174, 16
          %s179 = scalar_lea.hbm %s2, %s178
          %s181 = sshll.u32 %s173, 4
          %s182 = int_to_ptr.vmem [resolvable:$true] %s181
          %184 = dma.hbm_to_vmem [thread:$0]  %s179, 384, %s182, %s170
        $region28: #{tpu_custom_call.1} parent=19 // pred_fallthru
          _
      $region20: #{tpu_custom_call.1} parent=5 // pred_fallthru
        _
      %p185 = scmp.le.s32.totalorder 1, %s16
      %p186 = scmp.lt.s32.totalorder %s16, 3
      %p187 = pnand %p185, %p186
      %p188 = pneg %p187
      // Predicated region
      $region29: #{tpu_custom_call.1} parent=5 // pred_check
        _
      $region30: #{tpu_custom_call.1} parent=5 // pred_check_branch
        %190 = sbr.rel (%p187) target = $region32
      $region31: #{tpu_custom_call.1} parent=5 // pred_region
        %s191 = ssub.s32 %s16, 1
        // Predicated region
        $region33: #{tpu_custom_call.1} parent=31 // pred_check
          %p192 = pneg %p37
        $region34: #{tpu_custom_call.1} parent=31 // pred_check_branch
          %194 = sbr.rel (%p192) target = $region36
        $region35: #{tpu_custom_call.1} parent=31 // pred_region
          %195 = dma.done [#allocation3], 128
        $region36: #{tpu_custom_call.1} parent=31 // pred_fallthru
          _
        %s196 = sand.u32 %s21, 1
        %s197 = scalar_lea.sflag [#allocation6], %s196
        %s198 = sand.u32 %s50, 1
        %s199 = smul.addr %s198, 4800
        %s200 = scalar_lea.vmem [#allocation5], %s199
        // Predicated region
        $region37: #{tpu_custom_call.1} parent=31 // pred_check
          %p201 = pneg %p63
        $region38: #{tpu_custom_call.1} parent=31 // pred_check_branch
          %203 = sbr.rel (%p201) target = $region40
        $region39: #{tpu_custom_call.1} parent=31 // pred_region
          %204 = dma.done %s197, 76800
        $region40: #{tpu_custom_call.1} parent=31 // pred_fallthru
          _
        %s205 = sand.u32 %s21, 1
        %s206 = scalar_lea.sflag [#allocation6], %s205
        %s207 = sand.u32 %s76, 1
        %s208 = smul.addr %s207, 24
        %s209 = scalar_lea.vmem [#allocation7], %s208
        // Predicated region
        $region41: #{tpu_custom_call.1} parent=31 // pred_check
          %p210 = pneg %p89
        $region42: #{tpu_custom_call.1} parent=31 // pred_check_branch
          %212 = sbr.rel (%p210) target = $region44
        $region43: #{tpu_custom_call.1} parent=31 // pred_region
          %213 = dma.done %s206, 384
        $region44: #{tpu_custom_call.1} parent=31 // pred_fallthru
          _
        %p214 = pneg %p37
        %p215 = pneg %p34
        %s216 = sand.u32 %s21, 1
        %s217 = scalar_lea.sflag [#allocation6], %s216
        %s218 = sand.u32 %s50, 1
        %s219 = smul.addr %s218, 4800
        %s220 = scalar_lea.vmem [#allocation5], %s219
        %p221 = pneg %p63
        %p222 = pneg %p60
        %s223 = sand.u32 %s21, 1
        %s224 = scalar_lea.sflag [#allocation6], %s223
        %s225 = sand.u32 %s76, 1
        %s226 = smul.addr %s225, 24
        %s227 = scalar_lea.vmem [#allocation7], %s226
        %p228 = pneg %p89
        %p229 = pneg %p86
        %p230 = pneg %p115
        %p231 = pneg %p112
        %s232 = sand.u32 %s102, 1
        %s233 = scalar_lea.sflag [#allocation4], %s232
        %s234 = sand.u32 %s102, 1
        %s235 = smul.addr %s234, 48
        %s236 = scalar_lea.vmem [#allocation8], %s235
        %s237 = smul.u32 24, %s21
        %s238 = smul.u32 24, %s21
        %s239 = smul.u32 24, %s21
        %v241 = vld [vmem:[#allocation2] sm:$0xff]
        %v243 = vcombine.high %v241, %v241
        %v245 = vunpack.c.l.s4 1983009808
        %v246 = vunpack.c.0.s8 %v245
        %v247 = vlaneseq
        %v248 = vshrl.u32 %v247, 7
        %v249 = vsub.s32 %v246, %v248
        %v250 = vrot.slane %v241, %v249
        %v252 = vunpack.c.l.s4 1983009808
        %v253 = vunpack.c.0.s8 %v252
        %v254 = vlaneseq
        %v255 = vshrl.u32 %v254, 7
        %v256 = vsub.s32 %v253, %v255
        %v257 = vrot.slane %v243, %v256
        %v258 = vcombine.high %v250, %v250
        %v259 = vcombine.high %v257, %v257
        %v264 = vpack.c.bf16 %v250, %v250
        %v265 = vpack.c.bf16 %v258, %v258
        %v266 = vpack.c.bf16 %v257, %v257
        %v267 = vpack.c.bf16 %v259, %v259
        %v268 = vld [vmem:[%s200] sm:$0xff]
        %v269 = vld [vmem:[%s200 + $0x8] sm:$0xff]
        %v270 = vld [vmem:[%s200 + $0x10] sm:$0xff]
        %v271 = vld [vmem:[%s200 + $0x18] sm:$0xff]
        %v272 = vld [vmem:[%s200 + $0x20] sm:$0xff]
        %v273 = vld [vmem:[%s200 + $0x28] sm:$0xff]
        %v274 = vld [vmem:[%s200 + $0x30] sm:$0xff]
        %v275 = vld [vmem:[%s200 + $0x38] sm:$0xff]
        %v276 = vld [vmem:[%s200 + $0x40] sm:$0xff]
        %v277 = vld [vmem:[%s200 + $0x48] sm:$0xff]
        %v278 = vld [vmem:[%s200 + $0x50] sm:$0xff]
        %v279 = vld [vmem:[%s200 + $0x58] sm:$0xff]
        %v280 = vld [vmem:[%s200 + $0x60] sm:$0xff]
        %v281 = vld [vmem:[%s200 + $0x68] sm:$0xff]
        %v282 = vld [vmem:[%s200 + $0x70] sm:$0xff]
        %v283 = vld [vmem:[%s200 + $0x78] sm:$0xff]
        %v284 = vld [vmem:[%s200 + $0x80] sm:$0xff]
        %v285 = vld [vmem:[%s200 + $0x88] sm:$0xff]
        %v286 = vld [vmem:[%s200 + $0x90] sm:$0xff]
        %v287 = vld [vmem:[%s200 + $0x98] sm:$0xff]
        %v288 = vld [vmem:[%s200 + $0xa0] sm:$0xff]
        %v289 = vld [vmem:[%s200 + $0xa8] sm:$0xff]
        %v290 = vld [vmem:[%s200 + $0xb0] sm:$0xff]
        %v291 = vld [vmem:[%s200 + $0xb8] sm:$0xff]
        %v292 = vld [vmem:[%s200 + $0xc0] sm:$0xff]
        %v293 = vld [vmem:[%s200 + $0xc8] sm:$0xff]
        %v294 = vld [vmem:[%s200 + $0xd0] sm:$0xff]
        %v295 = vld [vmem:[%s200 + $0xd8] sm:$0xff]
        %v296 = vld [vmem:[%s200 + $0xe0] sm:$0xff]
        %v297 = vld [vmem:[%s200 + $0xe8] sm:$0xff]
        %v298 = vld [vmem:[%s200 + $0xf0] sm:$0xff]
        %v299 = vld [vmem:[%s200 + $0xf8] sm:$0xff]
        %v300 = vld [vmem:[%s200 + $0x100] sm:$0xff]
        %v301 = vld [vmem:[%s200 + $0x108] sm:$0xff]
        %v302 = vld [vmem:[%s200 + $0x110] sm:$0xff]
        %v303 = vld [vmem:[%s200 + $0x118] sm:$0xff]
        %v304 = vld [vmem:[%s200 + $0x120] sm:$0xff]
        %v305 = vld [vmem:[%s200 + $0x128] sm:$0xff]
        %v306 = vld [vmem:[%s200 + $0x130] sm:$0xff]
        %v307 = vld [vmem:[%s200 + $0x138] sm:$0xff]
        %v308 = vld [vmem:[%s200 + $0x140] sm:$0xff]
        %v309 = vld [vmem:[%s200 + $0x148] sm:$0xff]
        %v310 = vld [vmem:[%s200 + $0x150] sm:$0xff]
        %v311 = vld [vmem:[%s200 + $0x158] sm:$0xff]
        %v312 = vld [vmem:[%s200 + $0x160] sm:$0xff]
        %v313 = vld [vmem:[%s200 + $0x168] sm:$0xff]
        %v314 = vld [vmem:[%s200 + $0x170] sm:$0xff]
        %v315 = vld [vmem:[%s200 + $0x178] sm:$0xff]
        %v316 = vld [vmem:[%s200 + $0x180] sm:$0xff]
        %v317 = vld [vmem:[%s200 + $0x188] sm:$0xff]
        %v318 = vld [vmem:[%s200 + $0x190] sm:$0xff]
        %v319 = vld [vmem:[%s200 + $0x198] sm:$0xff]
        %v320 = vld [vmem:[%s200 + $0x1a0] sm:$0xff]
        %v321 = vld [vmem:[%s200 + $0x1a8] sm:$0xff]
        %v322 = vld [vmem:[%s200 + $0x1b0] sm:$0xff]
        %v323 = vld [vmem:[%s200 + $0x1b8] sm:$0xff]
        %v324 = vld [vmem:[%s200 + $0x1c0] sm:$0xff]
        %v325 = vld [vmem:[%s200 + $0x1c8] sm:$0xff]
        %v326 = vld [vmem:[%s200 + $0x1d0] sm:$0xff]
        %v327 = vld [vmem:[%s200 + $0x1d8] sm:$0xff]
        %v328 = vld [vmem:[%s200 + $0x1e0] sm:$0xff]
        %v329 = vld [vmem:[%s200 + $0x1e8] sm:$0xff]
        %v330 = vld [vmem:[%s200 + $0x1f0] sm:$0xff]
        %v331 = vld [vmem:[%s200 + $0x1f8] sm:$0xff]
        %v332 = vld [vmem:[%s200 + $0x200] sm:$0xff]
        %v333 = vld [vmem:[%s200 + $0x208] sm:$0xff]
        %v334 = vld [vmem:[%s200 + $0x210] sm:$0xff]
        %v335 = vld [vmem:[%s200 + $0x218] sm:$0xff]
        %v336 = vld [vmem:[%s200 + $0x220] sm:$0xff]
        %v337 = vld [vmem:[%s200 + $0x228] sm:$0xff]
        %v338 = vld [vmem:[%s200 + $0x230] sm:$0xff]
        %v339 = vld [vmem:[%s200 + $0x238] sm:$0xff]
        %v340 = vld [vmem:[%s200 + $0x240] sm:$0xff]
        %v341 = vld [vmem:[%s200 + $0x248] sm:$0xff]
        %v342 = vld [vmem:[%s200 + $0x250] sm:$0xff]
        %v343 = vld [vmem:[%s200 + $0x258] sm:$0xff]
        %v344 = vld [vmem:[%s200 + $0x260] sm:$0xff]
        %v345 = vld [vmem:[%s200 + $0x268] sm:$0xff]
        %v346 = vld [vmem:[%s200 + $0x270] sm:$0xff]
        %v347 = vld [vmem:[%s200 + $0x278] sm:$0xff]
        %v348 = vld [vmem:[%s200 + $0x280] sm:$0xff]
        %v349 = vld [vmem:[%s200 + $0x288] sm:$0xff]
        %v350 = vld [vmem:[%s200 + $0x290] sm:$0xff]
        %v351 = vld [vmem:[%s200 + $0x298] sm:$0xff]
        %v352 = vld [vmem:[%s200 + $0x2a0] sm:$0xff]
        %v353 = vld [vmem:[%s200 + $0x2a8] sm:$0xff]
        %v354 = vld [vmem:[%s200 + $0x2b0] sm:$0xff]
        %v355 = vld [vmem:[%s200 + $0x2b8] sm:$0xff]
        %v356 = vld [vmem:[%s200 + $0x2c0] sm:$0xff]
        %v357 = vld [vmem:[%s200 + $0x2c8] sm:$0xff]
        %v358 = vld [vmem:[%s200 + $0x2d0] sm:$0xff]
        %v359 = vld [vmem:[%s200 + $0x2d8] sm:$0xff]
        %v360 = vld [vmem:[%s200 + $0x2e0] sm:$0xff]
        %v361 = vld [vmem:[%s200 + $0x2e8] sm:$0xff]
        %v362 = vld [vmem:[%s200 + $0x2f0] sm:$0xff]
        %v363 = vld [vmem:[%s200 + $0x2f8] sm:$0xff]
        %v364 = vld [vmem:[%s200 + $0x300] sm:$0xff]
        %v365 = vld [vmem:[%s200 + $0x308] sm:$0xff]
        %v366 = vld [vmem:[%s200 + $0x310] sm:$0xff]
        %v367 = vld [vmem:[%s200 + $0x318] sm:$0xff]
        %v368 = vld [vmem:[%s200 + $0x320] sm:$0xff]
        %v369 = vld [vmem:[%s200 + $0x328] sm:$0xff]
        %v370 = vld [vmem:[%s200 + $0x330] sm:$0xff]
        %v371 = vld [vmem:[%s200 + $0x338] sm:$0xff]
        %v372 = vld [vmem:[%s200 + $0x340] sm:$0xff]
        %v373 = vld [vmem:[%s200 + $0x348] sm:$0xff]
        %v374 = vld [vmem:[%s200 + $0x350] sm:$0xff]
        %v375 = vld [vmem:[%s200 + $0x358] sm:$0xff]
        %v376 = vld [vmem:[%s200 + $0x360] sm:$0xff]
        %v377 = vld [vmem:[%s200 + $0x368] sm:$0xff]
        %v378 = vld [vmem:[%s200 + $0x370] sm:$0xff]
        %v379 = vld [vmem:[%s200 + $0x378] sm:$0xff]
        %v380 = vld [vmem:[%s200 + $0x380] sm:$0xff]
        %v381 = vld [vmem:[%s200 + $0x388] sm:$0xff]
        %v382 = vld [vmem:[%s200 + $0x390] sm:$0xff]
        %v383 = vld [vmem:[%s200 + $0x398] sm:$0xff]
        %v384 = vld [vmem:[%s200 + $0x3a0] sm:$0xff]
        %v385 = vld [vmem:[%s200 + $0x3a8] sm:$0xff]
        %v386 = vld [vmem:[%s200 + $0x3b0] sm:$0xff]
        %v387 = vld [vmem:[%s200 + $0x3b8] sm:$0xff]
        %v388 = vld [vmem:[%s200 + $0x3c0] sm:$0xff]
        %v389 = vld [vmem:[%s200 + $0x3c8] sm:$0xff]
        %v390 = vld [vmem:[%s200 + $0x3d0] sm:$0xff]
        %v391 = vld [vmem:[%s200 + $0x3d8] sm:$0xff]
        %v392 = vld [vmem:[%s200 + $0x3e0] sm:$0xff]
        %v393 = vld [vmem:[%s200 + $0x3e8] sm:$0xff]
        %v394 = vld [vmem:[%s200 + $0x3f0] sm:$0xff]
        %v395 = vld [vmem:[%s200 + $0x3f8] sm:$0xff]
        %v396 = vld [vmem:[%s200 + $0x400] sm:$0xff]
        %v397 = vld [vmem:[%s200 + $0x408] sm:$0xff]
        %v398 = vld [vmem:[%s200 + $0x410] sm:$0xff]
        %v399 = vld [vmem:[%s200 + $0x418] sm:$0xff]
        %v400 = vld [vmem:[%s200 + $0x420] sm:$0xff]
        %v401 = vld [vmem:[%s200 + $0x428] sm:$0xff]
        %v402 = vld [vmem:[%s200 + $0x430] sm:$0xff]
        %v403 = vld [vmem:[%s200 + $0x438] sm:$0xff]
        %v404 = vld [vmem:[%s200 + $0x440] sm:$0xff]
        %v405 = vld [vmem:[%s200 + $0x448] sm:$0xff]
        %v406 = vld [vmem:[%s200 + $0x450] sm:$0xff]
        %v407 = vld [vmem:[%s200 + $0x458] sm:$0xff]
        %v408 = vld [vmem:[%s200 + $0x460] sm:$0xff]
        %v409 = vld [vmem:[%s200 + $0x468] sm:$0xff]
        %v410 = vld [vmem:[%s200 + $0x470] sm:$0xff]
        %v411 = vld [vmem:[%s200 + $0x478] sm:$0xff]
        %v412 = vld [vmem:[%s200 + $0x480] sm:$0xff]
        %v413 = vld [vmem:[%s200 + $0x488] sm:$0xff]
        %v414 = vld [vmem:[%s200 + $0x490] sm:$0xff]
        %v415 = vld [vmem:[%s200 + $0x498] sm:$0xff]
        %v416 = vld [vmem:[%s200 + $0x4a0] sm:$0xff]
        %v417 = vld [vmem:[%s200 + $0x4a8] sm:$0xff]
        %v418 = vld [vmem:[%s200 + $0x4b0] sm:$0xff]
        %v419 = vld [vmem:[%s200 + $0x4b8] sm:$0xff]
        %v420 = vld [vmem:[%s200 + $0x4c0] sm:$0xff]
        %v421 = vld [vmem:[%s200 + $0x4c8] sm:$0xff]
        %v422 = vld [vmem:[%s200 + $0x4d0] sm:$0xff]
        %v423 = vld [vmem:[%s200 + $0x4d8] sm:$0xff]
        %v424 = vld [vmem:[%s200 + $0x4e0] sm:$0xff]
        %v425 = vld [vmem:[%s200 + $0x4e8] sm:$0xff]
        %v426 = vld [vmem:[%s200 + $0x4f0] sm:$0xff]
        %v427 = vld [vmem:[%s200 + $0x4f8] sm:$0xff]
        %v428 = vld [vmem:[%s200 + $0x500] sm:$0xff]
        %v429 = vld [vmem:[%s200 + $0x508] sm:$0xff]
        %v430 = vld [vmem:[%s200 + $0x510] sm:$0xff]
        %v431 = vld [vmem:[%s200 + $0x518] sm:$0xff]
        %v432 = vld [vmem:[%s200 + $0x520] sm:$0xff]
        %v433 = vld [vmem:[%s200 + $0x528] sm:$0xff]
        %v434 = vld [vmem:[%s200 + $0x530] sm:$0xff]
        %v435 = vld [vmem:[%s200 + $0x538] sm:$0xff]
        %v436 = vld [vmem:[%s200 + $0x540] sm:$0xff]
        %v437 = vld [vmem:[%s200 + $0x548] sm:$0xff]
        %v438 = vld [vmem:[%s200 + $0x550] sm:$0xff]
        %v439 = vld [vmem:[%s200 + $0x558] sm:$0xff]
        %v440 = vld [vmem:[%s200 + $0x560] sm:$0xff]
        %v441 = vld [vmem:[%s200 + $0x568] sm:$0xff]
        %v442 = vld [vmem:[%s200 + $0x570] sm:$0xff]
        %v443 = vld [vmem:[%s200 + $0x578] sm:$0xff]
        %v444 = vld [vmem:[%s200 + $0x580] sm:$0xff]
        %v445 = vld [vmem:[%s200 + $0x588] sm:$0xff]
        %v446 = vld [vmem:[%s200 + $0x590] sm:$0xff]
        %v447 = vld [vmem:[%s200 + $0x598] sm:$0xff]
        %v448 = vld [vmem:[%s200 + $0x5a0] sm:$0xff]
        %v449 = vld [vmem:[%s200 + $0x5a8] sm:$0xff]
        %v450 = vld [vmem:[%s200 + $0x5b0] sm:$0xff]
        %v451 = vld [vmem:[%s200 + $0x5b8] sm:$0xff]
        %v452 = vld [vmem:[%s200 + $0x5c0] sm:$0xff]
        %v453 = vld [vmem:[%s200 + $0x5c8] sm:$0xff]
        %v454 = vld [vmem:[%s200 + $0x5d0] sm:$0xff]
        %v455 = vld [vmem:[%s200 + $0x5d8] sm:$0xff]
        %v456 = vld [vmem:[%s200 + $0x5e0] sm:$0xff]
        %v457 = vld [vmem:[%s200 + $0x5e8] sm:$0xff]
        %v458 = vld [vmem:[%s200 + $0x5f0] sm:$0xff]
        %v459 = vld [vmem:[%s200 + $0x5f8] sm:$0xff]
        %v460 = vld [vmem:[%s200 + $0x600] sm:$0xff]
        %v461 = vld [vmem:[%s200 + $0x608] sm:$0xff]
        %v462 = vld [vmem:[%s200 + $0x610] sm:$0xff]
        %v463 = vld [vmem:[%s200 + $0x618] sm:$0xff]
        %v464 = vld [vmem:[%s200 + $0x620] sm:$0xff]
        %v465 = vld [vmem:[%s200 + $0x628] sm:$0xff]
        %v466 = vld [vmem:[%s200 + $0x630] sm:$0xff]
        %v467 = vld [vmem:[%s200 + $0x638] sm:$0xff]
        %v468 = vld [vmem:[%s200 + $0x640] sm:$0xff]
        %v469 = vld [vmem:[%s200 + $0x648] sm:$0xff]
        %v470 = vld [vmem:[%s200 + $0x650] sm:$0xff]
        %v471 = vld [vmem:[%s200 + $0x658] sm:$0xff]
        %v472 = vld [vmem:[%s200 + $0x660] sm:$0xff]
        %v473 = vld [vmem:[%s200 + $0x668] sm:$0xff]
        %v474 = vld [vmem:[%s200 + $0x670] sm:$0xff]
        %v475 = vld [vmem:[%s200 + $0x678] sm:$0xff]
        %v476 = vld [vmem:[%s200 + $0x680] sm:$0xff]
        %v477 = vld [vmem:[%s200 + $0x688] sm:$0xff]
        %v478 = vld [vmem:[%s200 + $0x690] sm:$0xff]
        %v479 = vld [vmem:[%s200 + $0x698] sm:$0xff]
        %v480 = vld [vmem:[%s200 + $0x6a0] sm:$0xff]
        %v481 = vld [vmem:[%s200 + $0x6a8] sm:$0xff]
        %v482 = vld [vmem:[%s200 + $0x6b0] sm:$0xff]
        %v483 = vld [vmem:[%s200 + $0x6b8] sm:$0xff]
        %v484 = vld [vmem:[%s200 + $0x6c0] sm:$0xff]
        %v485 = vld [vmem:[%s200 + $0x6c8] sm:$0xff]
        %v486 = vld [vmem:[%s200 + $0x6d0] sm:$0xff]
        %v487 = vld [vmem:[%s200 + $0x6d8] sm:$0xff]
        %v488 = vld [vmem:[%s200 + $0x6e0] sm:$0xff]
        %v489 = vld [vmem:[%s200 + $0x6e8] sm:$0xff]
        %v490 = vld [vmem:[%s200 + $0x6f0] sm:$0xff]
        %v491 = vld [vmem:[%s200 + $0x6f8] sm:$0xff]
        %v492 = vld [vmem:[%s200 + $0x700] sm:$0xff]
        %v493 = vld [vmem:[%s200 + $0x708] sm:$0xff]
        %v494 = vld [vmem:[%s200 + $0x710] sm:$0xff]
        %v495 = vld [vmem:[%s200 + $0x718] sm:$0xff]
        %v496 = vld [vmem:[%s200 + $0x720] sm:$0xff]
        %v497 = vld [vmem:[%s200 + $0x728] sm:$0xff]
        %v498 = vld [vmem:[%s200 + $0x730] sm:$0xff]
        %v499 = vld [vmem:[%s200 + $0x738] sm:$0xff]
        %v500 = vld [vmem:[%s200 + $0x740] sm:$0xff]
        %v501 = vld [vmem:[%s200 + $0x748] sm:$0xff]
        %v502 = vld [vmem:[%s200 + $0x750] sm:$0xff]
        %v503 = vld [vmem:[%s200 + $0x758] sm:$0xff]
        %v504 = vld [vmem:[%s200 + $0x760] sm:$0xff]
        %v505 = vld [vmem:[%s200 + $0x768] sm:$0xff]
        %v506 = vld [vmem:[%s200 + $0x770] sm:$0xff]
        %v507 = vld [vmem:[%s200 + $0x778] sm:$0xff]
        %v508 = vld [vmem:[%s200 + $0x780] sm:$0xff]
        %v509 = vld [vmem:[%s200 + $0x788] sm:$0xff]
        %v510 = vld [vmem:[%s200 + $0x790] sm:$0xff]
        %v511 = vld [vmem:[%s200 + $0x798] sm:$0xff]
        %v512 = vld [vmem:[%s200 + $0x7a0] sm:$0xff]
        %v513 = vld [vmem:[%s200 + $0x7a8] sm:$0xff]
        %v514 = vld [vmem:[%s200 + $0x7b0] sm:$0xff]
        %v515 = vld [vmem:[%s200 + $0x7b8] sm:$0xff]
        %v516 = vld [vmem:[%s200 + $0x7c0] sm:$0xff]
        %v517 = vld [vmem:[%s200 + $0x7c8] sm:$0xff]
        %v518 = vld [vmem:[%s200 + $0x7d0] sm:$0xff]
        %v519 = vld [vmem:[%s200 + $0x7d8] sm:$0xff]
        %v520 = vld [vmem:[%s200 + $0x7e0] sm:$0xff]
        %v521 = vld [vmem:[%s200 + $0x7e8] sm:$0xff]
        %v522 = vld [vmem:[%s200 + $0x7f0] sm:$0xff]
        %v523 = vld [vmem:[%s200 + $0x7f8] sm:$0xff]
        %v524 = vld [vmem:[%s200 + $0x800] sm:$0xff]
        %v525 = vld [vmem:[%s200 + $0x808] sm:$0xff]
        %v526 = vld [vmem:[%s200 + $0x810] sm:$0xff]
        %v527 = vld [vmem:[%s200 + $0x818] sm:$0xff]
        %v528 = vld [vmem:[%s200 + $0x820] sm:$0xff]
        %v529 = vld [vmem:[%s200 + $0x828] sm:$0xff]
        %v530 = vld [vmem:[%s200 + $0x830] sm:$0xff]
        %v531 = vld [vmem:[%s200 + $0x838] sm:$0xff]
        %v532 = vld [vmem:[%s200 + $0x840] sm:$0xff]
        %v533 = vld [vmem:[%s200 + $0x848] sm:$0xff]
        %v534 = vld [vmem:[%s200 + $0x850] sm:$0xff]
        %v535 = vld [vmem:[%s200 + $0x858] sm:$0xff]
        %v536 = vld [vmem:[%s200 + $0x860] sm:$0xff]
        %v537 = vld [vmem:[%s200 + $0x868] sm:$0xff]
        %v538 = vld [vmem:[%s200 + $0x870] sm:$0xff]
        %v539 = vld [vmem:[%s200 + $0x878] sm:$0xff]
        %v540 = vld [vmem:[%s200 + $0x880] sm:$0xff]
        %v541 = vld [vmem:[%s200 + $0x888] sm:$0xff]
        %v542 = vld [vmem:[%s200 + $0x890] sm:$0xff]
        %v543 = vld [vmem:[%s200 + $0x898] sm:$0xff]
        %v544 = vld [vmem:[%s200 + $0x8a0] sm:$0xff]
        %v545 = vld [vmem:[%s200 + $0x8a8] sm:$0xff]
        %v546 = vld [vmem:[%s200 + $0x8b0] sm:$0xff]
        %v547 = vld [vmem:[%s200 + $0x8b8] sm:$0xff]
        %v548 = vld [vmem:[%s200 + $0x8c0] sm:$0xff]
        %v549 = vld [vmem:[%s200 + $0x8c8] sm:$0xff]
        %v550 = vld [vmem:[%s200 + $0x8d0] sm:$0xff]
        %v551 = vld [vmem:[%s200 + $0x8d8] sm:$0xff]
        %v552 = vld [vmem:[%s200 + $0x8e0] sm:$0xff]
        %v553 = vld [vmem:[%s200 + $0x8e8] sm:$0xff]
        %v554 = vld [vmem:[%s200 + $0x8f0] sm:$0xff]
        %v555 = vld [vmem:[%s200 + $0x8f8] sm:$0xff]
        %v556 = vld [vmem:[%s200 + $0x900] sm:$0xff]
        %v557 = vld [vmem:[%s200 + $0x908] sm:$0xff]
        %v558 = vld [vmem:[%s200 + $0x910] sm:$0xff]
        %v559 = vld [vmem:[%s200 + $0x918] sm:$0xff]
        %v560 = vld [vmem:[%s200 + $0x920] sm:$0xff]
        %v561 = vld [vmem:[%s200 + $0x928] sm:$0xff]
        %v562 = vld [vmem:[%s200 + $0x930] sm:$0xff]
        %v563 = vld [vmem:[%s200 + $0x938] sm:$0xff]
        %v564 = vld [vmem:[%s200 + $0x940] sm:$0xff]
        %v565 = vld [vmem:[%s200 + $0x948] sm:$0xff]
        %v566 = vld [vmem:[%s200 + $0x950] sm:$0xff]
        %v567 = vld [vmem:[%s200 + $0x958] sm:$0xff]
        %v568 = vld [vmem:[%s200 + $0x960] sm:$0xff]
        %v569 = vld [vmem:[%s200 + $0x968] sm:$0xff]
        %v570 = vld [vmem:[%s200 + $0x970] sm:$0xff]
        %v571 = vld [vmem:[%s200 + $0x978] sm:$0xff]
        %v572 = vld [vmem:[%s200 + $0x980] sm:$0xff]
        %v573 = vld [vmem:[%s200 + $0x988] sm:$0xff]
        %v574 = vld [vmem:[%s200 + $0x990] sm:$0xff]
        %v575 = vld [vmem:[%s200 + $0x998] sm:$0xff]
        %v576 = vld [vmem:[%s200 + $0x9a0] sm:$0xff]
        %v577 = vld [vmem:[%s200 + $0x9a8] sm:$0xff]
        %v578 = vld [vmem:[%s200 + $0x9b0] sm:$0xff]
        %v579 = vld [vmem:[%s200 + $0x9b8] sm:$0xff]
        %v580 = vld [vmem:[%s200 + $0x9c0] sm:$0xff]
        %v581 = vld [vmem:[%s200 + $0x9c8] sm:$0xff]
        %v582 = vld [vmem:[%s200 + $0x9d0] sm:$0xff]
        %v583 = vld [vmem:[%s200 + $0x9d8] sm:$0xff]
        %v584 = vld [vmem:[%s200 + $0x9e0] sm:$0xff]
        %v585 = vld [vmem:[%s200 + $0x9e8] sm:$0xff]
        %v586 = vld [vmem:[%s200 + $0x9f0] sm:$0xff]
        %v587 = vld [vmem:[%s200 + $0x9f8] sm:$0xff]
        %v588 = vld [vmem:[%s200 + $0xa00] sm:$0xff]
        %v589 = vld [vmem:[%s200 + $0xa08] sm:$0xff]
        %v590 = vld [vmem:[%s200 + $0xa10] sm:$0xff]
        %v591 = vld [vmem:[%s200 + $0xa18] sm:$0xff]
        %v592 = vld [vmem:[%s200 + $0xa20] sm:$0xff]
        %v593 = vld [vmem:[%s200 + $0xa28] sm:$0xff]
        %v594 = vld [vmem:[%s200 + $0xa30] sm:$0xff]
        %v595 = vld [vmem:[%s200 + $0xa38] sm:$0xff]
        %v596 = vld [vmem:[%s200 + $0xa40] sm:$0xff]
        %v597 = vld [vmem:[%s200 + $0xa48] sm:$0xff]
        %v598 = vld [vmem:[%s200 + $0xa50] sm:$0xff]
        %v599 = vld [vmem:[%s200 + $0xa58] sm:$0xff]
        %v600 = vld [vmem:[%s200 + $0xa60] sm:$0xff]
        %v601 = vld [vmem:[%s200 + $0xa68] sm:$0xff]
        %v602 = vld [vmem:[%s200 + $0xa70] sm:$0xff]
        %v603 = vld [vmem:[%s200 + $0xa78] sm:$0xff]
        %v604 = vld [vmem:[%s200 + $0xa80] sm:$0xff]
        %v605 = vld [vmem:[%s200 + $0xa88] sm:$0xff]
        %v606 = vld [vmem:[%s200 + $0xa90] sm:$0xff]
        %v607 = vld [vmem:[%s200 + $0xa98] sm:$0xff]
        %v608 = vld [vmem:[%s200 + $0xaa0] sm:$0xff]
        %v609 = vld [vmem:[%s200 + $0xaa8] sm:$0xff]
        %v610 = vld [vmem:[%s200 + $0xab0] sm:$0xff]
        %v611 = vld [vmem:[%s200 + $0xab8] sm:$0xff]
        %v612 = vld [vmem:[%s200 + $0xac0] sm:$0xff]
        %v613 = vld [vmem:[%s200 + $0xac8] sm:$0xff]
        %v614 = vld [vmem:[%s200 + $0xad0] sm:$0xff]
        %v615 = vld [vmem:[%s200 + $0xad8] sm:$0xff]
        %v616 = vld [vmem:[%s200 + $0xae0] sm:$0xff]
        %v617 = vld [vmem:[%s200 + $0xae8] sm:$0xff]
        %v618 = vld [vmem:[%s200 + $0xaf0] sm:$0xff]
        %v619 = vld [vmem:[%s200 + $0xaf8] sm:$0xff]
        %v620 = vld [vmem:[%s200 + $0xb00] sm:$0xff]
        %v621 = vld [vmem:[%s200 + $0xb08] sm:$0xff]
        %v622 = vld [vmem:[%s200 + $0xb10] sm:$0xff]
        %v623 = vld [vmem:[%s200 + $0xb18] sm:$0xff]
        %v624 = vld [vmem:[%s200 + $0xb20] sm:$0xff]
        %v625 = vld [vmem:[%s200 + $0xb28] sm:$0xff]
        %v626 = vld [vmem:[%s200 + $0xb30] sm:$0xff]
        %v627 = vld [vmem:[%s200 + $0xb38] sm:$0xff]
        %v628 = vld [vmem:[%s200 + $0xb40] sm:$0xff]
        %v629 = vld [vmem:[%s200 + $0xb48] sm:$0xff]
        %v630 = vld [vmem:[%s200 + $0xb50] sm:$0xff]
        %v631 = vld [vmem:[%s200 + $0xb58] sm:$0xff]
        %v632 = vld [vmem:[%s200 + $0xb60] sm:$0xff]
        %v633 = vld [vmem:[%s200 + $0xb68] sm:$0xff]
        %v634 = vld [vmem:[%s200 + $0xb70] sm:$0xff]
        %v635 = vld [vmem:[%s200 + $0xb78] sm:$0xff]
        %v636 = vld [vmem:[%s200 + $0xb80] sm:$0xff]
        %v637 = vld [vmem:[%s200 + $0xb88] sm:$0xff]
        %v638 = vld [vmem:[%s200 + $0xb90] sm:$0xff]
        %v639 = vld [vmem:[%s200 + $0xb98] sm:$0xff]
        %v640 = vld [vmem:[%s200 + $0xba0] sm:$0xff]
        %v641 = vld [vmem:[%s200 + $0xba8] sm:$0xff]
        %v642 = vld [vmem:[%s200 + $0xbb0] sm:$0xff]
        %v643 = vld [vmem:[%s200 + $0xbb8] sm:$0xff]
        %v644 = vld [vmem:[%s200 + $0xbc0] sm:$0xff]
        %v645 = vld [vmem:[%s200 + $0xbc8] sm:$0xff]
        %v646 = vld [vmem:[%s200 + $0xbd0] sm:$0xff]
        %v647 = vld [vmem:[%s200 + $0xbd8] sm:$0xff]
        %v648 = vld [vmem:[%s200 + $0xbe0] sm:$0xff]
        %v649 = vld [vmem:[%s200 + $0xbe8] sm:$0xff]
        %v650 = vld [vmem:[%s200 + $0xbf0] sm:$0xff]
        %v651 = vld [vmem:[%s200 + $0xbf8] sm:$0xff]
        %v652 = vld [vmem:[%s200 + $0xc00] sm:$0xff]
        %v653 = vld [vmem:[%s200 + $0xc08] sm:$0xff]
        %v654 = vld [vmem:[%s200 + $0xc10] sm:$0xff]
        %v655 = vld [vmem:[%s200 + $0xc18] sm:$0xff]
        %v656 = vld [vmem:[%s200 + $0xc20] sm:$0xff]
        %v657 = vld [vmem:[%s200 + $0xc28] sm:$0xff]
        %v658 = vld [vmem:[%s200 + $0xc30] sm:$0xff]
        %v659 = vld [vmem:[%s200 + $0xc38] sm:$0xff]
        %v660 = vld [vmem:[%s200 + $0xc40] sm:$0xff]
        %v661 = vld [vmem:[%s200 + $0xc48] sm:$0xff]
        %v662 = vld [vmem:[%s200 + $0xc50] sm:$0xff]
        %v663 = vld [vmem:[%s200 + $0xc58] sm:$0xff]
        %v664 = vld [vmem:[%s200 + $0xc60] sm:$0xff]
        %v665 = vld [vmem:[%s200 + $0xc68] sm:$0xff]
        %v666 = vld [vmem:[%s200 + $0xc70] sm:$0xff]
        %v667 = vld [vmem:[%s200 + $0xc78] sm:$0xff]
        %v668 = vld [vmem:[%s200 + $0xc80] sm:$0xff]
        %v669 = vld [vmem:[%s200 + $0xc88] sm:$0xff]
        %v670 = vld [vmem:[%s200 + $0xc90] sm:$0xff]
        %v671 = vld [vmem:[%s200 + $0xc98] sm:$0xff]
        %v672 = vld [vmem:[%s200 + $0xca0] sm:$0xff]
        %v673 = vld [vmem:[%s200 + $0xca8] sm:$0xff]
        %v674 = vld [vmem:[%s200 + $0xcb0] sm:$0xff]
        %v675 = vld [vmem:[%s200 + $0xcb8] sm:$0xff]
        %v676 = vld [vmem:[%s200 + $0xcc0] sm:$0xff]
        %v677 = vld [vmem:[%s200 + $0xcc8] sm:$0xff]
        %v678 = vld [vmem:[%s200 + $0xcd0] sm:$0xff]
        %v679 = vld [vmem:[%s200 + $0xcd8] sm:$0xff]
        %v680 = vld [vmem:[%s200 + $0xce0] sm:$0xff]
        %v681 = vld [vmem:[%s200 + $0xce8] sm:$0xff]
        %v682 = vld [vmem:[%s200 + $0xcf0] sm:$0xff]
        %v683 = vld [vmem:[%s200 + $0xcf8] sm:$0xff]
        %v684 = vld [vmem:[%s200 + $0xd00] sm:$0xff]
        %v685 = vld [vmem:[%s200 + $0xd08] sm:$0xff]
        %v686 = vld [vmem:[%s200 + $0xd10] sm:$0xff]
        %v687 = vld [vmem:[%s200 + $0xd18] sm:$0xff]
        %v688 = vld [vmem:[%s200 + $0xd20] sm:$0xff]
        %v689 = vld [vmem:[%s200 + $0xd28] sm:$0xff]
        %v690 = vld [vmem:[%s200 + $0xd30] sm:$0xff]
        %v691 = vld [vmem:[%s200 + $0xd38] sm:$0xff]
        %v692 = vld [vmem:[%s200 + $0xd40] sm:$0xff]
        %v693 = vld [vmem:[%s200 + $0xd48] sm:$0xff]
        %v694 = vld [vmem:[%s200 + $0xd50] sm:$0xff]
        %v695 = vld [vmem:[%s200 + $0xd58] sm:$0xff]
        %v696 = vld [vmem:[%s200 + $0xd60] sm:$0xff]
        %v697 = vld [vmem:[%s200 + $0xd68] sm:$0xff]
        %v698 = vld [vmem:[%s200 + $0xd70] sm:$0xff]
        %v699 = vld [vmem:[%s200 + $0xd78] sm:$0xff]
        %v700 = vld [vmem:[%s200 + $0xd80] sm:$0xff]
        %v701 = vld [vmem:[%s200 + $0xd88] sm:$0xff]
        %v702 = vld [vmem:[%s200 + $0xd90] sm:$0xff]
        %v703 = vld [vmem:[%s200 + $0xd98] sm:$0xff]
        %v704 = vld [vmem:[%s200 + $0xda0] sm:$0xff]
        %v705 = vld [vmem:[%s200 + $0xda8] sm:$0xff]
        %v706 = vld [vmem:[%s200 + $0xdb0] sm:$0xff]
        %v707 = vld [vmem:[%s200 + $0xdb8] sm:$0xff]
        %v708 = vld [vmem:[%s200 + $0xdc0] sm:$0xff]
        %v709 = vld [vmem:[%s200 + $0xdc8] sm:$0xff]
        %v710 = vld [vmem:[%s200 + $0xdd0] sm:$0xff]
        %v711 = vld [vmem:[%s200 + $0xdd8] sm:$0xff]
        %v712 = vld [vmem:[%s200 + $0xde0] sm:$0xff]
        %v713 = vld [vmem:[%s200 + $0xde8] sm:$0xff]
        %v714 = vld [vmem:[%s200 + $0xdf0] sm:$0xff]
        %v715 = vld [vmem:[%s200 + $0xdf8] sm:$0xff]
        %v716 = vld [vmem:[%s200 + $0xe00] sm:$0xff]
        %v717 = vld [vmem:[%s200 + $0xe08] sm:$0xff]
        %v718 = vld [vmem:[%s200 + $0xe10] sm:$0xff]
        %v719 = vld [vmem:[%s200 + $0xe18] sm:$0xff]
        %v720 = vld [vmem:[%s200 + $0xe20] sm:$0xff]
        %v721 = vld [vmem:[%s200 + $0xe28] sm:$0xff]
        %v722 = vld [vmem:[%s200 + $0xe30] sm:$0xff]
        %v723 = vld [vmem:[%s200 + $0xe38] sm:$0xff]
        %v724 = vld [vmem:[%s200 + $0xe40] sm:$0xff]
        %v725 = vld [vmem:[%s200 + $0xe48] sm:$0xff]
        %v726 = vld [vmem:[%s200 + $0xe50] sm:$0xff]
        %v727 = vld [vmem:[%s200 + $0xe58] sm:$0xff]
        %v728 = vld [vmem:[%s200 + $0xe60] sm:$0xff]
        %v729 = vld [vmem:[%s200 + $0xe68] sm:$0xff]
        %v730 = vld [vmem:[%s200 + $0xe70] sm:$0xff]
        %v731 = vld [vmem:[%s200 + $0xe78] sm:$0xff]
        %v732 = vld [vmem:[%s200 + $0xe80] sm:$0xff]
        %v733 = vld [vmem:[%s200 + $0xe88] sm:$0xff]
        %v734 = vld [vmem:[%s200 + $0xe90] sm:$0xff]
        %v735 = vld [vmem:[%s200 + $0xe98] sm:$0xff]
        %v736 = vld [vmem:[%s200 + $0xea0] sm:$0xff]
        %v737 = vld [vmem:[%s200 + $0xea8] sm:$0xff]
        %v738 = vld [vmem:[%s200 + $0xeb0] sm:$0xff]
        %v739 = vld [vmem:[%s200 + $0xeb8] sm:$0xff]
        %v740 = vld [vmem:[%s200 + $0xec0] sm:$0xff]
        %v741 = vld [vmem:[%s200 + $0xec8] sm:$0xff]
        %v742 = vld [vmem:[%s200 + $0xed0] sm:$0xff]
        %v743 = vld [vmem:[%s200 + $0xed8] sm:$0xff]
        %v744 = vld [vmem:[%s200 + $0xee0] sm:$0xff]
        %v745 = vld [vmem:[%s200 + $0xee8] sm:$0xff]
        %v746 = vld [vmem:[%s200 + $0xef0] sm:$0xff]
        %v747 = vld [vmem:[%s200 + $0xef8] sm:$0xff]
        %v748 = vld [vmem:[%s200 + $0xf00] sm:$0xff]
        %v749 = vld [vmem:[%s200 + $0xf08] sm:$0xff]
        %v750 = vld [vmem:[%s200 + $0xf10] sm:$0xff]
        %v751 = vld [vmem:[%s200 + $0xf18] sm:$0xff]
        %v752 = vld [vmem:[%s200 + $0xf20] sm:$0xff]
        %v753 = vld [vmem:[%s200 + $0xf28] sm:$0xff]
        %v754 = vld [vmem:[%s200 + $0xf30] sm:$0xff]
        %v755 = vld [vmem:[%s200 + $0xf38] sm:$0xff]
        %v756 = vld [vmem:[%s200 + $0xf40] sm:$0xff]
        %v757 = vld [vmem:[%s200 + $0xf48] sm:$0xff]
        %v758 = vld [vmem:[%s200 + $0xf50] sm:$0xff]
        %v759 = vld [vmem:[%s200 + $0xf58] sm:$0xff]
        %v760 = vld [vmem:[%s200 + $0xf60] sm:$0xff]
        %v761 = vld [vmem:[%s200 + $0xf68] sm:$0xff]
        %v762 = vld [vmem:[%s200 + $0xf70] sm:$0xff]
        %v763 = vld [vmem:[%s200 + $0xf78] sm:$0xff]
        %v764 = vld [vmem:[%s200 + $0xf80] sm:$0xff]
        %v765 = vld [vmem:[%s200 + $0xf88] sm:$0xff]
        %v766 = vld [vmem:[%s200 + $0xf90] sm:$0xff]
        %v767 = vld [vmem:[%s200 + $0xf98] sm:$0xff]
        %v768 = vld [vmem:[%s200 + $0xfa0] sm:$0xff]
        %v769 = vld [vmem:[%s200 + $0xfa8] sm:$0xff]
        %v770 = vld [vmem:[%s200 + $0xfb0] sm:$0xff]
        %v771 = vld [vmem:[%s200 + $0xfb8] sm:$0xff]
        %v772 = vld [vmem:[%s200 + $0xfc0] sm:$0xff]
        %v773 = vld [vmem:[%s200 + $0xfc8] sm:$0xff]
        %v774 = vld [vmem:[%s200 + $0xfd0] sm:$0xff]
        %v775 = vld [vmem:[%s200 + $0xfd8] sm:$0xff]
        %v776 = vld [vmem:[%s200 + $0xfe0] sm:$0xff]
        %v777 = vld [vmem:[%s200 + $0xfe8] sm:$0xff]
        %v778 = vld [vmem:[%s200 + $0xff0] sm:$0xff]
        %v779 = vld [vmem:[%s200 + $0xff8] sm:$0xff]
        %v780 = vld [vmem:[%s200 + $0x1000] sm:$0xff]
        %v781 = vld [vmem:[%s200 + $0x1008] sm:$0xff]
        %v782 = vld [vmem:[%s200 + $0x1010] sm:$0xff]
        %v783 = vld [vmem:[%s200 + $0x1018] sm:$0xff]
        %v784 = vld [vmem:[%s200 + $0x1020] sm:$0xff]
        %v785 = vld [vmem:[%s200 + $0x1028] sm:$0xff]
        %v786 = vld [vmem:[%s200 + $0x1030] sm:$0xff]
        %v787 = vld [vmem:[%s200 + $0x1038] sm:$0xff]
        %v788 = vld [vmem:[%s200 + $0x1040] sm:$0xff]
        %v789 = vld [vmem:[%s200 + $0x1048] sm:$0xff]
        %v790 = vld [vmem:[%s200 + $0x1050] sm:$0xff]
        %v791 = vld [vmem:[%s200 + $0x1058] sm:$0xff]
        %v792 = vld [vmem:[%s200 + $0x1060] sm:$0xff]
        %v793 = vld [vmem:[%s200 + $0x1068] sm:$0xff]
        %v794 = vld [vmem:[%s200 + $0x1070] sm:$0xff]
        %v795 = vld [vmem:[%s200 + $0x1078] sm:$0xff]
        %v796 = vld [vmem:[%s200 + $0x1080] sm:$0xff]
        %v797 = vld [vmem:[%s200 + $0x1088] sm:$0xff]
        %v798 = vld [vmem:[%s200 + $0x1090] sm:$0xff]
        %v799 = vld [vmem:[%s200 + $0x1098] sm:$0xff]
        %v800 = vld [vmem:[%s200 + $0x10a0] sm:$0xff]
        %v801 = vld [vmem:[%s200 + $0x10a8] sm:$0xff]
        %v802 = vld [vmem:[%s200 + $0x10b0] sm:$0xff]
        %v803 = vld [vmem:[%s200 + $0x10b8] sm:$0xff]
        %v804 = vld [vmem:[%s200 + $0x10c0] sm:$0xff]
        %v805 = vld [vmem:[%s200 + $0x10c8] sm:$0xff]
        %v806 = vld [vmem:[%s200 + $0x10d0] sm:$0xff]
        %v807 = vld [vmem:[%s200 + $0x10d8] sm:$0xff]
        %v808 = vld [vmem:[%s200 + $0x10e0] sm:$0xff]
        %v809 = vld [vmem:[%s200 + $0x10e8] sm:$0xff]
        %v810 = vld [vmem:[%s200 + $0x10f0] sm:$0xff]
        %v811 = vld [vmem:[%s200 + $0x10f8] sm:$0xff]
        %v812 = vld [vmem:[%s200 + $0x1100] sm:$0xff]
        %v813 = vld [vmem:[%s200 + $0x1108] sm:$0xff]
        %v814 = vld [vmem:[%s200 + $0x1110] sm:$0xff]
        %v815 = vld [vmem:[%s200 + $0x1118] sm:$0xff]
        %v816 = vld [vmem:[%s200 + $0x1120] sm:$0xff]
        %v817 = vld [vmem:[%s200 + $0x1128] sm:$0xff]
        %v818 = vld [vmem:[%s200 + $0x1130] sm:$0xff]
        %v819 = vld [vmem:[%s200 + $0x1138] sm:$0xff]
        %v820 = vld [vmem:[%s200 + $0x1140] sm:$0xff]
        %v821 = vld [vmem:[%s200 + $0x1148] sm:$0xff]
        %v822 = vld [vmem:[%s200 + $0x1150] sm:$0xff]
        %v823 = vld [vmem:[%s200 + $0x1158] sm:$0xff]
        %v824 = vld [vmem:[%s200 + $0x1160] sm:$0xff]
        %v825 = vld [vmem:[%s200 + $0x1168] sm:$0xff]
        %v826 = vld [vmem:[%s200 + $0x1170] sm:$0xff]
        %v827 = vld [vmem:[%s200 + $0x1178] sm:$0xff]
        %v828 = vld [vmem:[%s200 + $0x1180] sm:$0xff]
        %v829 = vld [vmem:[%s200 + $0x1188] sm:$0xff]
        %v830 = vld [vmem:[%s200 + $0x1190] sm:$0xff]
        %v831 = vld [vmem:[%s200 + $0x1198] sm:$0xff]
        %v832 = vld [vmem:[%s200 + $0x11a0] sm:$0xff]
        %v833 = vld [vmem:[%s200 + $0x11a8] sm:$0xff]
        %v834 = vld [vmem:[%s200 + $0x11b0] sm:$0xff]
        %v835 = vld [vmem:[%s200 + $0x11b8] sm:$0xff]
        %v836 = vld [vmem:[%s200 + $0x11c0] sm:$0xff]
        %v837 = vld [vmem:[%s200 + $0x11c8] sm:$0xff]
        %v838 = vld [vmem:[%s200 + $0x11d0] sm:$0xff]
        %v839 = vld [vmem:[%s200 + $0x11d8] sm:$0xff]
        %v840 = vld [vmem:[%s200 + $0x11e0] sm:$0xff]
        %v841 = vld [vmem:[%s200 + $0x11e8] sm:$0xff]
        %v842 = vld [vmem:[%s200 + $0x11f0] sm:$0xff]
        %v843 = vld [vmem:[%s200 + $0x11f8] sm:$0xff]
        %v844 = vld [vmem:[%s200 + $0x1200] sm:$0xff]
        %v845 = vld [vmem:[%s200 + $0x1208] sm:$0xff]
        %v846 = vld [vmem:[%s200 + $0x1210] sm:$0xff]
        %v847 = vld [vmem:[%s200 + $0x1218] sm:$0xff]
        %v848 = vld [vmem:[%s200 + $0x1220] sm:$0xff]
        %v849 = vld [vmem:[%s200 + $0x1228] sm:$0xff]
        %v850 = vld [vmem:[%s200 + $0x1230] sm:$0xff]
        %v851 = vld [vmem:[%s200 + $0x1238] sm:$0xff]
        %v852 = vld [vmem:[%s200 + $0x1240] sm:$0xff]
        %v853 = vld [vmem:[%s200 + $0x1248] sm:$0xff]
        %v854 = vld [vmem:[%s200 + $0x1250] sm:$0xff]
        %v855 = vld [vmem:[%s200 + $0x1258] sm:$0xff]
        %v856 = vld [vmem:[%s200 + $0x1260] sm:$0xff]
        %v857 = vld [vmem:[%s200 + $0x1268] sm:$0xff]
        %v858 = vld [vmem:[%s200 + $0x1270] sm:$0xff]
        %v859 = vld [vmem:[%s200 + $0x1278] sm:$0xff]
        %v860 = vld [vmem:[%s200 + $0x1280] sm:$0xff]
        %v861 = vld [vmem:[%s200 + $0x1288] sm:$0xff]
        %v862 = vld [vmem:[%s200 + $0x1290] sm:$0xff]
        %v863 = vld [vmem:[%s200 + $0x1298] sm:$0xff]
        %v864 = vld [vmem:[%s200 + $0x12a0] sm:$0xff]
        %v865 = vld [vmem:[%s200 + $0x12a8] sm:$0xff]
        %v866 = vld [vmem:[%s200 + $0x12b0] sm:$0xff]
        %v867 = vld [vmem:[%s200 + $0x12b8] sm:$0xff]
        %v868 = vld [vmem:[%s209] sm:$0xff]
        %v869 = vld [vmem:[%s209 + $0x8] sm:$0xff]
        %v870 = vld [vmem:[%s209 + $0x10] sm:$0xff]
        %v874 = vlaneseq
        %v875 = vshrl.u32 %v874, 7
        %v876 = vsub.s32 0, %v875
        %v877 = vrot.slane %v868, %v876
        %v878 = vlaneseq
        %v879 = vshrl.u32 %v878, 7
        %v880 = vsub.s32 1, %v879
        %v881 = vrot.slane %v868, %v880
        %v882 = vlaneseq
        %v883 = vshrl.u32 %v882, 7
        %v884 = vsub.s32 2, %v883
        %v885 = vrot.slane %v868, %v884
        %v886 = vlaneseq
        %v887 = vshrl.u32 %v886, 7
        %v888 = vsub.s32 3, %v887
        %v889 = vrot.slane %v868, %v888
        %v890 = vlaneseq
        %v891 = vshrl.u32 %v890, 7
        %v892 = vsub.s32 4, %v891
        %v893 = vrot.slane %v868, %v892
        %v894 = vlaneseq
        %v895 = vshrl.u32 %v894, 7
        %v896 = vsub.s32 5, %v895
        %v897 = vrot.slane %v868, %v896
        %v898 = vlaneseq
        %v899 = vshrl.u32 %v898, 7
        %v900 = vsub.s32 6, %v899
        %v901 = vrot.slane %v868, %v900
        %v902 = vlaneseq
        %v903 = vshrl.u32 %v902, 7
        %v904 = vsub.s32 7, %v903
        %v905 = vrot.slane %v868, %v904
        %v906 = vlaneseq
        %v907 = vshrl.u32 %v906, 7
        %v908 = vsub.s32 0, %v907
        %v909 = vrot.slane %v869, %v908
        %v910 = vlaneseq
        %v911 = vshrl.u32 %v910, 7
        %v912 = vsub.s32 1, %v911
        %v913 = vrot.slane %v869, %v912
        %v914 = vlaneseq
        %v915 = vshrl.u32 %v914, 7
        %v916 = vsub.s32 2, %v915
        %v917 = vrot.slane %v869, %v916
        %v918 = vlaneseq
        %v919 = vshrl.u32 %v918, 7
        %v920 = vsub.s32 3, %v919
        %v921 = vrot.slane %v869, %v920
        %v922 = vlaneseq
        %v923 = vshrl.u32 %v922, 7
        %v924 = vsub.s32 4, %v923
        %v925 = vrot.slane %v869, %v924
        %v926 = vlaneseq
        %v927 = vshrl.u32 %v926, 7
        %v928 = vsub.s32 5, %v927
        %v929 = vrot.slane %v869, %v928
        %v930 = vlaneseq
        %v931 = vshrl.u32 %v930, 7
        %v932 = vsub.s32 6, %v931
        %v933 = vrot.slane %v869, %v932
        %v934 = vlaneseq
        %v935 = vshrl.u32 %v934, 7
        %v936 = vsub.s32 7, %v935
        %v937 = vrot.slane %v869, %v936
        %v938 = vlaneseq
        %v939 = vshrl.u32 %v938, 7
        %v940 = vsub.s32 0, %v939
        %v941 = vrot.slane %v870, %v940
        %v942 = vlaneseq
        %v943 = vshrl.u32 %v942, 7
        %v944 = vsub.s32 1, %v943
        %v945 = vrot.slane %v870, %v944
        %v946 = vlaneseq
        %v947 = vshrl.u32 %v946, 7
        %v948 = vsub.s32 2, %v947
        %v949 = vrot.slane %v870, %v948
        %v950 = vlaneseq
        %v951 = vshrl.u32 %v950, 7
        %v952 = vsub.s32 3, %v951
        %v953 = vrot.slane %v870, %v952
        %v954 = vlaneseq
        %v955 = vshrl.u32 %v954, 7
        %v956 = vsub.s32 4, %v955
        %v957 = vrot.slane %v870, %v956
        %v958 = vlaneseq
        %v959 = vshrl.u32 %v958, 7
        %v960 = vsub.s32 5, %v959
        %v961 = vrot.slane %v870, %v960
        %v962 = vlaneseq
        %v963 = vshrl.u32 %v962, 7
        %v964 = vsub.s32 6, %v963
        %v965 = vrot.slane %v870, %v964
        %v966 = vlaneseq
        %v967 = vshrl.u32 %v966, 7
        %v968 = vsub.s32 7, %v967
        %v969 = vrot.slane %v870, %v968
        %v1594 = vunpack.c.l.b16 %v268
        %v1595 = vunpack.c.h.b16 %v268
        %v1596 = vunpack.c.l.b16 %v269
        %v1597 = vunpack.c.h.b16 %v269
        %v1598 = vunpack.c.l.b16 %v270
        %v1599 = vunpack.c.h.b16 %v270
        %v1600 = vunpack.c.l.b16 %v271
        %v1601 = vunpack.c.h.b16 %v271
        %v1602 = vunpack.c.l.b16 %v272
        %v1603 = vunpack.c.h.b16 %v272
        %v1604 = vunpack.c.l.b16 %v273
        %v1605 = vunpack.c.h.b16 %v273
        %v1606 = vunpack.c.l.b16 %v274
        %v1607 = vunpack.c.h.b16 %v274
        %v1608 = vunpack.c.l.b16 %v275
        %v1609 = vunpack.c.h.b16 %v275
        %v1610 = vunpack.c.l.b16 %v276
        %v1611 = vunpack.c.h.b16 %v276
        %v1612 = vunpack.c.l.b16 %v277
        %v1613 = vunpack.c.h.b16 %v277
        %v1614 = vunpack.c.l.b16 %v278
        %v1615 = vunpack.c.h.b16 %v278
        %v1616 = vunpack.c.l.b16 %v279
        %v1617 = vunpack.c.h.b16 %v279
        %v1618 = vunpack.c.l.b16 %v280
        %v1619 = vunpack.c.h.b16 %v280
        %v1620 = vunpack.c.l.b16 %v281
        %v1621 = vunpack.c.h.b16 %v281
        %v1622 = vunpack.c.l.b16 %v282
        %v1623 = vunpack.c.h.b16 %v282
        %v1624 = vunpack.c.l.b16 %v283
        %v1625 = vunpack.c.h.b16 %v283
        %v1626 = vunpack.c.l.b16 %v284
        %v1627 = vunpack.c.h.b16 %v284
        %v1628 = vunpack.c.l.b16 %v285
        %v1629 = vunpack.c.h.b16 %v285
        %v1630 = vunpack.c.l.b16 %v286
        %v1631 = vunpack.c.h.b16 %v286
        %v1632 = vunpack.c.l.b16 %v287
        %v1633 = vunpack.c.h.b16 %v287
        %v1634 = vunpack.c.l.b16 %v288
        %v1635 = vunpack.c.h.b16 %v288
        %v1636 = vunpack.c.l.b16 %v289
        %v1637 = vunpack.c.h.b16 %v289
        %v1638 = vunpack.c.l.b16 %v290
        %v1639 = vunpack.c.h.b16 %v290
        %v1640 = vunpack.c.l.b16 %v291
        %v1641 = vunpack.c.h.b16 %v291
        %v1642 = vunpack.c.l.b16 %v292
        %v1643 = vunpack.c.h.b16 %v292
        %v1644 = vunpack.c.l.b16 %v293
        %v1645 = vunpack.c.h.b16 %v293
        %v1646 = vunpack.c.l.b16 %v294
        %v1647 = vunpack.c.h.b16 %v294
        %v1648 = vunpack.c.l.b16 %v295
        %v1649 = vunpack.c.h.b16 %v295
        %v1650 = vunpack.c.l.b16 %v296
        %v1651 = vunpack.c.h.b16 %v296
        %v1652 = vunpack.c.l.b16 %v297
        %v1653 = vunpack.c.h.b16 %v297
        %v1654 = vunpack.c.l.b16 %v298
        %v1655 = vunpack.c.h.b16 %v298
        %v1656 = vunpack.c.l.b16 %v299
        %v1657 = vunpack.c.h.b16 %v299
        %v1658 = vunpack.c.l.b16 %v300
        %v1659 = vunpack.c.h.b16 %v300
        %v1660 = vunpack.c.l.b16 %v301
        %v1661 = vunpack.c.h.b16 %v301
        %v1662 = vunpack.c.l.b16 %v302
        %v1663 = vunpack.c.h.b16 %v302
        %v1664 = vunpack.c.l.b16 %v303
        %v1665 = vunpack.c.h.b16 %v303
        %v1666 = vunpack.c.l.b16 %v304
        %v1667 = vunpack.c.h.b16 %v304
        %v1668 = vunpack.c.l.b16 %v305
        %v1669 = vunpack.c.h.b16 %v305
        %v1670 = vunpack.c.l.b16 %v306
        %v1671 = vunpack.c.h.b16 %v306
        %v1672 = vunpack.c.l.b16 %v307
        %v1673 = vunpack.c.h.b16 %v307
        %v1674 = vunpack.c.l.b16 %v308
        %v1675 = vunpack.c.h.b16 %v308
        %v1676 = vunpack.c.l.b16 %v309
        %v1677 = vunpack.c.h.b16 %v309
        %v1678 = vunpack.c.l.b16 %v310
        %v1679 = vunpack.c.h.b16 %v310
        %v1680 = vunpack.c.l.b16 %v311
        %v1681 = vunpack.c.h.b16 %v311
        %v1682 = vunpack.c.l.b16 %v312
        %v1683 = vunpack.c.h.b16 %v312
        %v1684 = vunpack.c.l.b16 %v313
        %v1685 = vunpack.c.h.b16 %v313
        %v1686 = vunpack.c.l.b16 %v314
        %v1687 = vunpack.c.h.b16 %v314
        %v1688 = vunpack.c.l.b16 %v315
        %v1689 = vunpack.c.h.b16 %v315
        %v1690 = vunpack.c.l.b16 %v316
        %v1691 = vunpack.c.h.b16 %v316
        %v1692 = vunpack.c.l.b16 %v317
        %v1693 = vunpack.c.h.b16 %v317
        %v1694 = vunpack.c.l.b16 %v318
        %v1695 = vunpack.c.h.b16 %v318
        %v1696 = vunpack.c.l.b16 %v319
        %v1697 = vunpack.c.h.b16 %v319
        %v1698 = vunpack.c.l.b16 %v320
        %v1699 = vunpack.c.h.b16 %v320
        %v1700 = vunpack.c.l.b16 %v321
        %v1701 = vunpack.c.h.b16 %v321
        %v1702 = vunpack.c.l.b16 %v322
        %v1703 = vunpack.c.h.b16 %v322
        %v1704 = vunpack.c.l.b16 %v323
        %v1705 = vunpack.c.h.b16 %v323
        %v1706 = vunpack.c.l.b16 %v324
        %v1707 = vunpack.c.h.b16 %v324
        %v1708 = vunpack.c.l.b16 %v325
        %v1709 = vunpack.c.h.b16 %v325
        %v1710 = vunpack.c.l.b16 %v326
        %v1711 = vunpack.c.h.b16 %v326
        %v1712 = vunpack.c.l.b16 %v327
        %v1713 = vunpack.c.h.b16 %v327
        %v1714 = vunpack.c.l.b16 %v328
        %v1715 = vunpack.c.h.b16 %v328
        %v1716 = vunpack.c.l.b16 %v329
        %v1717 = vunpack.c.h.b16 %v329
        %v1718 = vunpack.c.l.b16 %v330
        %v1719 = vunpack.c.h.b16 %v330
        %v1720 = vunpack.c.l.b16 %v331
        %v1721 = vunpack.c.h.b16 %v331
        %v1722 = vunpack.c.l.b16 %v332
        %v1723 = vunpack.c.h.b16 %v332
        %v1724 = vunpack.c.l.b16 %v333
        %v1725 = vunpack.c.h.b16 %v333
        %v1726 = vunpack.c.l.b16 %v334
        %v1727 = vunpack.c.h.b16 %v334
        %v1728 = vunpack.c.l.b16 %v335
        %v1729 = vunpack.c.h.b16 %v335
        %v1730 = vunpack.c.l.b16 %v336
        %v1731 = vunpack.c.h.b16 %v336
        %v1732 = vunpack.c.l.b16 %v337
        %v1733 = vunpack.c.h.b16 %v337
        %v1734 = vunpack.c.l.b16 %v338
        %v1735 = vunpack.c.h.b16 %v338
        %v1736 = vunpack.c.l.b16 %v339
        %v1737 = vunpack.c.h.b16 %v339
        %v1738 = vunpack.c.l.b16 %v340
        %v1739 = vunpack.c.h.b16 %v340
        %v1740 = vunpack.c.l.b16 %v341
        %v1741 = vunpack.c.h.b16 %v341
        %v1742 = vunpack.c.l.b16 %v342
        %v1743 = vunpack.c.h.b16 %v342
        %v1744 = vunpack.c.l.b16 %v343
        %v1745 = vunpack.c.h.b16 %v343
        %v1746 = vunpack.c.l.b16 %v344
        %v1747 = vunpack.c.h.b16 %v344
        %v1748 = vunpack.c.l.b16 %v345
        %v1749 = vunpack.c.h.b16 %v345
        %v1750 = vunpack.c.l.b16 %v346
        %v1751 = vunpack.c.h.b16 %v346
        %v1752 = vunpack.c.l.b16 %v347
        %v1753 = vunpack.c.h.b16 %v347
        %v1754 = vunpack.c.l.b16 %v348
        %v1755 = vunpack.c.h.b16 %v348
        %v1756 = vunpack.c.l.b16 %v349
        %v1757 = vunpack.c.h.b16 %v349
        %v1758 = vunpack.c.l.b16 %v350
        %v1759 = vunpack.c.h.b16 %v350
        %v1760 = vunpack.c.l.b16 %v351
        %v1761 = vunpack.c.h.b16 %v351
        %v1762 = vunpack.c.l.b16 %v352
        %v1763 = vunpack.c.h.b16 %v352
        %v1764 = vunpack.c.l.b16 %v353
        %v1765 = vunpack.c.h.b16 %v353
        %v1766 = vunpack.c.l.b16 %v354
        %v1767 = vunpack.c.h.b16 %v354
        %v1768 = vunpack.c.l.b16 %v355
        %v1769 = vunpack.c.h.b16 %v355
        %v1770 = vunpack.c.l.b16 %v356
        %v1771 = vunpack.c.h.b16 %v356
        %v1772 = vunpack.c.l.b16 %v357
        %v1773 = vunpack.c.h.b16 %v357
        %v1774 = vunpack.c.l.b16 %v358
        %v1775 = vunpack.c.h.b16 %v358
        %v1776 = vunpack.c.l.b16 %v359
        %v1777 = vunpack.c.h.b16 %v359
        %v1778 = vunpack.c.l.b16 %v360
        %v1779 = vunpack.c.h.b16 %v360
        %v1780 = vunpack.c.l.b16 %v361
        %v1781 = vunpack.c.h.b16 %v361
        %v1782 = vunpack.c.l.b16 %v362
        %v1783 = vunpack.c.h.b16 %v362
        %v1784 = vunpack.c.l.b16 %v363
        %v1785 = vunpack.c.h.b16 %v363
        %v1786 = vunpack.c.l.b16 %v364
        %v1787 = vunpack.c.h.b16 %v364
        %v1788 = vunpack.c.l.b16 %v365
        %v1789 = vunpack.c.h.b16 %v365
        %v1790 = vunpack.c.l.b16 %v366
        %v1791 = vunpack.c.h.b16 %v366
        %v1792 = vunpack.c.l.b16 %v367
        %v1793 = vunpack.c.h.b16 %v367
        %v1794 = vunpack.c.l.b16 %v368
        %v1795 = vunpack.c.h.b16 %v368
        %v1796 = vunpack.c.l.b16 %v369
        %v1797 = vunpack.c.h.b16 %v369
        %v1798 = vunpack.c.l.b16 %v370
        %v1799 = vunpack.c.h.b16 %v370
        %v1800 = vunpack.c.l.b16 %v371
        %v1801 = vunpack.c.h.b16 %v371
        %v1802 = vunpack.c.l.b16 %v372
        %v1803 = vunpack.c.h.b16 %v372
        %v1804 = vunpack.c.l.b16 %v373
        %v1805 = vunpack.c.h.b16 %v373
        %v1806 = vunpack.c.l.b16 %v374
        %v1807 = vunpack.c.h.b16 %v374
        %v1808 = vunpack.c.l.b16 %v375
        %v1809 = vunpack.c.h.b16 %v375
        %v1810 = vunpack.c.l.b16 %v376
        %v1811 = vunpack.c.h.b16 %v376
        %v1812 = vunpack.c.l.b16 %v377
        %v1813 = vunpack.c.h.b16 %v377
        %v1814 = vunpack.c.l.b16 %v378
        %v1815 = vunpack.c.h.b16 %v378
        %v1816 = vunpack.c.l.b16 %v379
        %v1817 = vunpack.c.h.b16 %v379
        %v1818 = vunpack.c.l.b16 %v380
        %v1819 = vunpack.c.h.b16 %v380
        %v1820 = vunpack.c.l.b16 %v381
        %v1821 = vunpack.c.h.b16 %v381
        %v1822 = vunpack.c.l.b16 %v382
        %v1823 = vunpack.c.h.b16 %v382
        %v1824 = vunpack.c.l.b16 %v383
        %v1825 = vunpack.c.h.b16 %v383
        %v1826 = vunpack.c.l.b16 %v384
        %v1827 = vunpack.c.h.b16 %v384
        %v1828 = vunpack.c.l.b16 %v385
        %v1829 = vunpack.c.h.b16 %v385
        %v1830 = vunpack.c.l.b16 %v386
        %v1831 = vunpack.c.h.b16 %v386
        %v1832 = vunpack.c.l.b16 %v387
        %v1833 = vunpack.c.h.b16 %v387
        %v1834 = vunpack.c.l.b16 %v388
        %v1835 = vunpack.c.h.b16 %v388
        %v1836 = vunpack.c.l.b16 %v389
        %v1837 = vunpack.c.h.b16 %v389
        %v1838 = vunpack.c.l.b16 %v390
        %v1839 = vunpack.c.h.b16 %v390
        %v1840 = vunpack.c.l.b16 %v391
        %v1841 = vunpack.c.h.b16 %v391
        %v1842 = vunpack.c.l.b16 %v392
        %v1843 = vunpack.c.h.b16 %v392
        %v1844 = vunpack.c.l.b16 %v393
        %v1845 = vunpack.c.h.b16 %v393
        %v1846 = vunpack.c.l.b16 %v394
        %v1847 = vunpack.c.h.b16 %v394
        %v1848 = vunpack.c.l.b16 %v395
        %v1849 = vunpack.c.h.b16 %v395
        %v1850 = vunpack.c.l.b16 %v396
        %v1851 = vunpack.c.h.b16 %v396
        %v1852 = vunpack.c.l.b16 %v397
        %v1853 = vunpack.c.h.b16 %v397
        %v1854 = vunpack.c.l.b16 %v398
        %v1855 = vunpack.c.h.b16 %v398
        %v1856 = vunpack.c.l.b16 %v399
        %v1857 = vunpack.c.h.b16 %v399
        %v1858 = vunpack.c.l.b16 %v400
        %v1859 = vunpack.c.h.b16 %v400
        %v1860 = vunpack.c.l.b16 %v401
        %v1861 = vunpack.c.h.b16 %v401
        %v1862 = vunpack.c.l.b16 %v402
        %v1863 = vunpack.c.h.b16 %v402
        %v1864 = vunpack.c.l.b16 %v403
        %v1865 = vunpack.c.h.b16 %v403
        %v1866 = vunpack.c.l.b16 %v404
        %v1867 = vunpack.c.h.b16 %v404
        %v1868 = vunpack.c.l.b16 %v405
        %v1869 = vunpack.c.h.b16 %v405
        %v1870 = vunpack.c.l.b16 %v406
        %v1871 = vunpack.c.h.b16 %v406
        %v1872 = vunpack.c.l.b16 %v407
        %v1873 = vunpack.c.h.b16 %v407
        %v1874 = vunpack.c.l.b16 %v408
        %v1875 = vunpack.c.h.b16 %v408
        %v1876 = vunpack.c.l.b16 %v409
        %v1877 = vunpack.c.h.b16 %v409
        %v1878 = vunpack.c.l.b16 %v410
        %v1879 = vunpack.c.h.b16 %v410
        %v1880 = vunpack.c.l.b16 %v411
        %v1881 = vunpack.c.h.b16 %v411
        %v1882 = vunpack.c.l.b16 %v412
        %v1883 = vunpack.c.h.b16 %v412
        %v1884 = vunpack.c.l.b16 %v413
        %v1885 = vunpack.c.h.b16 %v413
        %v1886 = vunpack.c.l.b16 %v414
        %v1887 = vunpack.c.h.b16 %v414
        %v1888 = vunpack.c.l.b16 %v415
        %v1889 = vunpack.c.h.b16 %v415
        %v1890 = vunpack.c.l.b16 %v416
        %v1891 = vunpack.c.h.b16 %v416
        %v1892 = vunpack.c.l.b16 %v417
        %v1893 = vunpack.c.h.b16 %v417
        %v1894 = vunpack.c.l.b16 %v418
        %v1895 = vunpack.c.h.b16 %v418
        %v1896 = vunpack.c.l.b16 %v419
        %v1897 = vunpack.c.h.b16 %v419
        %v1898 = vunpack.c.l.b16 %v420
        %v1899 = vunpack.c.h.b16 %v420
        %v1900 = vunpack.c.l.b16 %v421
        %v1901 = vunpack.c.h.b16 %v421
        %v1902 = vunpack.c.l.b16 %v422
        %v1903 = vunpack.c.h.b16 %v422
        %v1904 = vunpack.c.l.b16 %v423
        %v1905 = vunpack.c.h.b16 %v423
        %v1906 = vunpack.c.l.b16 %v424
        %v1907 = vunpack.c.h.b16 %v424
        %v1908 = vunpack.c.l.b16 %v425
        %v1909 = vunpack.c.h.b16 %v425
        %v1910 = vunpack.c.l.b16 %v426
        %v1911 = vunpack.c.h.b16 %v426
        %v1912 = vunpack.c.l.b16 %v427
        %v1913 = vunpack.c.h.b16 %v427
        %v1914 = vunpack.c.l.b16 %v428
        %v1915 = vunpack.c.h.b16 %v428
        %v1916 = vunpack.c.l.b16 %v429
        %v1917 = vunpack.c.h.b16 %v429
        %v1918 = vunpack.c.l.b16 %v430
        %v1919 = vunpack.c.h.b16 %v430
        %v1920 = vunpack.c.l.b16 %v431
        %v1921 = vunpack.c.h.b16 %v431
        %v1922 = vunpack.c.l.b16 %v432
        %v1923 = vunpack.c.h.b16 %v432
        %v1924 = vunpack.c.l.b16 %v433
        %v1925 = vunpack.c.h.b16 %v433
        %v1926 = vunpack.c.l.b16 %v434
        %v1927 = vunpack.c.h.b16 %v434
        %v1928 = vunpack.c.l.b16 %v435
        %v1929 = vunpack.c.h.b16 %v435
        %v1930 = vunpack.c.l.b16 %v436
        %v1931 = vunpack.c.h.b16 %v436
        %v1932 = vunpack.c.l.b16 %v437
        %v1933 = vunpack.c.h.b16 %v437
        %v1934 = vunpack.c.l.b16 %v438
        %v1935 = vunpack.c.h.b16 %v438
        %v1936 = vunpack.c.l.b16 %v439
        %v1937 = vunpack.c.h.b16 %v439
        %v1938 = vunpack.c.l.b16 %v440
        %v1939 = vunpack.c.h.b16 %v440
        %v1940 = vunpack.c.l.b16 %v441
        %v1941 = vunpack.c.h.b16 %v441
        %v1942 = vunpack.c.l.b16 %v442
        %v1943 = vunpack.c.h.b16 %v442
        %v1944 = vunpack.c.l.b16 %v443
        %v1945 = vunpack.c.h.b16 %v443
        %v1946 = vunpack.c.l.b16 %v444
        %v1947 = vunpack.c.h.b16 %v444
        %v1948 = vunpack.c.l.b16 %v445
        %v1949 = vunpack.c.h.b16 %v445
        %v1950 = vunpack.c.l.b16 %v446
        %v1951 = vunpack.c.h.b16 %v446
        %v1952 = vunpack.c.l.b16 %v447
        %v1953 = vunpack.c.h.b16 %v447
        %v1954 = vunpack.c.l.b16 %v448
        %v1955 = vunpack.c.h.b16 %v448
        %v1956 = vunpack.c.l.b16 %v449
        %v1957 = vunpack.c.h.b16 %v449
        %v1958 = vunpack.c.l.b16 %v450
        %v1959 = vunpack.c.h.b16 %v450
        %v1960 = vunpack.c.l.b16 %v451
        %v1961 = vunpack.c.h.b16 %v451
        %v1962 = vunpack.c.l.b16 %v452
        %v1963 = vunpack.c.h.b16 %v452
        %v1964 = vunpack.c.l.b16 %v453
        %v1965 = vunpack.c.h.b16 %v453
        %v1966 = vunpack.c.l.b16 %v454
        %v1967 = vunpack.c.h.b16 %v454
        %v1968 = vunpack.c.l.b16 %v455
        %v1969 = vunpack.c.h.b16 %v455
        %v1970 = vunpack.c.l.b16 %v456
        %v1971 = vunpack.c.h.b16 %v456
        %v1972 = vunpack.c.l.b16 %v457
        %v1973 = vunpack.c.h.b16 %v457
        %v1974 = vunpack.c.l.b16 %v458
        %v1975 = vunpack.c.h.b16 %v458
        %v1976 = vunpack.c.l.b16 %v459
        %v1977 = vunpack.c.h.b16 %v459
        %v1978 = vunpack.c.l.b16 %v460
        %v1979 = vunpack.c.h.b16 %v460
        %v1980 = vunpack.c.l.b16 %v461
        %v1981 = vunpack.c.h.b16 %v461
        %v1982 = vunpack.c.l.b16 %v462
        %v1983 = vunpack.c.h.b16 %v462
        %v1984 = vunpack.c.l.b16 %v463
        %v1985 = vunpack.c.h.b16 %v463
        %v1986 = vunpack.c.l.b16 %v464
        %v1987 = vunpack.c.h.b16 %v464
        %v1988 = vunpack.c.l.b16 %v465
        %v1989 = vunpack.c.h.b16 %v465
        %v1990 = vunpack.c.l.b16 %v466
        %v1991 = vunpack.c.h.b16 %v466
        %v1992 = vunpack.c.l.b16 %v467
        %v1993 = vunpack.c.h.b16 %v467
        %v1994 = vunpack.c.l.b16 %v468
        %v1995 = vunpack.c.h.b16 %v468
        %v1996 = vunpack.c.l.b16 %v469
        %v1997 = vunpack.c.h.b16 %v469
        %v1998 = vunpack.c.l.b16 %v470
        %v1999 = vunpack.c.h.b16 %v470
        %v2000 = vunpack.c.l.b16 %v471
        %v2001 = vunpack.c.h.b16 %v471
        %v2002 = vunpack.c.l.b16 %v472
        %v2003 = vunpack.c.h.b16 %v472
        %v2004 = vunpack.c.l.b16 %v473
        %v2005 = vunpack.c.h.b16 %v473
        %v2006 = vunpack.c.l.b16 %v474
        %v2007 = vunpack.c.h.b16 %v474
        %v2008 = vunpack.c.l.b16 %v475
        %v2009 = vunpack.c.h.b16 %v475
        %v2010 = vunpack.c.l.b16 %v476
        %v2011 = vunpack.c.h.b16 %v476
        %v2012 = vunpack.c.l.b16 %v477
        %v2013 = vunpack.c.h.b16 %v477
        %v2014 = vunpack.c.l.b16 %v478
        %v2015 = vunpack.c.h.b16 %v478
        %v2016 = vunpack.c.l.b16 %v479
        %v2017 = vunpack.c.h.b16 %v479
        %v2018 = vunpack.c.l.b16 %v480
        %v2019 = vunpack.c.h.b16 %v480
        %v2020 = vunpack.c.l.b16 %v481
        %v2021 = vunpack.c.h.b16 %v481
        %v2022 = vunpack.c.l.b16 %v482
        %v2023 = vunpack.c.h.b16 %v482
        %v2024 = vunpack.c.l.b16 %v483
        %v2025 = vunpack.c.h.b16 %v483
        %v2026 = vunpack.c.l.b16 %v484
        %v2027 = vunpack.c.h.b16 %v484
        %v2028 = vunpack.c.l.b16 %v485
        %v2029 = vunpack.c.h.b16 %v485
        %v2030 = vunpack.c.l.b16 %v486
        %v2031 = vunpack.c.h.b16 %v486
        %v2032 = vunpack.c.l.b16 %v487
        %v2033 = vunpack.c.h.b16 %v487
        %v2034 = vunpack.c.l.b16 %v488
        %v2035 = vunpack.c.h.b16 %v488
        %v2036 = vunpack.c.l.b16 %v489
        %v2037 = vunpack.c.h.b16 %v489
        %v2038 = vunpack.c.l.b16 %v490
        %v2039 = vunpack.c.h.b16 %v490
        %v2040 = vunpack.c.l.b16 %v491
        %v2041 = vunpack.c.h.b16 %v491
        %v2042 = vunpack.c.l.b16 %v492
        %v2043 = vunpack.c.h.b16 %v492
        %v2044 = vunpack.c.l.b16 %v493
        %v2045 = vunpack.c.h.b16 %v493
        %v2046 = vunpack.c.l.b16 %v494
        %v2047 = vunpack.c.h.b16 %v494
        %v2048 = vunpack.c.l.b16 %v495
        %v2049 = vunpack.c.h.b16 %v495
        %v2050 = vunpack.c.l.b16 %v496
        %v2051 = vunpack.c.h.b16 %v496
        %v2052 = vunpack.c.l.b16 %v497
        %v2053 = vunpack.c.h.b16 %v497
        %v2054 = vunpack.c.l.b16 %v498
        %v2055 = vunpack.c.h.b16 %v498
        %v2056 = vunpack.c.l.b16 %v499
        %v2057 = vunpack.c.h.b16 %v499
        %v2058 = vunpack.c.l.b16 %v500
        %v2059 = vunpack.c.h.b16 %v500
        %v2060 = vunpack.c.l.b16 %v501
        %v2061 = vunpack.c.h.b16 %v501
        %v2062 = vunpack.c.l.b16 %v502
        %v2063 = vunpack.c.h.b16 %v502
        %v2064 = vunpack.c.l.b16 %v503
        %v2065 = vunpack.c.h.b16 %v503
        %v2066 = vunpack.c.l.b16 %v504
        %v2067 = vunpack.c.h.b16 %v504
        %v2068 = vunpack.c.l.b16 %v505
        %v2069 = vunpack.c.h.b16 %v505
        %v2070 = vunpack.c.l.b16 %v506
        %v2071 = vunpack.c.h.b16 %v506
        %v2072 = vunpack.c.l.b16 %v507
        %v2073 = vunpack.c.h.b16 %v507
        %v2074 = vunpack.c.l.b16 %v508
        %v2075 = vunpack.c.h.b16 %v508
        %v2076 = vunpack.c.l.b16 %v509
        %v2077 = vunpack.c.h.b16 %v509
        %v2078 = vunpack.c.l.b16 %v510
        %v2079 = vunpack.c.h.b16 %v510
        %v2080 = vunpack.c.l.b16 %v511
        %v2081 = vunpack.c.h.b16 %v511
        %v2082 = vunpack.c.l.b16 %v512
        %v2083 = vunpack.c.h.b16 %v512
        %v2084 = vunpack.c.l.b16 %v513
        %v2085 = vunpack.c.h.b16 %v513
        %v2086 = vunpack.c.l.b16 %v514
        %v2087 = vunpack.c.h.b16 %v514
        %v2088 = vunpack.c.l.b16 %v515
        %v2089 = vunpack.c.h.b16 %v515
        %v2090 = vunpack.c.l.b16 %v516
        %v2091 = vunpack.c.h.b16 %v516
        %v2092 = vunpack.c.l.b16 %v517
        %v2093 = vunpack.c.h.b16 %v517
        %v2094 = vunpack.c.l.b16 %v518
        %v2095 = vunpack.c.h.b16 %v518
        %v2096 = vunpack.c.l.b16 %v519
        %v2097 = vunpack.c.h.b16 %v519
        %v2098 = vunpack.c.l.b16 %v520
        %v2099 = vunpack.c.h.b16 %v520
        %v2100 = vunpack.c.l.b16 %v521
        %v2101 = vunpack.c.h.b16 %v521
        %v2102 = vunpack.c.l.b16 %v522
        %v2103 = vunpack.c.h.b16 %v522
        %v2104 = vunpack.c.l.b16 %v523
        %v2105 = vunpack.c.h.b16 %v523
        %v2106 = vunpack.c.l.b16 %v524
        %v2107 = vunpack.c.h.b16 %v524
        %v2108 = vunpack.c.l.b16 %v525
        %v2109 = vunpack.c.h.b16 %v525
        %v2110 = vunpack.c.l.b16 %v526
        %v2111 = vunpack.c.h.b16 %v526
        %v2112 = vunpack.c.l.b16 %v527
        %v2113 = vunpack.c.h.b16 %v527
        %v2114 = vunpack.c.l.b16 %v528
        %v2115 = vunpack.c.h.b16 %v528
        %v2116 = vunpack.c.l.b16 %v529
        %v2117 = vunpack.c.h.b16 %v529
        %v2118 = vunpack.c.l.b16 %v530
        %v2119 = vunpack.c.h.b16 %v530
        %v2120 = vunpack.c.l.b16 %v531
        %v2121 = vunpack.c.h.b16 %v531
        %v2122 = vunpack.c.l.b16 %v532
        %v2123 = vunpack.c.h.b16 %v532
        %v2124 = vunpack.c.l.b16 %v533
        %v2125 = vunpack.c.h.b16 %v533
        %v2126 = vunpack.c.l.b16 %v534
        %v2127 = vunpack.c.h.b16 %v534
        %v2128 = vunpack.c.l.b16 %v535
        %v2129 = vunpack.c.h.b16 %v535
        %v2130 = vunpack.c.l.b16 %v536
        %v2131 = vunpack.c.h.b16 %v536
        %v2132 = vunpack.c.l.b16 %v537
        %v2133 = vunpack.c.h.b16 %v537
        %v2134 = vunpack.c.l.b16 %v538
        %v2135 = vunpack.c.h.b16 %v538
        %v2136 = vunpack.c.l.b16 %v539
        %v2137 = vunpack.c.h.b16 %v539
        %v2138 = vunpack.c.l.b16 %v540
        %v2139 = vunpack.c.h.b16 %v540
        %v2140 = vunpack.c.l.b16 %v541
        %v2141 = vunpack.c.h.b16 %v541
        %v2142 = vunpack.c.l.b16 %v542
        %v2143 = vunpack.c.h.b16 %v542
        %v2144 = vunpack.c.l.b16 %v543
        %v2145 = vunpack.c.h.b16 %v543
        %v2146 = vunpack.c.l.b16 %v544
        %v2147 = vunpack.c.h.b16 %v544
        %v2148 = vunpack.c.l.b16 %v545
        %v2149 = vunpack.c.h.b16 %v545
        %v2150 = vunpack.c.l.b16 %v546
        %v2151 = vunpack.c.h.b16 %v546
        %v2152 = vunpack.c.l.b16 %v547
        %v2153 = vunpack.c.h.b16 %v547
        %v2154 = vunpack.c.l.b16 %v548
        %v2155 = vunpack.c.h.b16 %v548
        %v2156 = vunpack.c.l.b16 %v549
        %v2157 = vunpack.c.h.b16 %v549
        %v2158 = vunpack.c.l.b16 %v550
        %v2159 = vunpack.c.h.b16 %v550
        %v2160 = vunpack.c.l.b16 %v551
        %v2161 = vunpack.c.h.b16 %v551
        %v2162 = vunpack.c.l.b16 %v552
        %v2163 = vunpack.c.h.b16 %v552
        %v2164 = vunpack.c.l.b16 %v553
        %v2165 = vunpack.c.h.b16 %v553
        %v2166 = vunpack.c.l.b16 %v554
        %v2167 = vunpack.c.h.b16 %v554
        %v2168 = vunpack.c.l.b16 %v555
        %v2169 = vunpack.c.h.b16 %v555
        %v2170 = vunpack.c.l.b16 %v556
        %v2171 = vunpack.c.h.b16 %v556
        %v2172 = vunpack.c.l.b16 %v557
        %v2173 = vunpack.c.h.b16 %v557
        %v2174 = vunpack.c.l.b16 %v558
        %v2175 = vunpack.c.h.b16 %v558
        %v2176 = vunpack.c.l.b16 %v559
        %v2177 = vunpack.c.h.b16 %v559
        %v2178 = vunpack.c.l.b16 %v560
        %v2179 = vunpack.c.h.b16 %v560
        %v2180 = vunpack.c.l.b16 %v561
        %v2181 = vunpack.c.h.b16 %v561
        %v2182 = vunpack.c.l.b16 %v562
        %v2183 = vunpack.c.h.b16 %v562
        %v2184 = vunpack.c.l.b16 %v563
        %v2185 = vunpack.c.h.b16 %v563
        %v2186 = vunpack.c.l.b16 %v564
        %v2187 = vunpack.c.h.b16 %v564
        %v2188 = vunpack.c.l.b16 %v565
        %v2189 = vunpack.c.h.b16 %v565
        %v2190 = vunpack.c.l.b16 %v566
        %v2191 = vunpack.c.h.b16 %v566
        %v2192 = vunpack.c.l.b16 %v567
        %v2193 = vunpack.c.h.b16 %v567
        %v2194 = vunpack.c.l.b16 %v568
        %v2195 = vunpack.c.h.b16 %v568
        %v2196 = vunpack.c.l.b16 %v569
        %v2197 = vunpack.c.h.b16 %v569
        %v2198 = vunpack.c.l.b16 %v570
        %v2199 = vunpack.c.h.b16 %v570
        %v2200 = vunpack.c.l.b16 %v571
        %v2201 = vunpack.c.h.b16 %v571
        %v2202 = vunpack.c.l.b16 %v572
        %v2203 = vunpack.c.h.b16 %v572
        %v2204 = vunpack.c.l.b16 %v573
        %v2205 = vunpack.c.h.b16 %v573
        %v2206 = vunpack.c.l.b16 %v574
        %v2207 = vunpack.c.h.b16 %v574
        %v2208 = vunpack.c.l.b16 %v575
        %v2209 = vunpack.c.h.b16 %v575
        %v2210 = vunpack.c.l.b16 %v576
        %v2211 = vunpack.c.h.b16 %v576
        %v2212 = vunpack.c.l.b16 %v577
        %v2213 = vunpack.c.h.b16 %v577
        %v2214 = vunpack.c.l.b16 %v578
        %v2215 = vunpack.c.h.b16 %v578
        %v2216 = vunpack.c.l.b16 %v579
        %v2217 = vunpack.c.h.b16 %v579
        %v2218 = vunpack.c.l.b16 %v580
        %v2219 = vunpack.c.h.b16 %v580
        %v2220 = vunpack.c.l.b16 %v581
        %v2221 = vunpack.c.h.b16 %v581
        %v2222 = vunpack.c.l.b16 %v582
        %v2223 = vunpack.c.h.b16 %v582
        %v2224 = vunpack.c.l.b16 %v583
        %v2225 = vunpack.c.h.b16 %v583
        %v2226 = vunpack.c.l.b16 %v584
        %v2227 = vunpack.c.h.b16 %v584
        %v2228 = vunpack.c.l.b16 %v585
        %v2229 = vunpack.c.h.b16 %v585
        %v2230 = vunpack.c.l.b16 %v586
        %v2231 = vunpack.c.h.b16 %v586
        %v2232 = vunpack.c.l.b16 %v587
        %v2233 = vunpack.c.h.b16 %v587
        %v2234 = vunpack.c.l.b16 %v588
        %v2235 = vunpack.c.h.b16 %v588
        %v2236 = vunpack.c.l.b16 %v589
        %v2237 = vunpack.c.h.b16 %v589
        %v2238 = vunpack.c.l.b16 %v590
        %v2239 = vunpack.c.h.b16 %v590
        %v2240 = vunpack.c.l.b16 %v591
        %v2241 = vunpack.c.h.b16 %v591
        %v2242 = vunpack.c.l.b16 %v592
        %v2243 = vunpack.c.h.b16 %v592
        %v2244 = vunpack.c.l.b16 %v593
        %v2245 = vunpack.c.h.b16 %v593
        %v2246 = vunpack.c.l.b16 %v594
        %v2247 = vunpack.c.h.b16 %v594
        %v2248 = vunpack.c.l.b16 %v595
        %v2249 = vunpack.c.h.b16 %v595
        %v2250 = vunpack.c.l.b16 %v596
        %v2251 = vunpack.c.h.b16 %v596
        %v2252 = vunpack.c.l.b16 %v597
        %v2253 = vunpack.c.h.b16 %v597
        %v2254 = vunpack.c.l.b16 %v598
        %v2255 = vunpack.c.h.b16 %v598
        %v2256 = vunpack.c.l.b16 %v599
        %v2257 = vunpack.c.h.b16 %v599
        %v2258 = vunpack.c.l.b16 %v600
        %v2259 = vunpack.c.h.b16 %v600
        %v2260 = vunpack.c.l.b16 %v601
        %v2261 = vunpack.c.h.b16 %v601
        %v2262 = vunpack.c.l.b16 %v602
        %v2263 = vunpack.c.h.b16 %v602
        %v2264 = vunpack.c.l.b16 %v603
        %v2265 = vunpack.c.h.b16 %v603
        %v2266 = vunpack.c.l.b16 %v604
        %v2267 = vunpack.c.h.b16 %v604
        %v2268 = vunpack.c.l.b16 %v605
        %v2269 = vunpack.c.h.b16 %v605
        %v2270 = vunpack.c.l.b16 %v606
        %v2271 = vunpack.c.h.b16 %v606
        %v2272 = vunpack.c.l.b16 %v607
        %v2273 = vunpack.c.h.b16 %v607
        %v2274 = vunpack.c.l.b16 %v608
        %v2275 = vunpack.c.h.b16 %v608
        %v2276 = vunpack.c.l.b16 %v609
        %v2277 = vunpack.c.h.b16 %v609
        %v2278 = vunpack.c.l.b16 %v610
        %v2279 = vunpack.c.h.b16 %v610
        %v2280 = vunpack.c.l.b16 %v611
        %v2281 = vunpack.c.h.b16 %v611
        %v2282 = vunpack.c.l.b16 %v612
        %v2283 = vunpack.c.h.b16 %v612
        %v2284 = vunpack.c.l.b16 %v613
        %v2285 = vunpack.c.h.b16 %v613
        %v2286 = vunpack.c.l.b16 %v614
        %v2287 = vunpack.c.h.b16 %v614
        %v2288 = vunpack.c.l.b16 %v615
        %v2289 = vunpack.c.h.b16 %v615
        %v2290 = vunpack.c.l.b16 %v616
        %v2291 = vunpack.c.h.b16 %v616
        %v2292 = vunpack.c.l.b16 %v617
        %v2293 = vunpack.c.h.b16 %v617
        %v2294 = vunpack.c.l.b16 %v618
        %v2295 = vunpack.c.h.b16 %v618
        %v2296 = vunpack.c.l.b16 %v619
        %v2297 = vunpack.c.h.b16 %v619
        %v2298 = vunpack.c.l.b16 %v620
        %v2299 = vunpack.c.h.b16 %v620
        %v2300 = vunpack.c.l.b16 %v621
        %v2301 = vunpack.c.h.b16 %v621
        %v2302 = vunpack.c.l.b16 %v622
        %v2303 = vunpack.c.h.b16 %v622
        %v2304 = vunpack.c.l.b16 %v623
        %v2305 = vunpack.c.h.b16 %v623
        %v2306 = vunpack.c.l.b16 %v624
        %v2307 = vunpack.c.h.b16 %v624
        %v2308 = vunpack.c.l.b16 %v625
        %v2309 = vunpack.c.h.b16 %v625
        %v2310 = vunpack.c.l.b16 %v626
        %v2311 = vunpack.c.h.b16 %v626
        %v2312 = vunpack.c.l.b16 %v627
        %v2313 = vunpack.c.h.b16 %v627
        %v2314 = vunpack.c.l.b16 %v628
        %v2315 = vunpack.c.h.b16 %v628
        %v2316 = vunpack.c.l.b16 %v629
        %v2317 = vunpack.c.h.b16 %v629
        %v2318 = vunpack.c.l.b16 %v630
        %v2319 = vunpack.c.h.b16 %v630
        %v2320 = vunpack.c.l.b16 %v631
        %v2321 = vunpack.c.h.b16 %v631
        %v2322 = vunpack.c.l.b16 %v632
        %v2323 = vunpack.c.h.b16 %v632
        %v2324 = vunpack.c.l.b16 %v633
        %v2325 = vunpack.c.h.b16 %v633
        %v2326 = vunpack.c.l.b16 %v634
        %v2327 = vunpack.c.h.b16 %v634
        %v2328 = vunpack.c.l.b16 %v635
        %v2329 = vunpack.c.h.b16 %v635
        %v2330 = vunpack.c.l.b16 %v636
        %v2331 = vunpack.c.h.b16 %v636
        %v2332 = vunpack.c.l.b16 %v637
        %v2333 = vunpack.c.h.b16 %v637
        %v2334 = vunpack.c.l.b16 %v638
        %v2335 = vunpack.c.h.b16 %v638
        %v2336 = vunpack.c.l.b16 %v639
        %v2337 = vunpack.c.h.b16 %v639
        %v2338 = vunpack.c.l.b16 %v640
        %v2339 = vunpack.c.h.b16 %v640
        %v2340 = vunpack.c.l.b16 %v641
        %v2341 = vunpack.c.h.b16 %v641
        %v2342 = vunpack.c.l.b16 %v642
        %v2343 = vunpack.c.h.b16 %v642
        %v2344 = vunpack.c.l.b16 %v643
        %v2345 = vunpack.c.h.b16 %v643
        %v2346 = vunpack.c.l.b16 %v644
        %v2347 = vunpack.c.h.b16 %v644
        %v2348 = vunpack.c.l.b16 %v645
        %v2349 = vunpack.c.h.b16 %v645
        %v2350 = vunpack.c.l.b16 %v646
        %v2351 = vunpack.c.h.b16 %v646
        %v2352 = vunpack.c.l.b16 %v647
        %v2353 = vunpack.c.h.b16 %v647
        %v2354 = vunpack.c.l.b16 %v648
        %v2355 = vunpack.c.h.b16 %v648
        %v2356 = vunpack.c.l.b16 %v649
        %v2357 = vunpack.c.h.b16 %v649
        %v2358 = vunpack.c.l.b16 %v650
        %v2359 = vunpack.c.h.b16 %v650
        %v2360 = vunpack.c.l.b16 %v651
        %v2361 = vunpack.c.h.b16 %v651
        %v2362 = vunpack.c.l.b16 %v652
        %v2363 = vunpack.c.h.b16 %v652
        %v2364 = vunpack.c.l.b16 %v653
        %v2365 = vunpack.c.h.b16 %v653
        %v2366 = vunpack.c.l.b16 %v654
        %v2367 = vunpack.c.h.b16 %v654
        %v2368 = vunpack.c.l.b16 %v655
        %v2369 = vunpack.c.h.b16 %v655
        %v2370 = vunpack.c.l.b16 %v656
        %v2371 = vunpack.c.h.b16 %v656
        %v2372 = vunpack.c.l.b16 %v657
        %v2373 = vunpack.c.h.b16 %v657
        %v2374 = vunpack.c.l.b16 %v658
        %v2375 = vunpack.c.h.b16 %v658
        %v2376 = vunpack.c.l.b16 %v659
        %v2377 = vunpack.c.h.b16 %v659
        %v2378 = vunpack.c.l.b16 %v660
        %v2379 = vunpack.c.h.b16 %v660
        %v2380 = vunpack.c.l.b16 %v661
        %v2381 = vunpack.c.h.b16 %v661
        %v2382 = vunpack.c.l.b16 %v662
        %v2383 = vunpack.c.h.b16 %v662
        %v2384 = vunpack.c.l.b16 %v663
        %v2385 = vunpack.c.h.b16 %v663
        %v2386 = vunpack.c.l.b16 %v664
        %v2387 = vunpack.c.h.b16 %v664
        %v2388 = vunpack.c.l.b16 %v665
        %v2389 = vunpack.c.h.b16 %v665
        %v2390 = vunpack.c.l.b16 %v666
        %v2391 = vunpack.c.h.b16 %v666
        %v2392 = vunpack.c.l.b16 %v667
        %v2393 = vunpack.c.h.b16 %v667
        %v2394 = vunpack.c.l.b16 %v668
        %v2395 = vunpack.c.h.b16 %v668
        %v2396 = vunpack.c.l.b16 %v669
        %v2397 = vunpack.c.h.b16 %v669
        %v2398 = vunpack.c.l.b16 %v670
        %v2399 = vunpack.c.h.b16 %v670
        %v2400 = vunpack.c.l.b16 %v671
        %v2401 = vunpack.c.h.b16 %v671
        %v2402 = vunpack.c.l.b16 %v672
        %v2403 = vunpack.c.h.b16 %v672
        %v2404 = vunpack.c.l.b16 %v673
        %v2405 = vunpack.c.h.b16 %v673
        %v2406 = vunpack.c.l.b16 %v674
        %v2407 = vunpack.c.h.b16 %v674
        %v2408 = vunpack.c.l.b16 %v675
        %v2409 = vunpack.c.h.b16 %v675
        %v2410 = vunpack.c.l.b16 %v676
        %v2411 = vunpack.c.h.b16 %v676
        %v2412 = vunpack.c.l.b16 %v677
        %v2413 = vunpack.c.h.b16 %v677
        %v2414 = vunpack.c.l.b16 %v678
        %v2415 = vunpack.c.h.b16 %v678
        %v2416 = vunpack.c.l.b16 %v679
        %v2417 = vunpack.c.h.b16 %v679
        %v2418 = vunpack.c.l.b16 %v680
        %v2419 = vunpack.c.h.b16 %v680
        %v2420 = vunpack.c.l.b16 %v681
        %v2421 = vunpack.c.h.b16 %v681
        %v2422 = vunpack.c.l.b16 %v682
        %v2423 = vunpack.c.h.b16 %v682
        %v2424 = vunpack.c.l.b16 %v683
        %v2425 = vunpack.c.h.b16 %v683
        %v2426 = vunpack.c.l.b16 %v684
        %v2427 = vunpack.c.h.b16 %v684
        %v2428 = vunpack.c.l.b16 %v685
        %v2429 = vunpack.c.h.b16 %v685
        %v2430 = vunpack.c.l.b16 %v686
        %v2431 = vunpack.c.h.b16 %v686
        %v2432 = vunpack.c.l.b16 %v687
        %v2433 = vunpack.c.h.b16 %v687
        %v2434 = vunpack.c.l.b16 %v688
        %v2435 = vunpack.c.h.b16 %v688
        %v2436 = vunpack.c.l.b16 %v689
        %v2437 = vunpack.c.h.b16 %v689
        %v2438 = vunpack.c.l.b16 %v690
        %v2439 = vunpack.c.h.b16 %v690
        %v2440 = vunpack.c.l.b16 %v691
        %v2441 = vunpack.c.h.b16 %v691
        %v2442 = vunpack.c.l.b16 %v692
        %v2443 = vunpack.c.h.b16 %v692
        %v2444 = vunpack.c.l.b16 %v693
        %v2445 = vunpack.c.h.b16 %v693
        %v2446 = vunpack.c.l.b16 %v694
        %v2447 = vunpack.c.h.b16 %v694
        %v2448 = vunpack.c.l.b16 %v695
        %v2449 = vunpack.c.h.b16 %v695
        %v2450 = vunpack.c.l.b16 %v696
        %v2451 = vunpack.c.h.b16 %v696
        %v2452 = vunpack.c.l.b16 %v697
        %v2453 = vunpack.c.h.b16 %v697
        %v2454 = vunpack.c.l.b16 %v698
        %v2455 = vunpack.c.h.b16 %v698
        %v2456 = vunpack.c.l.b16 %v699
        %v2457 = vunpack.c.h.b16 %v699
        %v2458 = vunpack.c.l.b16 %v700
        %v2459 = vunpack.c.h.b16 %v700
        %v2460 = vunpack.c.l.b16 %v701
        %v2461 = vunpack.c.h.b16 %v701
        %v2462 = vunpack.c.l.b16 %v702
        %v2463 = vunpack.c.h.b16 %v702
        %v2464 = vunpack.c.l.b16 %v703
        %v2465 = vunpack.c.h.b16 %v703
        %v2466 = vunpack.c.l.b16 %v704
        %v2467 = vunpack.c.h.b16 %v704
        %v2468 = vunpack.c.l.b16 %v705
        %v2469 = vunpack.c.h.b16 %v705
        %v2470 = vunpack.c.l.b16 %v706
        %v2471 = vunpack.c.h.b16 %v706
        %v2472 = vunpack.c.l.b16 %v707
        %v2473 = vunpack.c.h.b16 %v707
        %v2474 = vunpack.c.l.b16 %v708
        %v2475 = vunpack.c.h.b16 %v708
        %v2476 = vunpack.c.l.b16 %v709
        %v2477 = vunpack.c.h.b16 %v709
        %v2478 = vunpack.c.l.b16 %v710
        %v2479 = vunpack.c.h.b16 %v710
        %v2480 = vunpack.c.l.b16 %v711
        %v2481 = vunpack.c.h.b16 %v711
        %v2482 = vunpack.c.l.b16 %v712
        %v2483 = vunpack.c.h.b16 %v712
        %v2484 = vunpack.c.l.b16 %v713
        %v2485 = vunpack.c.h.b16 %v713
        %v2486 = vunpack.c.l.b16 %v714
        %v2487 = vunpack.c.h.b16 %v714
        %v2488 = vunpack.c.l.b16 %v715
        %v2489 = vunpack.c.h.b16 %v715
        %v2490 = vunpack.c.l.b16 %v716
        %v2491 = vunpack.c.h.b16 %v716
        %v2492 = vunpack.c.l.b16 %v717
        %v2493 = vunpack.c.h.b16 %v717
        %v2494 = vunpack.c.l.b16 %v718
        %v2495 = vunpack.c.h.b16 %v718
        %v2496 = vunpack.c.l.b16 %v719
        %v2497 = vunpack.c.h.b16 %v719
        %v2498 = vunpack.c.l.b16 %v720
        %v2499 = vunpack.c.h.b16 %v720
        %v2500 = vunpack.c.l.b16 %v721
        %v2501 = vunpack.c.h.b16 %v721
        %v2502 = vunpack.c.l.b16 %v722
        %v2503 = vunpack.c.h.b16 %v722
        %v2504 = vunpack.c.l.b16 %v723
        %v2505 = vunpack.c.h.b16 %v723
        %v2506 = vunpack.c.l.b16 %v724
        %v2507 = vunpack.c.h.b16 %v724
        %v2508 = vunpack.c.l.b16 %v725
        %v2509 = vunpack.c.h.b16 %v725
        %v2510 = vunpack.c.l.b16 %v726
        %v2511 = vunpack.c.h.b16 %v726
        %v2512 = vunpack.c.l.b16 %v727
        %v2513 = vunpack.c.h.b16 %v727
        %v2514 = vunpack.c.l.b16 %v728
        %v2515 = vunpack.c.h.b16 %v728
        %v2516 = vunpack.c.l.b16 %v729
        %v2517 = vunpack.c.h.b16 %v729
        %v2518 = vunpack.c.l.b16 %v730
        %v2519 = vunpack.c.h.b16 %v730
        %v2520 = vunpack.c.l.b16 %v731
        %v2521 = vunpack.c.h.b16 %v731
        %v2522 = vunpack.c.l.b16 %v732
        %v2523 = vunpack.c.h.b16 %v732
        %v2524 = vunpack.c.l.b16 %v733
        %v2525 = vunpack.c.h.b16 %v733
        %v2526 = vunpack.c.l.b16 %v734
        %v2527 = vunpack.c.h.b16 %v734
        %v2528 = vunpack.c.l.b16 %v735
        %v2529 = vunpack.c.h.b16 %v735
        %v2530 = vunpack.c.l.b16 %v736
        %v2531 = vunpack.c.h.b16 %v736
        %v2532 = vunpack.c.l.b16 %v737
        %v2533 = vunpack.c.h.b16 %v737
        %v2534 = vunpack.c.l.b16 %v738
        %v2535 = vunpack.c.h.b16 %v738
        %v2536 = vunpack.c.l.b16 %v739
        %v2537 = vunpack.c.h.b16 %v739
        %v2538 = vunpack.c.l.b16 %v740
        %v2539 = vunpack.c.h.b16 %v740
        %v2540 = vunpack.c.l.b16 %v741
        %v2541 = vunpack.c.h.b16 %v741
        %v2542 = vunpack.c.l.b16 %v742
        %v2543 = vunpack.c.h.b16 %v742
        %v2544 = vunpack.c.l.b16 %v743
        %v2545 = vunpack.c.h.b16 %v743
        %v2546 = vunpack.c.l.b16 %v744
        %v2547 = vunpack.c.h.b16 %v744
        %v2548 = vunpack.c.l.b16 %v745
        %v2549 = vunpack.c.h.b16 %v745
        %v2550 = vunpack.c.l.b16 %v746
        %v2551 = vunpack.c.h.b16 %v746
        %v2552 = vunpack.c.l.b16 %v747
        %v2553 = vunpack.c.h.b16 %v747
        %v2554 = vunpack.c.l.b16 %v748
        %v2555 = vunpack.c.h.b16 %v748
        %v2556 = vunpack.c.l.b16 %v749
        %v2557 = vunpack.c.h.b16 %v749
        %v2558 = vunpack.c.l.b16 %v750
        %v2559 = vunpack.c.h.b16 %v750
        %v2560 = vunpack.c.l.b16 %v751
        %v2561 = vunpack.c.h.b16 %v751
        %v2562 = vunpack.c.l.b16 %v752
        %v2563 = vunpack.c.h.b16 %v752
        %v2564 = vunpack.c.l.b16 %v753
        %v2565 = vunpack.c.h.b16 %v753
        %v2566 = vunpack.c.l.b16 %v754
        %v2567 = vunpack.c.h.b16 %v754
        %v2568 = vunpack.c.l.b16 %v755
        %v2569 = vunpack.c.h.b16 %v755
        %v2570 = vunpack.c.l.b16 %v756
        %v2571 = vunpack.c.h.b16 %v756
        %v2572 = vunpack.c.l.b16 %v757
        %v2573 = vunpack.c.h.b16 %v757
        %v2574 = vunpack.c.l.b16 %v758
        %v2575 = vunpack.c.h.b16 %v758
        %v2576 = vunpack.c.l.b16 %v759
        %v2577 = vunpack.c.h.b16 %v759
        %v2578 = vunpack.c.l.b16 %v760
        %v2579 = vunpack.c.h.b16 %v760
        %v2580 = vunpack.c.l.b16 %v761
        %v2581 = vunpack.c.h.b16 %v761
        %v2582 = vunpack.c.l.b16 %v762
        %v2583 = vunpack.c.h.b16 %v762
        %v2584 = vunpack.c.l.b16 %v763
        %v2585 = vunpack.c.h.b16 %v763
        %v2586 = vunpack.c.l.b16 %v764
        %v2587 = vunpack.c.h.b16 %v764
        %v2588 = vunpack.c.l.b16 %v765
        %v2589 = vunpack.c.h.b16 %v765
        %v2590 = vunpack.c.l.b16 %v766
        %v2591 = vunpack.c.h.b16 %v766
        %v2592 = vunpack.c.l.b16 %v767
        %v2593 = vunpack.c.h.b16 %v767
        %v2594 = vunpack.c.l.b16 %v768
        %v2595 = vunpack.c.h.b16 %v768
        %v2596 = vunpack.c.l.b16 %v769
        %v2597 = vunpack.c.h.b16 %v769
        %v2598 = vunpack.c.l.b16 %v770
        %v2599 = vunpack.c.h.b16 %v770
        %v2600 = vunpack.c.l.b16 %v771
        %v2601 = vunpack.c.h.b16 %v771
        %v2602 = vunpack.c.l.b16 %v772
        %v2603 = vunpack.c.h.b16 %v772
        %v2604 = vunpack.c.l.b16 %v773
        %v2605 = vunpack.c.h.b16 %v773
        %v2606 = vunpack.c.l.b16 %v774
        %v2607 = vunpack.c.h.b16 %v774
        %v2608 = vunpack.c.l.b16 %v775
        %v2609 = vunpack.c.h.b16 %v775
        %v2610 = vunpack.c.l.b16 %v776
        %v2611 = vunpack.c.h.b16 %v776
        %v2612 = vunpack.c.l.b16 %v777
        %v2613 = vunpack.c.h.b16 %v777
        %v2614 = vunpack.c.l.b16 %v778
        %v2615 = vunpack.c.h.b16 %v778
        %v2616 = vunpack.c.l.b16 %v779
        %v2617 = vunpack.c.h.b16 %v779
        %v2618 = vunpack.c.l.b16 %v780
        %v2619 = vunpack.c.h.b16 %v780
        %v2620 = vunpack.c.l.b16 %v781
        %v2621 = vunpack.c.h.b16 %v781
        %v2622 = vunpack.c.l.b16 %v782
        %v2623 = vunpack.c.h.b16 %v782
        %v2624 = vunpack.c.l.b16 %v783
        %v2625 = vunpack.c.h.b16 %v783
        %v2626 = vunpack.c.l.b16 %v784
        %v2627 = vunpack.c.h.b16 %v784
        %v2628 = vunpack.c.l.b16 %v785
        %v2629 = vunpack.c.h.b16 %v785
        %v2630 = vunpack.c.l.b16 %v786
        %v2631 = vunpack.c.h.b16 %v786
        %v2632 = vunpack.c.l.b16 %v787
        %v2633 = vunpack.c.h.b16 %v787
        %v2634 = vunpack.c.l.b16 %v788
        %v2635 = vunpack.c.h.b16 %v788
        %v2636 = vunpack.c.l.b16 %v789
        %v2637 = vunpack.c.h.b16 %v789
        %v2638 = vunpack.c.l.b16 %v790
        %v2639 = vunpack.c.h.b16 %v790
        %v2640 = vunpack.c.l.b16 %v791
        %v2641 = vunpack.c.h.b16 %v791
        %v2642 = vunpack.c.l.b16 %v792
        %v2643 = vunpack.c.h.b16 %v792
        %v2644 = vunpack.c.l.b16 %v793
        %v2645 = vunpack.c.h.b16 %v793
        %v2646 = vunpack.c.l.b16 %v794
        %v2647 = vunpack.c.h.b16 %v794
        %v2648 = vunpack.c.l.b16 %v795
        %v2649 = vunpack.c.h.b16 %v795
        %v2650 = vunpack.c.l.b16 %v796
        %v2651 = vunpack.c.h.b16 %v796
        %v2652 = vunpack.c.l.b16 %v797
        %v2653 = vunpack.c.h.b16 %v797
        %v2654 = vunpack.c.l.b16 %v798
        %v2655 = vunpack.c.h.b16 %v798
        %v2656 = vunpack.c.l.b16 %v799
        %v2657 = vunpack.c.h.b16 %v799
        %v2658 = vunpack.c.l.b16 %v800
        %v2659 = vunpack.c.h.b16 %v800
        %v2660 = vunpack.c.l.b16 %v801
        %v2661 = vunpack.c.h.b16 %v801
        %v2662 = vunpack.c.l.b16 %v802
        %v2663 = vunpack.c.h.b16 %v802
        %v2664 = vunpack.c.l.b16 %v803
        %v2665 = vunpack.c.h.b16 %v803
        %v2666 = vunpack.c.l.b16 %v804
        %v2667 = vunpack.c.h.b16 %v804
        %v2668 = vunpack.c.l.b16 %v805
        %v2669 = vunpack.c.h.b16 %v805
        %v2670 = vunpack.c.l.b16 %v806
        %v2671 = vunpack.c.h.b16 %v806
        %v2672 = vunpack.c.l.b16 %v807
        %v2673 = vunpack.c.h.b16 %v807
        %v2674 = vunpack.c.l.b16 %v808
        %v2675 = vunpack.c.h.b16 %v808
        %v2676 = vunpack.c.l.b16 %v809
        %v2677 = vunpack.c.h.b16 %v809
        %v2678 = vunpack.c.l.b16 %v810
        %v2679 = vunpack.c.h.b16 %v810
        %v2680 = vunpack.c.l.b16 %v811
        %v2681 = vunpack.c.h.b16 %v811
        %v2682 = vunpack.c.l.b16 %v812
        %v2683 = vunpack.c.h.b16 %v812
        %v2684 = vunpack.c.l.b16 %v813
        %v2685 = vunpack.c.h.b16 %v813
        %v2686 = vunpack.c.l.b16 %v814
        %v2687 = vunpack.c.h.b16 %v814
        %v2688 = vunpack.c.l.b16 %v815
        %v2689 = vunpack.c.h.b16 %v815
        %v2690 = vunpack.c.l.b16 %v816
        %v2691 = vunpack.c.h.b16 %v816
        %v2692 = vunpack.c.l.b16 %v817
        %v2693 = vunpack.c.h.b16 %v817
        %v2694 = vunpack.c.l.b16 %v818
        %v2695 = vunpack.c.h.b16 %v818
        %v2696 = vunpack.c.l.b16 %v819
        %v2697 = vunpack.c.h.b16 %v819
        %v2698 = vunpack.c.l.b16 %v820
        %v2699 = vunpack.c.h.b16 %v820
        %v2700 = vunpack.c.l.b16 %v821
        %v2701 = vunpack.c.h.b16 %v821
        %v2702 = vunpack.c.l.b16 %v822
        %v2703 = vunpack.c.h.b16 %v822
        %v2704 = vunpack.c.l.b16 %v823
        %v2705 = vunpack.c.h.b16 %v823
        %v2706 = vunpack.c.l.b16 %v824
        %v2707 = vunpack.c.h.b16 %v824
        %v2708 = vunpack.c.l.b16 %v825
        %v2709 = vunpack.c.h.b16 %v825
        %v2710 = vunpack.c.l.b16 %v826
        %v2711 = vunpack.c.h.b16 %v826
        %v2712 = vunpack.c.l.b16 %v827
        %v2713 = vunpack.c.h.b16 %v827
        %v2714 = vunpack.c.l.b16 %v828
        %v2715 = vunpack.c.h.b16 %v828
        %v2716 = vunpack.c.l.b16 %v829
        %v2717 = vunpack.c.h.b16 %v829
        %v2718 = vunpack.c.l.b16 %v830
        %v2719 = vunpack.c.h.b16 %v830
        %v2720 = vunpack.c.l.b16 %v831
        %v2721 = vunpack.c.h.b16 %v831
        %v2722 = vunpack.c.l.b16 %v832
        %v2723 = vunpack.c.h.b16 %v832
        %v2724 = vunpack.c.l.b16 %v833
        %v2725 = vunpack.c.h.b16 %v833
        %v2726 = vunpack.c.l.b16 %v834
        %v2727 = vunpack.c.h.b16 %v834
        %v2728 = vunpack.c.l.b16 %v835
        %v2729 = vunpack.c.h.b16 %v835
        %v2730 = vunpack.c.l.b16 %v836
        %v2731 = vunpack.c.h.b16 %v836
        %v2732 = vunpack.c.l.b16 %v837
        %v2733 = vunpack.c.h.b16 %v837
        %v2734 = vunpack.c.l.b16 %v838
        %v2735 = vunpack.c.h.b16 %v838
        %v2736 = vunpack.c.l.b16 %v839
        %v2737 = vunpack.c.h.b16 %v839
        %v2738 = vunpack.c.l.b16 %v840
        %v2739 = vunpack.c.h.b16 %v840
        %v2740 = vunpack.c.l.b16 %v841
        %v2741 = vunpack.c.h.b16 %v841
        %v2742 = vunpack.c.l.b16 %v842
        %v2743 = vunpack.c.h.b16 %v842
        %v2744 = vunpack.c.l.b16 %v843
        %v2745 = vunpack.c.h.b16 %v843
        %v2746 = vunpack.c.l.b16 %v844
        %v2747 = vunpack.c.h.b16 %v844
        %v2748 = vunpack.c.l.b16 %v845
        %v2749 = vunpack.c.h.b16 %v845
        %v2750 = vunpack.c.l.b16 %v846
        %v2751 = vunpack.c.h.b16 %v846
        %v2752 = vunpack.c.l.b16 %v847
        %v2753 = vunpack.c.h.b16 %v847
        %v2754 = vunpack.c.l.b16 %v848
        %v2755 = vunpack.c.h.b16 %v848
        %v2756 = vunpack.c.l.b16 %v849
        %v2757 = vunpack.c.h.b16 %v849
        %v2758 = vunpack.c.l.b16 %v850
        %v2759 = vunpack.c.h.b16 %v850
        %v2760 = vunpack.c.l.b16 %v851
        %v2761 = vunpack.c.h.b16 %v851
        %v2762 = vunpack.c.l.b16 %v852
        %v2763 = vunpack.c.h.b16 %v852
        %v2764 = vunpack.c.l.b16 %v853
        %v2765 = vunpack.c.h.b16 %v853
        %v2766 = vunpack.c.l.b16 %v854
        %v2767 = vunpack.c.h.b16 %v854
        %v2768 = vunpack.c.l.b16 %v855
        %v2769 = vunpack.c.h.b16 %v855
        %v2770 = vunpack.c.l.b16 %v856
        %v2771 = vunpack.c.h.b16 %v856
        %v2772 = vunpack.c.l.b16 %v857
        %v2773 = vunpack.c.h.b16 %v857
        %v2774 = vunpack.c.l.b16 %v858
        %v2775 = vunpack.c.h.b16 %v858
        %v2776 = vunpack.c.l.b16 %v859
        %v2777 = vunpack.c.h.b16 %v859
        %v2778 = vunpack.c.l.b16 %v860
        %v2779 = vunpack.c.h.b16 %v860
        %v2780 = vunpack.c.l.b16 %v861
        %v2781 = vunpack.c.h.b16 %v861
        %v2782 = vunpack.c.l.b16 %v862
        %v2783 = vunpack.c.h.b16 %v862
        %v2784 = vunpack.c.l.b16 %v863
        %v2785 = vunpack.c.h.b16 %v863
        %v2786 = vunpack.c.l.b16 %v864
        %v2787 = vunpack.c.h.b16 %v864
        %v2788 = vunpack.c.l.b16 %v865
        %v2789 = vunpack.c.h.b16 %v865
        %v2790 = vunpack.c.l.b16 %v866
        %v2791 = vunpack.c.h.b16 %v866
        %v2792 = vunpack.c.l.b16 %v867
        %v2793 = vunpack.c.h.b16 %v867
        %v2794 = vpack.c.b16 %v1618, %v1594
        %v2795 = vpack.c.b16 %v1619, %v1595
        %v2796 = vpack.c.b16 %v1620, %v1596
        %v2797 = vpack.c.b16 %v1621, %v1597
        %v2798 = vpack.c.b16 %v1622, %v1598
        %v2799 = vpack.c.b16 %v1623, %v1599
        %v2800 = vpack.c.b16 %v1624, %v1600
        %v2801 = vpack.c.b16 %v1625, %v1601
        %v2802 = vpack.c.b16 %v1626, %v1602
        %v2803 = vpack.c.b16 %v1627, %v1603
        %v2804 = vpack.c.b16 %v1628, %v1604
        %v2805 = vpack.c.b16 %v1629, %v1605
        %v2806 = vpack.c.b16 %v1630, %v1606
        %v2807 = vpack.c.b16 %v1631, %v1607
        %v2808 = vpack.c.b16 %v1632, %v1608
        %v2809 = vpack.c.b16 %v1633, %v1609
        %v2810 = vpack.c.b16 %v1634, %v1610
        %v2811 = vpack.c.b16 %v1635, %v1611
        %v2812 = vpack.c.b16 %v1636, %v1612
        %v2813 = vpack.c.b16 %v1637, %v1613
        %v2814 = vpack.c.b16 %v1638, %v1614
        %v2815 = vpack.c.b16 %v1639, %v1615
        %v2816 = vpack.c.b16 %v1640, %v1616
        %v2817 = vpack.c.b16 %v1641, %v1617
        %v2818 = vpack.c.b16 %v1666, %v1642
        %v2819 = vpack.c.b16 %v1667, %v1643
        %v2820 = vpack.c.b16 %v1668, %v1644
        %v2821 = vpack.c.b16 %v1669, %v1645
        %v2822 = vpack.c.b16 %v1670, %v1646
        %v2823 = vpack.c.b16 %v1671, %v1647
        %v2824 = vpack.c.b16 %v1672, %v1648
        %v2825 = vpack.c.b16 %v1673, %v1649
        %v2826 = vpack.c.b16 %v1674, %v1650
        %v2827 = vpack.c.b16 %v1675, %v1651
        %v2828 = vpack.c.b16 %v1676, %v1652
        %v2829 = vpack.c.b16 %v1677, %v1653
        %v2830 = vpack.c.b16 %v1678, %v1654
        %v2831 = vpack.c.b16 %v1679, %v1655
        %v2832 = vpack.c.b16 %v1680, %v1656
        %v2833 = vpack.c.b16 %v1681, %v1657
        %v2834 = vpack.c.b16 %v1682, %v1658
        %v2835 = vpack.c.b16 %v1683, %v1659
        %v2836 = vpack.c.b16 %v1684, %v1660
        %v2837 = vpack.c.b16 %v1685, %v1661
        %v2838 = vpack.c.b16 %v1686, %v1662
        %v2839 = vpack.c.b16 %v1687, %v1663
        %v2840 = vpack.c.b16 %v1688, %v1664
        %v2841 = vpack.c.b16 %v1689, %v1665
        %v2842 = vpack.c.b16 %v1714, %v1690
        %v2843 = vpack.c.b16 %v1715, %v1691
        %v2844 = vpack.c.b16 %v1716, %v1692
        %v2845 = vpack.c.b16 %v1717, %v1693
        %v2846 = vpack.c.b16 %v1718, %v1694
        %v2847 = vpack.c.b16 %v1719, %v1695
        %v2848 = vpack.c.b16 %v1720, %v1696
        %v2849 = vpack.c.b16 %v1721, %v1697
        %v2850 = vpack.c.b16 %v1722, %v1698
        %v2851 = vpack.c.b16 %v1723, %v1699
        %v2852 = vpack.c.b16 %v1724, %v1700
        %v2853 = vpack.c.b16 %v1725, %v1701
        %v2854 = vpack.c.b16 %v1726, %v1702
        %v2855 = vpack.c.b16 %v1727, %v1703
        %v2856 = vpack.c.b16 %v1728, %v1704
        %v2857 = vpack.c.b16 %v1729, %v1705
        %v2858 = vpack.c.b16 %v1730, %v1706
        %v2859 = vpack.c.b16 %v1731, %v1707
        %v2860 = vpack.c.b16 %v1732, %v1708
        %v2861 = vpack.c.b16 %v1733, %v1709
        %v2862 = vpack.c.b16 %v1734, %v1710
        %v2863 = vpack.c.b16 %v1735, %v1711
        %v2864 = vpack.c.b16 %v1736, %v1712
        %v2865 = vpack.c.b16 %v1737, %v1713
        %v2866 = vpack.c.b16 %v1762, %v1738
        %v2867 = vpack.c.b16 %v1763, %v1739
        %v2868 = vpack.c.b16 %v1764, %v1740
        %v2869 = vpack.c.b16 %v1765, %v1741
        %v2870 = vpack.c.b16 %v1766, %v1742
        %v2871 = vpack.c.b16 %v1767, %v1743
        %v2872 = vpack.c.b16 %v1768, %v1744
        %v2873 = vpack.c.b16 %v1769, %v1745
        %v2874 = vpack.c.b16 %v1770, %v1746
        %v2875 = vpack.c.b16 %v1771, %v1747
        %v2876 = vpack.c.b16 %v1772, %v1748
        %v2877 = vpack.c.b16 %v1773, %v1749
        %v2878 = vpack.c.b16 %v1774, %v1750
        %v2879 = vpack.c.b16 %v1775, %v1751
        %v2880 = vpack.c.b16 %v1776, %v1752
        %v2881 = vpack.c.b16 %v1777, %v1753
        %v2882 = vpack.c.b16 %v1778, %v1754
        %v2883 = vpack.c.b16 %v1779, %v1755
        %v2884 = vpack.c.b16 %v1780, %v1756
        %v2885 = vpack.c.b16 %v1781, %v1757
        %v2886 = vpack.c.b16 %v1782, %v1758
        %v2887 = vpack.c.b16 %v1783, %v1759
        %v2888 = vpack.c.b16 %v1784, %v1760
        %v2889 = vpack.c.b16 %v1785, %v1761
        %v2890 = vpack.c.b16 %v1810, %v1786
        %v2891 = vpack.c.b16 %v1811, %v1787
        %v2892 = vpack.c.b16 %v1812, %v1788
        %v2893 = vpack.c.b16 %v1813, %v1789
        %v2894 = vpack.c.b16 %v1814, %v1790
        %v2895 = vpack.c.b16 %v1815, %v1791
        %v2896 = vpack.c.b16 %v1816, %v1792
        %v2897 = vpack.c.b16 %v1817, %v1793
        %v2898 = vpack.c.b16 %v1818, %v1794
        %v2899 = vpack.c.b16 %v1819, %v1795
        %v2900 = vpack.c.b16 %v1820, %v1796
        %v2901 = vpack.c.b16 %v1821, %v1797
        %v2902 = vpack.c.b16 %v1822, %v1798
        %v2903 = vpack.c.b16 %v1823, %v1799
        %v2904 = vpack.c.b16 %v1824, %v1800
        %v2905 = vpack.c.b16 %v1825, %v1801
        %v2906 = vpack.c.b16 %v1826, %v1802
        %v2907 = vpack.c.b16 %v1827, %v1803
        %v2908 = vpack.c.b16 %v1828, %v1804
        %v2909 = vpack.c.b16 %v1829, %v1805
        %v2910 = vpack.c.b16 %v1830, %v1806
        %v2911 = vpack.c.b16 %v1831, %v1807
        %v2912 = vpack.c.b16 %v1832, %v1808
        %v2913 = vpack.c.b16 %v1833, %v1809
        %v2914 = vpack.c.b16 %v1858, %v1834
        %v2915 = vpack.c.b16 %v1859, %v1835
        %v2916 = vpack.c.b16 %v1860, %v1836
        %v2917 = vpack.c.b16 %v1861, %v1837
        %v2918 = vpack.c.b16 %v1862, %v1838
        %v2919 = vpack.c.b16 %v1863, %v1839
        %v2920 = vpack.c.b16 %v1864, %v1840
        %v2921 = vpack.c.b16 %v1865, %v1841
        %v2922 = vpack.c.b16 %v1866, %v1842
        %v2923 = vpack.c.b16 %v1867, %v1843
        %v2924 = vpack.c.b16 %v1868, %v1844
        %v2925 = vpack.c.b16 %v1869, %v1845
        %v2926 = vpack.c.b16 %v1870, %v1846
        %v2927 = vpack.c.b16 %v1871, %v1847
        %v2928 = vpack.c.b16 %v1872, %v1848
        %v2929 = vpack.c.b16 %v1873, %v1849
        %v2930 = vpack.c.b16 %v1874, %v1850
        %v2931 = vpack.c.b16 %v1875, %v1851
        %v2932 = vpack.c.b16 %v1876, %v1852
        %v2933 = vpack.c.b16 %v1877, %v1853
        %v2934 = vpack.c.b16 %v1878, %v1854
        %v2935 = vpack.c.b16 %v1879, %v1855
        %v2936 = vpack.c.b16 %v1880, %v1856
        %v2937 = vpack.c.b16 %v1881, %v1857
        %v2938 = vpack.c.b16 %v1906, %v1882
        %v2939 = vpack.c.b16 %v1907, %v1883
        %v2940 = vpack.c.b16 %v1908, %v1884
        %v2941 = vpack.c.b16 %v1909, %v1885
        %v2942 = vpack.c.b16 %v1910, %v1886
        %v2943 = vpack.c.b16 %v1911, %v1887
        %v2944 = vpack.c.b16 %v1912, %v1888
        %v2945 = vpack.c.b16 %v1913, %v1889
        %v2946 = vpack.c.b16 %v1914, %v1890
        %v2947 = vpack.c.b16 %v1915, %v1891
        %v2948 = vpack.c.b16 %v1916, %v1892
        %v2949 = vpack.c.b16 %v1917, %v1893
        %v2950 = vpack.c.b16 %v1918, %v1894
        %v2951 = vpack.c.b16 %v1919, %v1895
        %v2952 = vpack.c.b16 %v1920, %v1896
        %v2953 = vpack.c.b16 %v1921, %v1897
        %v2954 = vpack.c.b16 %v1922, %v1898
        %v2955 = vpack.c.b16 %v1923, %v1899
        %v2956 = vpack.c.b16 %v1924, %v1900
        %v2957 = vpack.c.b16 %v1925, %v1901
        %v2958 = vpack.c.b16 %v1926, %v1902
        %v2959 = vpack.c.b16 %v1927, %v1903
        %v2960 = vpack.c.b16 %v1928, %v1904
        %v2961 = vpack.c.b16 %v1929, %v1905
        %v2962 = vpack.c.b16 %v1954, %v1930
        %v2963 = vpack.c.b16 %v1955, %v1931
        %v2964 = vpack.c.b16 %v1956, %v1932
        %v2965 = vpack.c.b16 %v1957, %v1933
        %v2966 = vpack.c.b16 %v1958, %v1934
        %v2967 = vpack.c.b16 %v1959, %v1935
        %v2968 = vpack.c.b16 %v1960, %v1936
        %v2969 = vpack.c.b16 %v1961, %v1937
        %v2970 = vpack.c.b16 %v1962, %v1938
        %v2971 = vpack.c.b16 %v1963, %v1939
        %v2972 = vpack.c.b16 %v1964, %v1940
        %v2973 = vpack.c.b16 %v1965, %v1941
        %v2974 = vpack.c.b16 %v1966, %v1942
        %v2975 = vpack.c.b16 %v1967, %v1943
        %v2976 = vpack.c.b16 %v1968, %v1944
        %v2977 = vpack.c.b16 %v1969, %v1945
        %v2978 = vpack.c.b16 %v1970, %v1946
        %v2979 = vpack.c.b16 %v1971, %v1947
        %v2980 = vpack.c.b16 %v1972, %v1948
        %v2981 = vpack.c.b16 %v1973, %v1949
        %v2982 = vpack.c.b16 %v1974, %v1950
        %v2983 = vpack.c.b16 %v1975, %v1951
        %v2984 = vpack.c.b16 %v1976, %v1952
        %v2985 = vpack.c.b16 %v1977, %v1953
        %v2986 = vpack.c.b16 %v2002, %v1978
        %v2987 = vpack.c.b16 %v2003, %v1979
        %v2988 = vpack.c.b16 %v2004, %v1980
        %v2989 = vpack.c.b16 %v2005, %v1981
        %v2990 = vpack.c.b16 %v2006, %v1982
        %v2991 = vpack.c.b16 %v2007, %v1983
        %v2992 = vpack.c.b16 %v2008, %v1984
        %v2993 = vpack.c.b16 %v2009, %v1985
        %v2994 = vpack.c.b16 %v2010, %v1986
        %v2995 = vpack.c.b16 %v2011, %v1987
        %v2996 = vpack.c.b16 %v2012, %v1988
        %v2997 = vpack.c.b16 %v2013, %v1989
        %v2998 = vpack.c.b16 %v2014, %v1990
        %v2999 = vpack.c.b16 %v2015, %v1991
        %v3000 = vpack.c.b16 %v2016, %v1992
        %v3001 = vpack.c.b16 %v2017, %v1993
        %v3002 = vpack.c.b16 %v2018, %v1994
        %v3003 = vpack.c.b16 %v2019, %v1995
        %v3004 = vpack.c.b16 %v2020, %v1996
        %v3005 = vpack.c.b16 %v2021, %v1997
        %v3006 = vpack.c.b16 %v2022, %v1998
        %v3007 = vpack.c.b16 %v2023, %v1999
        %v3008 = vpack.c.b16 %v2024, %v2000
        %v3009 = vpack.c.b16 %v2025, %v2001
        %v3010 = vpack.c.b16 %v2050, %v2026
        %v3011 = vpack.c.b16 %v2051, %v2027
        %v3012 = vpack.c.b16 %v2052, %v2028
        %v3013 = vpack.c.b16 %v2053, %v2029
        %v3014 = vpack.c.b16 %v2054, %v2030
        %v3015 = vpack.c.b16 %v2055, %v2031
        %v3016 = vpack.c.b16 %v2056, %v2032
        %v3017 = vpack.c.b16 %v2057, %v2033
        %v3018 = vpack.c.b16 %v2058, %v2034
        %v3019 = vpack.c.b16 %v2059, %v2035
        %v3020 = vpack.c.b16 %v2060, %v2036
        %v3021 = vpack.c.b16 %v2061, %v2037
        %v3022 = vpack.c.b16 %v2062, %v2038
        %v3023 = vpack.c.b16 %v2063, %v2039
        %v3024 = vpack.c.b16 %v2064, %v2040
        %v3025 = vpack.c.b16 %v2065, %v2041
        %v3026 = vpack.c.b16 %v2066, %v2042
        %v3027 = vpack.c.b16 %v2067, %v2043
        %v3028 = vpack.c.b16 %v2068, %v2044
        %v3029 = vpack.c.b16 %v2069, %v2045
        %v3030 = vpack.c.b16 %v2070, %v2046
        %v3031 = vpack.c.b16 %v2071, %v2047
        %v3032 = vpack.c.b16 %v2072, %v2048
        %v3033 = vpack.c.b16 %v2073, %v2049
        %v3034 = vpack.c.b16 %v2098, %v2074
        %v3035 = vpack.c.b16 %v2099, %v2075
        %v3036 = vpack.c.b16 %v2100, %v2076
        %v3037 = vpack.c.b16 %v2101, %v2077
        %v3038 = vpack.c.b16 %v2102, %v2078
        %v3039 = vpack.c.b16 %v2103, %v2079
        %v3040 = vpack.c.b16 %v2104, %v2080
        %v3041 = vpack.c.b16 %v2105, %v2081
        %v3042 = vpack.c.b16 %v2106, %v2082
        %v3043 = vpack.c.b16 %v2107, %v2083
        %v3044 = vpack.c.b16 %v2108, %v2084
        %v3045 = vpack.c.b16 %v2109, %v2085
        %v3046 = vpack.c.b16 %v2110, %v2086
        %v3047 = vpack.c.b16 %v2111, %v2087
        %v3048 = vpack.c.b16 %v2112, %v2088
        %v3049 = vpack.c.b16 %v2113, %v2089
        %v3050 = vpack.c.b16 %v2114, %v2090
        %v3051 = vpack.c.b16 %v2115, %v2091
        %v3052 = vpack.c.b16 %v2116, %v2092
        %v3053 = vpack.c.b16 %v2117, %v2093
        %v3054 = vpack.c.b16 %v2118, %v2094
        %v3055 = vpack.c.b16 %v2119, %v2095
        %v3056 = vpack.c.b16 %v2120, %v2096
        %v3057 = vpack.c.b16 %v2121, %v2097
        %v3058 = vpack.c.b16 %v2146, %v2122
        %v3059 = vpack.c.b16 %v2147, %v2123
        %v3060 = vpack.c.b16 %v2148, %v2124
        %v3061 = vpack.c.b16 %v2149, %v2125
        %v3062 = vpack.c.b16 %v2150, %v2126
        %v3063 = vpack.c.b16 %v2151, %v2127
        %v3064 = vpack.c.b16 %v2152, %v2128
        %v3065 = vpack.c.b16 %v2153, %v2129
        %v3066 = vpack.c.b16 %v2154, %v2130
        %v3067 = vpack.c.b16 %v2155, %v2131
        %v3068 = vpack.c.b16 %v2156, %v2132
        %v3069 = vpack.c.b16 %v2157, %v2133
        %v3070 = vpack.c.b16 %v2158, %v2134
        %v3071 = vpack.c.b16 %v2159, %v2135
        %v3072 = vpack.c.b16 %v2160, %v2136
        %v3073 = vpack.c.b16 %v2161, %v2137
        %v3074 = vpack.c.b16 %v2162, %v2138
        %v3075 = vpack.c.b16 %v2163, %v2139
        %v3076 = vpack.c.b16 %v2164, %v2140
        %v3077 = vpack.c.b16 %v2165, %v2141
        %v3078 = vpack.c.b16 %v2166, %v2142
        %v3079 = vpack.c.b16 %v2167, %v2143
        %v3080 = vpack.c.b16 %v2168, %v2144
        %v3081 = vpack.c.b16 %v2169, %v2145
        %v3082 = vpack.c.b16 %v2194, %v2170
        %v3083 = vpack.c.b16 %v2195, %v2171
        %v3084 = vpack.c.b16 %v2196, %v2172
        %v3085 = vpack.c.b16 %v2197, %v2173
        %v3086 = vpack.c.b16 %v2198, %v2174
        %v3087 = vpack.c.b16 %v2199, %v2175
        %v3088 = vpack.c.b16 %v2200, %v2176
        %v3089 = vpack.c.b16 %v2201, %v2177
        %v3090 = vpack.c.b16 %v2202, %v2178
        %v3091 = vpack.c.b16 %v2203, %v2179
        %v3092 = vpack.c.b16 %v2204, %v2180
        %v3093 = vpack.c.b16 %v2205, %v2181
        %v3094 = vpack.c.b16 %v2206, %v2182
        %v3095 = vpack.c.b16 %v2207, %v2183
        %v3096 = vpack.c.b16 %v2208, %v2184
        %v3097 = vpack.c.b16 %v2209, %v2185
        %v3098 = vpack.c.b16 %v2210, %v2186
        %v3099 = vpack.c.b16 %v2211, %v2187
        %v3100 = vpack.c.b16 %v2212, %v2188
        %v3101 = vpack.c.b16 %v2213, %v2189
        %v3102 = vpack.c.b16 %v2214, %v2190
        %v3103 = vpack.c.b16 %v2215, %v2191
        %v3104 = vpack.c.b16 %v2216, %v2192
        %v3105 = vpack.c.b16 %v2217, %v2193
        %v3106 = vpack.c.b16 %v2242, %v2218
        %v3107 = vpack.c.b16 %v2243, %v2219
        %v3108 = vpack.c.b16 %v2244, %v2220
        %v3109 = vpack.c.b16 %v2245, %v2221
        %v3110 = vpack.c.b16 %v2246, %v2222
        %v3111 = vpack.c.b16 %v2247, %v2223
        %v3112 = vpack.c.b16 %v2248, %v2224
        %v3113 = vpack.c.b16 %v2249, %v2225
        %v3114 = vpack.c.b16 %v2250, %v2226
        %v3115 = vpack.c.b16 %v2251, %v2227
        %v3116 = vpack.c.b16 %v2252, %v2228
        %v3117 = vpack.c.b16 %v2253, %v2229
        %v3118 = vpack.c.b16 %v2254, %v2230
        %v3119 = vpack.c.b16 %v2255, %v2231
        %v3120 = vpack.c.b16 %v2256, %v2232
        %v3121 = vpack.c.b16 %v2257, %v2233
        %v3122 = vpack.c.b16 %v2258, %v2234
        %v3123 = vpack.c.b16 %v2259, %v2235
        %v3124 = vpack.c.b16 %v2260, %v2236
        %v3125 = vpack.c.b16 %v2261, %v2237
        %v3126 = vpack.c.b16 %v2262, %v2238
        %v3127 = vpack.c.b16 %v2263, %v2239
        %v3128 = vpack.c.b16 %v2264, %v2240
        %v3129 = vpack.c.b16 %v2265, %v2241
        %v3130 = vpack.c.b16 %v2290, %v2266
        %v3131 = vpack.c.b16 %v2291, %v2267
        %v3132 = vpack.c.b16 %v2292, %v2268
        %v3133 = vpack.c.b16 %v2293, %v2269
        %v3134 = vpack.c.b16 %v2294, %v2270
        %v3135 = vpack.c.b16 %v2295, %v2271
        %v3136 = vpack.c.b16 %v2296, %v2272
        %v3137 = vpack.c.b16 %v2297, %v2273
        %v3138 = vpack.c.b16 %v2298, %v2274
        %v3139 = vpack.c.b16 %v2299, %v2275
        %v3140 = vpack.c.b16 %v2300, %v2276
        %v3141 = vpack.c.b16 %v2301, %v2277
        %v3142 = vpack.c.b16 %v2302, %v2278
        %v3143 = vpack.c.b16 %v2303, %v2279
        %v3144 = vpack.c.b16 %v2304, %v2280
        %v3145 = vpack.c.b16 %v2305, %v2281
        %v3146 = vpack.c.b16 %v2306, %v2282
        %v3147 = vpack.c.b16 %v2307, %v2283
        %v3148 = vpack.c.b16 %v2308, %v2284
        %v3149 = vpack.c.b16 %v2309, %v2285
        %v3150 = vpack.c.b16 %v2310, %v2286
        %v3151 = vpack.c.b16 %v2311, %v2287
        %v3152 = vpack.c.b16 %v2312, %v2288
        %v3153 = vpack.c.b16 %v2313, %v2289
        %v3154 = vpack.c.b16 %v2338, %v2314
        %v3155 = vpack.c.b16 %v2339, %v2315
        %v3156 = vpack.c.b16 %v2340, %v2316
        %v3157 = vpack.c.b16 %v2341, %v2317
        %v3158 = vpack.c.b16 %v2342, %v2318
        %v3159 = vpack.c.b16 %v2343, %v2319
        %v3160 = vpack.c.b16 %v2344, %v2320
        %v3161 = vpack.c.b16 %v2345, %v2321
        %v3162 = vpack.c.b16 %v2346, %v2322
        %v3163 = vpack.c.b16 %v2347, %v2323
        %v3164 = vpack.c.b16 %v2348, %v2324
        %v3165 = vpack.c.b16 %v2349, %v2325
        %v3166 = vpack.c.b16 %v2350, %v2326
        %v3167 = vpack.c.b16 %v2351, %v2327
        %v3168 = vpack.c.b16 %v2352, %v2328
        %v3169 = vpack.c.b16 %v2353, %v2329
        %v3170 = vpack.c.b16 %v2354, %v2330
        %v3171 = vpack.c.b16 %v2355, %v2331
        %v3172 = vpack.c.b16 %v2356, %v2332
        %v3173 = vpack.c.b16 %v2357, %v2333
        %v3174 = vpack.c.b16 %v2358, %v2334
        %v3175 = vpack.c.b16 %v2359, %v2335
        %v3176 = vpack.c.b16 %v2360, %v2336
        %v3177 = vpack.c.b16 %v2361, %v2337
        %v3178 = vpack.c.b16 %v2386, %v2362
        %v3179 = vpack.c.b16 %v2387, %v2363
        %v3180 = vpack.c.b16 %v2388, %v2364
        %v3181 = vpack.c.b16 %v2389, %v2365
        %v3182 = vpack.c.b16 %v2390, %v2366
        %v3183 = vpack.c.b16 %v2391, %v2367
        %v3184 = vpack.c.b16 %v2392, %v2368
        %v3185 = vpack.c.b16 %v2393, %v2369
        %v3186 = vpack.c.b16 %v2394, %v2370
        %v3187 = vpack.c.b16 %v2395, %v2371
        %v3188 = vpack.c.b16 %v2396, %v2372
        %v3189 = vpack.c.b16 %v2397, %v2373
        %v3190 = vpack.c.b16 %v2398, %v2374
        %v3191 = vpack.c.b16 %v2399, %v2375
        %v3192 = vpack.c.b16 %v2400, %v2376
        %v3193 = vpack.c.b16 %v2401, %v2377
        %v3194 = vpack.c.b16 %v2402, %v2378
        %v3195 = vpack.c.b16 %v2403, %v2379
        %v3196 = vpack.c.b16 %v2404, %v2380
        %v3197 = vpack.c.b16 %v2405, %v2381
        %v3198 = vpack.c.b16 %v2406, %v2382
        %v3199 = vpack.c.b16 %v2407, %v2383
        %v3200 = vpack.c.b16 %v2408, %v2384
        %v3201 = vpack.c.b16 %v2409, %v2385
        %v3202 = vpack.c.b16 %v2434, %v2410
        %v3203 = vpack.c.b16 %v2435, %v2411
        %v3204 = vpack.c.b16 %v2436, %v2412
        %v3205 = vpack.c.b16 %v2437, %v2413
        %v3206 = vpack.c.b16 %v2438, %v2414
        %v3207 = vpack.c.b16 %v2439, %v2415
        %v3208 = vpack.c.b16 %v2440, %v2416
        %v3209 = vpack.c.b16 %v2441, %v2417
        %v3210 = vpack.c.b16 %v2442, %v2418
        %v3211 = vpack.c.b16 %v2443, %v2419
        %v3212 = vpack.c.b16 %v2444, %v2420
        %v3213 = vpack.c.b16 %v2445, %v2421
        %v3214 = vpack.c.b16 %v2446, %v2422
        %v3215 = vpack.c.b16 %v2447, %v2423
        %v3216 = vpack.c.b16 %v2448, %v2424
        %v3217 = vpack.c.b16 %v2449, %v2425
        %v3218 = vpack.c.b16 %v2450, %v2426
        %v3219 = vpack.c.b16 %v2451, %v2427
        %v3220 = vpack.c.b16 %v2452, %v2428
        %v3221 = vpack.c.b16 %v2453, %v2429
        %v3222 = vpack.c.b16 %v2454, %v2430
        %v3223 = vpack.c.b16 %v2455, %v2431
        %v3224 = vpack.c.b16 %v2456, %v2432
        %v3225 = vpack.c.b16 %v2457, %v2433
        %v3226 = vpack.c.b16 %v2482, %v2458
        %v3227 = vpack.c.b16 %v2483, %v2459
        %v3228 = vpack.c.b16 %v2484, %v2460
        %v3229 = vpack.c.b16 %v2485, %v2461
        %v3230 = vpack.c.b16 %v2486, %v2462
        %v3231 = vpack.c.b16 %v2487, %v2463
        %v3232 = vpack.c.b16 %v2488, %v2464
        %v3233 = vpack.c.b16 %v2489, %v2465
        %v3234 = vpack.c.b16 %v2490, %v2466
        %v3235 = vpack.c.b16 %v2491, %v2467
        %v3236 = vpack.c.b16 %v2492, %v2468
        %v3237 = vpack.c.b16 %v2493, %v2469
        %v3238 = vpack.c.b16 %v2494, %v2470
        %v3239 = vpack.c.b16 %v2495, %v2471
        %v3240 = vpack.c.b16 %v2496, %v2472
        %v3241 = vpack.c.b16 %v2497, %v2473
        %v3242 = vpack.c.b16 %v2498, %v2474
        %v3243 = vpack.c.b16 %v2499, %v2475
        %v3244 = vpack.c.b16 %v2500, %v2476
        %v3245 = vpack.c.b16 %v2501, %v2477
        %v3246 = vpack.c.b16 %v2502, %v2478
        %v3247 = vpack.c.b16 %v2503, %v2479
        %v3248 = vpack.c.b16 %v2504, %v2480
        %v3249 = vpack.c.b16 %v2505, %v2481
        %v3250 = vpack.c.b16 %v2530, %v2506
        %v3251 = vpack.c.b16 %v2531, %v2507
        %v3252 = vpack.c.b16 %v2532, %v2508
        %v3253 = vpack.c.b16 %v2533, %v2509
        %v3254 = vpack.c.b16 %v2534, %v2510
        %v3255 = vpack.c.b16 %v2535, %v2511
        %v3256 = vpack.c.b16 %v2536, %v2512
        %v3257 = vpack.c.b16 %v2537, %v2513
        %v3258 = vpack.c.b16 %v2538, %v2514
        %v3259 = vpack.c.b16 %v2539, %v2515
        %v3260 = vpack.c.b16 %v2540, %v2516
        %v3261 = vpack.c.b16 %v2541, %v2517
        %v3262 = vpack.c.b16 %v2542, %v2518
        %v3263 = vpack.c.b16 %v2543, %v2519
        %v3264 = vpack.c.b16 %v2544, %v2520
        %v3265 = vpack.c.b16 %v2545, %v2521
        %v3266 = vpack.c.b16 %v2546, %v2522
        %v3267 = vpack.c.b16 %v2547, %v2523
        %v3268 = vpack.c.b16 %v2548, %v2524
        %v3269 = vpack.c.b16 %v2549, %v2525
        %v3270 = vpack.c.b16 %v2550, %v2526
        %v3271 = vpack.c.b16 %v2551, %v2527
        %v3272 = vpack.c.b16 %v2552, %v2528
        %v3273 = vpack.c.b16 %v2553, %v2529
        %v3274 = vpack.c.b16 %v2578, %v2554
        %v3275 = vpack.c.b16 %v2579, %v2555
        %v3276 = vpack.c.b16 %v2580, %v2556
        %v3277 = vpack.c.b16 %v2581, %v2557
        %v3278 = vpack.c.b16 %v2582, %v2558
        %v3279 = vpack.c.b16 %v2583, %v2559
        %v3280 = vpack.c.b16 %v2584, %v2560
        %v3281 = vpack.c.b16 %v2585, %v2561
        %v3282 = vpack.c.b16 %v2586, %v2562
        %v3283 = vpack.c.b16 %v2587, %v2563
        %v3284 = vpack.c.b16 %v2588, %v2564
        %v3285 = vpack.c.b16 %v2589, %v2565
        %v3286 = vpack.c.b16 %v2590, %v2566
        %v3287 = vpack.c.b16 %v2591, %v2567
        %v3288 = vpack.c.b16 %v2592, %v2568
        %v3289 = vpack.c.b16 %v2593, %v2569
        %v3290 = vpack.c.b16 %v2594, %v2570
        %v3291 = vpack.c.b16 %v2595, %v2571
        %v3292 = vpack.c.b16 %v2596, %v2572
        %v3293 = vpack.c.b16 %v2597, %v2573
        %v3294 = vpack.c.b16 %v2598, %v2574
        %v3295 = vpack.c.b16 %v2599, %v2575
        %v3296 = vpack.c.b16 %v2600, %v2576
        %v3297 = vpack.c.b16 %v2601, %v2577
        %v3298 = vpack.c.b16 %v2626, %v2602
        %v3299 = vpack.c.b16 %v2627, %v2603
        %v3300 = vpack.c.b16 %v2628, %v2604
        %v3301 = vpack.c.b16 %v2629, %v2605
        %v3302 = vpack.c.b16 %v2630, %v2606
        %v3303 = vpack.c.b16 %v2631, %v2607
        %v3304 = vpack.c.b16 %v2632, %v2608
        %v3305 = vpack.c.b16 %v2633, %v2609
        %v3306 = vpack.c.b16 %v2634, %v2610
        %v3307 = vpack.c.b16 %v2635, %v2611
        %v3308 = vpack.c.b16 %v2636, %v2612
        %v3309 = vpack.c.b16 %v2637, %v2613
        %v3310 = vpack.c.b16 %v2638, %v2614
        %v3311 = vpack.c.b16 %v2639, %v2615
        %v3312 = vpack.c.b16 %v2640, %v2616
        %v3313 = vpack.c.b16 %v2641, %v2617
        %v3314 = vpack.c.b16 %v2642, %v2618
        %v3315 = vpack.c.b16 %v2643, %v2619
        %v3316 = vpack.c.b16 %v2644, %v2620
        %v3317 = vpack.c.b16 %v2645, %v2621
        %v3318 = vpack.c.b16 %v2646, %v2622
        %v3319 = vpack.c.b16 %v2647, %v2623
        %v3320 = vpack.c.b16 %v2648, %v2624
        %v3321 = vpack.c.b16 %v2649, %v2625
        %v3322 = vpack.c.b16 %v2674, %v2650
        %v3323 = vpack.c.b16 %v2675, %v2651
        %v3324 = vpack.c.b16 %v2676, %v2652
        %v3325 = vpack.c.b16 %v2677, %v2653
        %v3326 = vpack.c.b16 %v2678, %v2654
        %v3327 = vpack.c.b16 %v2679, %v2655
        %v3328 = vpack.c.b16 %v2680, %v2656
        %v3329 = vpack.c.b16 %v2681, %v2657
        %v3330 = vpack.c.b16 %v2682, %v2658
        %v3331 = vpack.c.b16 %v2683, %v2659
        %v3332 = vpack.c.b16 %v2684, %v2660
        %v3333 = vpack.c.b16 %v2685, %v2661
        %v3334 = vpack.c.b16 %v2686, %v2662
        %v3335 = vpack.c.b16 %v2687, %v2663
        %v3336 = vpack.c.b16 %v2688, %v2664
        %v3337 = vpack.c.b16 %v2689, %v2665
        %v3338 = vpack.c.b16 %v2690, %v2666
        %v3339 = vpack.c.b16 %v2691, %v2667
        %v3340 = vpack.c.b16 %v2692, %v2668
        %v3341 = vpack.c.b16 %v2693, %v2669
        %v3342 = vpack.c.b16 %v2694, %v2670
        %v3343 = vpack.c.b16 %v2695, %v2671
        %v3344 = vpack.c.b16 %v2696, %v2672
        %v3345 = vpack.c.b16 %v2697, %v2673
        %v3346 = vpack.c.b16 %v2722, %v2698
        %v3347 = vpack.c.b16 %v2723, %v2699
        %v3348 = vpack.c.b16 %v2724, %v2700
        %v3349 = vpack.c.b16 %v2725, %v2701
        %v3350 = vpack.c.b16 %v2726, %v2702
        %v3351 = vpack.c.b16 %v2727, %v2703
        %v3352 = vpack.c.b16 %v2728, %v2704
        %v3353 = vpack.c.b16 %v2729, %v2705
        %v3354 = vpack.c.b16 %v2730, %v2706
        %v3355 = vpack.c.b16 %v2731, %v2707
        %v3356 = vpack.c.b16 %v2732, %v2708
        %v3357 = vpack.c.b16 %v2733, %v2709
        %v3358 = vpack.c.b16 %v2734, %v2710
        %v3359 = vpack.c.b16 %v2735, %v2711
        %v3360 = vpack.c.b16 %v2736, %v2712
        %v3361 = vpack.c.b16 %v2737, %v2713
        %v3362 = vpack.c.b16 %v2738, %v2714
        %v3363 = vpack.c.b16 %v2739, %v2715
        %v3364 = vpack.c.b16 %v2740, %v2716
        %v3365 = vpack.c.b16 %v2741, %v2717
        %v3366 = vpack.c.b16 %v2742, %v2718
        %v3367 = vpack.c.b16 %v2743, %v2719
        %v3368 = vpack.c.b16 %v2744, %v2720
        %v3369 = vpack.c.b16 %v2745, %v2721
        %v3370 = vpack.c.b16 %v2770, %v2746
        %v3371 = vpack.c.b16 %v2771, %v2747
        %v3372 = vpack.c.b16 %v2772, %v2748
        %v3373 = vpack.c.b16 %v2773, %v2749
        %v3374 = vpack.c.b16 %v2774, %v2750
        %v3375 = vpack.c.b16 %v2775, %v2751
        %v3376 = vpack.c.b16 %v2776, %v2752
        %v3377 = vpack.c.b16 %v2777, %v2753
        %v3378 = vpack.c.b16 %v2778, %v2754
        %v3379 = vpack.c.b16 %v2779, %v2755
        %v3380 = vpack.c.b16 %v2780, %v2756
        %v3381 = vpack.c.b16 %v2781, %v2757
        %v3382 = vpack.c.b16 %v2782, %v2758
        %v3383 = vpack.c.b16 %v2783, %v2759
        %v3384 = vpack.c.b16 %v2784, %v2760
        %v3385 = vpack.c.b16 %v2785, %v2761
        %v3386 = vpack.c.b16 %v2786, %v2762
        %v3387 = vpack.c.b16 %v2787, %v2763
        %v3388 = vpack.c.b16 %v2788, %v2764
        %v3389 = vpack.c.b16 %v2789, %v2765
        %v3390 = vpack.c.b16 %v2790, %v2766
        %v3391 = vpack.c.b16 %v2791, %v2767
        %v3392 = vpack.c.b16 %v2792, %v2768
        %v3393 = vpack.c.b16 %v2793, %v2769
        %vm3994 = vcmask 130048
        %v3996 = vsel %vm3994, %v267, 0
        %3998 = vmatprep.subr.bf16.mxu0 %v2795
        %3999 = vmatpush1.bf16.msra.mxu0 %v2794
        %4000 = vmatprep.subr.bf16.mxu0 %v2819
        %4001 = vmatpush1.bf16.msra.mxu0 %v2818
        %4002 = vmatprep.subr.bf16.mxu0 %v2843
        %4003 = vmatpush1.bf16.msra.mxu0 %v2842
        %4004 = vmatprep.subr.bf16.mxu0 %v2867
        %4005 = vmatpush1.bf16.msra.mxu0 %v2866
        %4006 = vmatprep.subr.bf16.mxu0 %v2891
        %4007 = vmatpush1.bf16.msra.mxu0 %v2890
        %4008 = vmatprep.subr.bf16.mxu0 %v2915
        %4009 = vmatpush1.bf16.msra.mxu0 %v2914
        %4010 = vmatprep.subr.bf16.mxu0 %v2939
        %4011 = vmatpush1.bf16.msra.mxu0 %v2938
        %4012 = vmatprep.subr.bf16.mxu0 %v2963
        %4013 = vmatpush1.bf16.msra.mxu0 %v2962
        %4014 = vmatprep.subr.bf16.mxu0 %v2987
        %4015 = vmatpush1.bf16.msra.mxu0 %v2986
        %4016 = vmatprep.subr.bf16.mxu0 %v3011
        %4017 = vmatpush1.bf16.msra.mxu0 %v3010
        %4018 = vmatprep.subr.bf16.mxu0 %v3035
        %4019 = vmatpush1.bf16.msra.mxu0 %v3034
        %4020 = vmatprep.subr.bf16.mxu0 %v3059
        %4021 = vmatpush1.bf16.msra.mxu0 %v3058
        %4022 = vmatprep.subr.bf16.mxu0 %v3083
        %4023 = vmatpush1.bf16.msra.mxu0 %v3082
        %4024 = vmatprep.subr.bf16.mxu0 %v3107
        %4025 = vmatpush1.bf16.msra.mxu0 %v3106
        %4026 = vmatprep.subr.bf16.mxu0 %v3131
        %4027 = vmatpush1.bf16.msra.mxu0 %v3130
        %4028 = vmatprep.subr.bf16.mxu0 %v3155
        %4029 = vmatpush1.bf16.msra.mxu0 %v3154
        %4030 = vmatprep.mubr.bf16.mxu0 %v265
        %4031 = vmatmul.mubr.bf16.gmra.mrb[0].mxu0 %v264
        %v4032 = vpop.f32.mrb[0].mxu0
        %v4033 = vadd.f32 %v877, %v4032
        %v4034 = vpop.f32.mrb[0].mxu0
        %v4035 = vadd.f32 %v881, %v4034
        %v4036 = vpop.f32.mrb[0].mxu0
        %v4037 = vpop.f32.mrb[0].mxu0
        %4038 = vdwg.mxu0
        %4039 = vmatprep.subr.bf16.mxu0 %v3179
        %4040 = vmatpush1.bf16.msra.mxu0 %v3178
        %4041 = vmatprep.subr.bf16.mxu0 %v3203
        %4042 = vmatpush1.bf16.msra.mxu0 %v3202
        %4043 = vmatprep.subr.bf16.mxu0 %v3227
        %4044 = vmatpush1.bf16.msra.mxu0 %v3226
        %4045 = vmatprep.subr.bf16.mxu0 %v3251
        %4046 = vmatpush1.bf16.msra.mxu0 %v3250
        %4047 = vmatprep.subr.bf16.mxu0 %v3275
        %4048 = vmatpush1.bf16.msra.mxu0 %v3274
        %4049 = vmatprep.subr.bf16.mxu0 %v3299
        %4050 = vmatpush1.bf16.msra.mxu0 %v3298
        %4051 = vmatprep.subr.bf16.mxu0 %v3323
        %4052 = vmatpush1.bf16.msra.mxu0 %v3322
        %4053 = vmatprep.subr.bf16.mxu0 %v3347
        %4054 = vmatpush1.bf16.msra.mxu0 %v3346
        %4055 = vmatprep.subr.bf16.mxu0 %v3371
        %4056 = vmatpush1.bf16.msra.mxu0 %v3370
        %4057 = vmatprep.subr.bf16.mxu0 0
        %4058 = vmatpush1.bf16.msra.mxu0 0
        %4059 = vmatprep.subr.bf16.mxu0 0
        %4060 = vmatpush1.bf16.msra.mxu0 0
        %4061 = vmatprep.subr.bf16.mxu0 0
        %4062 = vmatpush1.bf16.msra.mxu0 0
        %4063 = vmatprep.subr.bf16.mxu0 0
        %4064 = vmatpush1.bf16.msra.mxu0 0
        %4065 = vmatprep.subr.bf16.mxu0 0
        %4066 = vmatpush1.bf16.msra.mxu0 0
        %4067 = vmatprep.subr.bf16.mxu0 0
        %4068 = vmatpush1.bf16.msra.mxu0 0
        %4069 = vmatprep.subr.bf16.mxu0 0
        %4070 = vmatpush1.bf16.msra.mxu0 0
        %4071 = vmatprep.mubr.bf16.mxu0 %v3996
        %4072 = vmatmul.mubr.bf16.gmra.mrb[0].mxu0 %v266
        %v4073 = vpop.f32.mrb[0].mxu0
        %v4074 = vadd.f32 %v4033, %v4073
        %v4075 = vpop.f32.mrb[0].mxu0
        %v4076 = vadd.f32 %v4035, %v4075
        %v4077 = vpop.f32.mrb[0].mxu0
        %v4078 = vpop.f32.mrb[0].mxu0
        %4079 = vdwg.mxu0
        %4080 = vmatprep.subr.bf16.mxu0 %v2797
        %4081 = vmatpush1.bf16.msra.mxu0 %v2796
        %4082 = vmatprep.subr.bf16.mxu0 %v2821
        %4083 = vmatpush1.bf16.msra.mxu0 %v2820
        %4084 = vmatprep.subr.bf16.mxu0 %v2845
        %4085 = vmatpush1.bf16.msra.mxu0 %v2844
        %4086 = vmatprep.subr.bf16.mxu0 %v2869
        %4087 = vmatpush1.bf16.msra.mxu0 %v2868
        %4088 = vmatprep.subr.bf16.mxu0 %v2893
        %4089 = vmatpush1.bf16.msra.mxu0 %v2892
        %4090 = vmatprep.subr.bf16.mxu0 %v2917
        %4091 = vmatpush1.bf16.msra.mxu0 %v2916
        %4092 = vmatprep.subr.bf16.mxu0 %v2941
        %4093 = vmatpush1.bf16.msra.mxu0 %v2940
        %4094 = vmatprep.subr.bf16.mxu0 %v2965
        %4095 = vmatpush1.bf16.msra.mxu0 %v2964
        %4096 = vmatprep.subr.bf16.mxu0 %v2989
        %4097 = vmatpush1.bf16.msra.mxu0 %v2988
        %4098 = vmatprep.subr.bf16.mxu0 %v3013
        %4099 = vmatpush1.bf16.msra.mxu0 %v3012
        %4100 = vmatprep.subr.bf16.mxu0 %v3037
        %4101 = vmatpush1.bf16.msra.mxu0 %v3036
        %4102 = vmatprep.subr.bf16.mxu0 %v3061
        %4103 = vmatpush1.bf16.msra.mxu0 %v3060
        %4104 = vmatprep.subr.bf16.mxu0 %v3085
        %4105 = vmatpush1.bf16.msra.mxu0 %v3084
        %4106 = vmatprep.subr.bf16.mxu0 %v3109
        %4107 = vmatpush1.bf16.msra.mxu0 %v3108
        %4108 = vmatprep.subr.bf16.mxu0 %v3133
        %4109 = vmatpush1.bf16.msra.mxu0 %v3132
        %4110 = vmatprep.subr.bf16.mxu0 %v3157
        %4111 = vmatpush1.bf16.msra.mxu0 %v3156
        %4112 = vmatprep.mubr.bf16.mxu0 %v265
        %4113 = vmatmul.mubr.bf16.gmra.mrb[0].mxu0 %v264
        %v4114 = vpop.f32.mrb[0].mxu0
        %v4115 = vadd.f32 %v885, %v4114
        %v4116 = vpop.f32.mrb[0].mxu0
        %v4117 = vadd.f32 %v889, %v4116
        %v4118 = vpop.f32.mrb[0].mxu0
        %v4119 = vpop.f32.mrb[0].mxu0
        %4120 = vdwg.mxu0
        %4121 = vmatprep.subr.bf16.mxu0 %v3181
        %4122 = vmatpush1.bf16.msra.mxu0 %v3180
        %4123 = vmatprep.subr.bf16.mxu0 %v3205
        %4124 = vmatpush1.bf16.msra.mxu0 %v3204
        %4125 = vmatprep.subr.bf16.mxu0 %v3229
        %4126 = vmatpush1.bf16.msra.mxu0 %v3228
        %4127 = vmatprep.subr.bf16.mxu0 %v3253
        %4128 = vmatpush1.bf16.msra.mxu0 %v3252
        %4129 = vmatprep.subr.bf16.mxu0 %v3277
        %4130 = vmatpush1.bf16.msra.mxu0 %v3276
        %4131 = vmatprep.subr.bf16.mxu0 %v3301
        %4132 = vmatpush1.bf16.msra.mxu0 %v3300
        %4133 = vmatprep.subr.bf16.mxu0 %v3325
        %4134 = vmatpush1.bf16.msra.mxu0 %v3324
        %4135 = vmatprep.subr.bf16.mxu0 %v3349
        %4136 = vmatpush1.bf16.msra.mxu0 %v3348
        %4137 = vmatprep.subr.bf16.mxu0 %v3373
        %4138 = vmatpush1.bf16.msra.mxu0 %v3372
        %4139 = vmatprep.subr.bf16.mxu0 0
        %4140 = vmatpush1.bf16.msra.mxu0 0
        %4141 = vmatprep.subr.bf16.mxu0 0
        %4142 = vmatpush1.bf16.msra.mxu0 0
        %4143 = vmatprep.subr.bf16.mxu0 0
        %4144 = vmatpush1.bf16.msra.mxu0 0
        %4145 = vmatprep.subr.bf16.mxu0 0
        %4146 = vmatpush1.bf16.msra.mxu0 0
        %4147 = vmatprep.subr.bf16.mxu0 0
        %4148 = vmatpush1.bf16.msra.mxu0 0
        %4149 = vmatprep.subr.bf16.mxu0 0
        %4150 = vmatpush1.bf16.msra.mxu0 0
        %4151 = vmatprep.subr.bf16.mxu0 0
        %4152 = vmatpush1.bf16.msra.mxu0 0
        %4153 = vmatprep.mubr.bf16.mxu0 %v3996
        %4154 = vmatmul.mubr.bf16.gmra.mrb[0].mxu0 %v266
        %v4155 = vpop.f32.mrb[0].mxu0
        %v4156 = vadd.f32 %v4115, %v4155
        %v4157 = vpop.f32.mrb[0].mxu0
        %v4158 = vadd.f32 %v4117, %v4157
        %v4159 = vpop.f32.mrb[0].mxu0
        %v4160 = vpop.f32.mrb[0].mxu0
        %4161 = vdwg.mxu0
        %4162 = vmatprep.subr.bf16.mxu0 %v2799
        %4163 = vmatpush1.bf16.msra.mxu0 %v2798
        %4164 = vmatprep.subr.bf16.mxu0 %v2823
        %4165 = vmatpush1.bf16.msra.mxu0 %v2822
        %4166 = vmatprep.subr.bf16.mxu0 %v2847
        %4167 = vmatpush1.bf16.msra.mxu0 %v2846
        %4168 = vmatprep.subr.bf16.mxu0 %v2871
        %4169 = vmatpush1.bf16.msra.mxu0 %v2870
        %4170 = vmatprep.subr.bf16.mxu0 %v2895
        %4171 = vmatpush1.bf16.msra.mxu0 %v2894
        %4172 = vmatprep.subr.bf16.mxu0 %v2919
        %4173 = vmatpush1.bf16.msra.mxu0 %v2918
        %4174 = vmatprep.subr.bf16.mxu0 %v2943
        %4175 = vmatpush1.bf16.msra.mxu0 %v2942
        %4176 = vmatprep.subr.bf16.mxu0 %v2967
        %4177 = vmatpush1.bf16.msra.mxu0 %v2966
        %4178 = vmatprep.subr.bf16.mxu0 %v2991
        %4179 = vmatpush1.bf16.msra.mxu0 %v2990
        %4180 = vmatprep.subr.bf16.mxu0 %v3015
        %4181 = vmatpush1.bf16.msra.mxu0 %v3014
        %4182 = vmatprep.subr.bf16.mxu0 %v3039
        %4183 = vmatpush1.bf16.msra.mxu0 %v3038
        %4184 = vmatprep.subr.bf16.mxu0 %v3063
        %4185 = vmatpush1.bf16.msra.mxu0 %v3062
        %4186 = vmatprep.subr.bf16.mxu0 %v3087
        %4187 = vmatpush1.bf16.msra.mxu0 %v3086
        %4188 = vmatprep.subr.bf16.mxu0 %v3111
        %4189 = vmatpush1.bf16.msra.mxu0 %v3110
        %4190 = vmatprep.subr.bf16.mxu0 %v3135
        %4191 = vmatpush1.bf16.msra.mxu0 %v3134
        %4192 = vmatprep.subr.bf16.mxu0 %v3159
        %4193 = vmatpush1.bf16.msra.mxu0 %v3158
        %4194 = vmatprep.mubr.bf16.mxu0 %v265
        %4195 = vmatmul.mubr.bf16.gmra.mrb[0].mxu0 %v264
        %v4196 = vpop.f32.mrb[0].mxu0
        %v4197 = vadd.f32 %v893, %v4196
        %v4198 = vpop.f32.mrb[0].mxu0
        %v4199 = vadd.f32 %v897, %v4198
        %v4200 = vpop.f32.mrb[0].mxu0
        %v4201 = vpop.f32.mrb[0].mxu0
        %4202 = vdwg.mxu0
        %4203 = vmatprep.subr.bf16.mxu0 %v3183
        %4204 = vmatpush1.bf16.msra.mxu0 %v3182
        %4205 = vmatprep.subr.bf16.mxu0 %v3207
        %4206 = vmatpush1.bf16.msra.mxu0 %v3206
        %4207 = vmatprep.subr.bf16.mxu0 %v3231
        %4208 = vmatpush1.bf16.msra.mxu0 %v3230
        %4209 = vmatprep.subr.bf16.mxu0 %v3255
        %4210 = vmatpush1.bf16.msra.mxu0 %v3254
        %4211 = vmatprep.subr.bf16.mxu0 %v3279
        %4212 = vmatpush1.bf16.msra.mxu0 %v3278
        %4213 = vmatprep.subr.bf16.mxu0 %v3303
        %4214 = vmatpush1.bf16.msra.mxu0 %v3302
        %4215 = vmatprep.subr.bf16.mxu0 %v3327
        %4216 = vmatpush1.bf16.msra.mxu0 %v3326
        %4217 = vmatprep.subr.bf16.mxu0 %v3351
        %4218 = vmatpush1.bf16.msra.mxu0 %v3350
        %4219 = vmatprep.subr.bf16.mxu0 %v3375
        %4220 = vmatpush1.bf16.msra.mxu0 %v3374
        %4221 = vmatprep.subr.bf16.mxu0 0
        %4222 = vmatpush1.bf16.msra.mxu0 0
        %4223 = vmatprep.subr.bf16.mxu0 0
        %4224 = vmatpush1.bf16.msra.mxu0 0
        %4225 = vmatprep.subr.bf16.mxu0 0
        %4226 = vmatpush1.bf16.msra.mxu0 0
        %4227 = vmatprep.subr.bf16.mxu0 0
        %4228 = vmatpush1.bf16.msra.mxu0 0
        %4229 = vmatprep.subr.bf16.mxu0 0
        %4230 = vmatpush1.bf16.msra.mxu0 0
        %4231 = vmatprep.subr.bf16.mxu0 0
        %4232 = vmatpush1.bf16.msra.mxu0 0
        %4233 = vmatprep.subr.bf16.mxu0 0
        %4234 = vmatpush1.bf16.msra.mxu0 0
        %4235 = vmatprep.mubr.bf16.mxu0 %v3996
        %4236 = vmatmul.mubr.bf16.gmra.mrb[0].mxu0 %v266
        %v4237 = vpop.f32.mrb[0].mxu0
        %v4238 = vadd.f32 %v4197, %v4237
        %v4239 = vpop.f32.mrb[0].mxu0
        %v4240 = vadd.f32 %v4199, %v4239
        %v4241 = vpop.f32.mrb[0].mxu0
        %v4242 = vpop.f32.mrb[0].mxu0
        %4243 = vdwg.mxu0
        %4244 = vmatprep.subr.bf16.mxu0 %v2801
        %4245 = vmatpush1.bf16.msra.mxu0 %v2800
        %4246 = vmatprep.subr.bf16.mxu0 %v2825
        %4247 = vmatpush1.bf16.msra.mxu0 %v2824
        %4248 = vmatprep.subr.bf16.mxu0 %v2849
        %4249 = vmatpush1.bf16.msra.mxu0 %v2848
        %4250 = vmatprep.subr.bf16.mxu0 %v2873
        %4251 = vmatpush1.bf16.msra.mxu0 %v2872
        %4252 = vmatprep.subr.bf16.mxu0 %v2897
        %4253 = vmatpush1.bf16.msra.mxu0 %v2896
        %4254 = vmatprep.subr.bf16.mxu0 %v2921
        %4255 = vmatpush1.bf16.msra.mxu0 %v2920
        %4256 = vmatprep.subr.bf16.mxu0 %v2945
        %4257 = vmatpush1.bf16.msra.mxu0 %v2944
        %4258 = vmatprep.subr.bf16.mxu0 %v2969
        %4259 = vmatpush1.bf16.msra.mxu0 %v2968
        %4260 = vmatprep.subr.bf16.mxu0 %v2993
        %4261 = vmatpush1.bf16.msra.mxu0 %v2992
        %4262 = vmatprep.subr.bf16.mxu0 %v3017
        %4263 = vmatpush1.bf16.msra.mxu0 %v3016
        %4264 = vmatprep.subr.bf16.mxu0 %v3041
        %4265 = vmatpush1.bf16.msra.mxu0 %v3040
        %4266 = vmatprep.subr.bf16.mxu0 %v3065
        %4267 = vmatpush1.bf16.msra.mxu0 %v3064
        %4268 = vmatprep.subr.bf16.mxu0 %v3089
        %4269 = vmatpush1.bf16.msra.mxu0 %v3088
        %4270 = vmatprep.subr.bf16.mxu0 %v3113
        %4271 = vmatpush1.bf16.msra.mxu0 %v3112
        %4272 = vmatprep.subr.bf16.mxu0 %v3137
        %4273 = vmatpush1.bf16.msra.mxu0 %v3136
        %4274 = vmatprep.subr.bf16.mxu0 %v3161
        %4275 = vmatpush1.bf16.msra.mxu0 %v3160
        %4276 = vmatprep.mubr.bf16.mxu0 %v265
        %4277 = vmatmul.mubr.bf16.gmra.mrb[0].mxu0 %v264
        %v4278 = vpop.f32.mrb[0].mxu0
        %v4279 = vadd.f32 %v901, %v4278
        %v4280 = vpop.f32.mrb[0].mxu0
        %v4281 = vadd.f32 %v905, %v4280
        %v4282 = vpop.f32.mrb[0].mxu0
        %v4283 = vpop.f32.mrb[0].mxu0
        %4284 = vdwg.mxu0
        %4285 = vmatprep.subr.bf16.mxu0 %v3185
        %4286 = vmatpush1.bf16.msra.mxu0 %v3184
        %4287 = vmatprep.subr.bf16.mxu0 %v3209
        %4288 = vmatpush1.bf16.msra.mxu0 %v3208
        %4289 = vmatprep.subr.bf16.mxu0 %v3233
        %4290 = vmatpush1.bf16.msra.mxu0 %v3232
        %4291 = vmatprep.subr.bf16.mxu0 %v3257
        %4292 = vmatpush1.bf16.msra.mxu0 %v3256
        %4293 = vmatprep.subr.bf16.mxu0 %v3281
        %4294 = vmatpush1.bf16.msra.mxu0 %v3280
        %4295 = vmatprep.subr.bf16.mxu0 %v3305
        %4296 = vmatpush1.bf16.msra.mxu0 %v3304
        %4297 = vmatprep.subr.bf16.mxu0 %v3329
        %4298 = vmatpush1.bf16.msra.mxu0 %v3328
        %4299 = vmatprep.subr.bf16.mxu0 %v3353
        %4300 = vmatpush1.bf16.msra.mxu0 %v3352
        %4301 = vmatprep.subr.bf16.mxu0 %v3377
        %4302 = vmatpush1.bf16.msra.mxu0 %v3376
        %4303 = vmatprep.subr.bf16.mxu0 0
        %4304 = vmatpush1.bf16.msra.mxu0 0
        %4305 = vmatprep.subr.bf16.mxu0 0
        %4306 = vmatpush1.bf16.msra.mxu0 0
        %4307 = vmatprep.subr.bf16.mxu0 0
        %4308 = vmatpush1.bf16.msra.mxu0 0
        %4309 = vmatprep.subr.bf16.mxu0 0
        %4310 = vmatpush1.bf16.msra.mxu0 0
        %4311 = vmatprep.subr.bf16.mxu0 0
        %4312 = vmatpush1.bf16.msra.mxu0 0
        %4313 = vmatprep.subr.bf16.mxu0 0
        %4314 = vmatpush1.bf16.msra.mxu0 0
        %4315 = vmatprep.subr.bf16.mxu0 0
        %4316 = vmatpush1.bf16.msra.mxu0 0
        %4317 = vmatprep.mubr.bf16.mxu0 %v3996
        %4318 = vmatmul.mubr.bf16.gmra.mrb[0].mxu0 %v266
        %v4319 = vpop.f32.mrb[0].mxu0
        %v4320 = vadd.f32 %v4279, %v4319
        %v4321 = vpop.f32.mrb[0].mxu0
        %v4322 = vadd.f32 %v4281, %v4321
        %v4323 = vpop.f32.mrb[0].mxu0
        %v4324 = vpop.f32.mrb[0].mxu0
        %4325 = vdwg.mxu0
        %4326 = vmatprep.subr.bf16.mxu0 %v2803
        %4327 = vmatpush1.bf16.msra.mxu0 %v2802
        %4328 = vmatprep.subr.bf16.mxu0 %v2827
        %4329 = vmatpush1.bf16.msra.mxu0 %v2826
        %4330 = vmatprep.subr.bf16.mxu0 %v2851
        %4331 = vmatpush1.bf16.msra.mxu0 %v2850
        %4332 = vmatprep.subr.bf16.mxu0 %v2875
        %4333 = vmatpush1.bf16.msra.mxu0 %v2874
        %4334 = vmatprep.subr.bf16.mxu0 %v2899
        %4335 = vmatpush1.bf16.msra.mxu0 %v2898
        %4336 = vmatprep.subr.bf16.mxu0 %v2923
        %4337 = vmatpush1.bf16.msra.mxu0 %v2922
        %4338 = vmatprep.subr.bf16.mxu0 %v2947
        %4339 = vmatpush1.bf16.msra.mxu0 %v2946
        %4340 = vmatprep.subr.bf16.mxu0 %v2971
        %4341 = vmatpush1.bf16.msra.mxu0 %v2970
        %4342 = vmatprep.subr.bf16.mxu0 %v2995
        %4343 = vmatpush1.bf16.msra.mxu0 %v2994
        %4344 = vmatprep.subr.bf16.mxu0 %v3019
        %4345 = vmatpush1.bf16.msra.mxu0 %v3018
        %4346 = vmatprep.subr.bf16.mxu0 %v3043
        %4347 = vmatpush1.bf16.msra.mxu0 %v3042
        %4348 = vmatprep.subr.bf16.mxu0 %v3067
        %4349 = vmatpush1.bf16.msra.mxu0 %v3066
        %4350 = vmatprep.subr.bf16.mxu0 %v3091
        %4351 = vmatpush1.bf16.msra.mxu0 %v3090
        %4352 = vmatprep.subr.bf16.mxu0 %v3115
        %4353 = vmatpush1.bf16.msra.mxu0 %v3114
        %4354 = vmatprep.subr.bf16.mxu0 %v3139
        %4355 = vmatpush1.bf16.msra.mxu0 %v3138
        %4356 = vmatprep.subr.bf16.mxu0 %v3163
        %4357 = vmatpush1.bf16.msra.mxu0 %v3162
        %4358 = vmatprep.mubr.bf16.mxu0 %v265
        %4359 = vmatmul.mubr.bf16.gmra.mrb[0].mxu0 %v264
        %v4360 = vpop.f32.mrb[0].mxu0
        %v4361 = vadd.f32 %v909, %v4360
        %v4362 = vpop.f32.mrb[0].mxu0
        %v4363 = vadd.f32 %v913, %v4362
        %v4364 = vpop.f32.mrb[0].mxu0
        %v4365 = vpop.f32.mrb[0].mxu0
        %4366 = vdwg.mxu0
        %4367 = vmatprep.subr.bf16.mxu0 %v3187
        %4368 = vmatpush1.bf16.msra.mxu0 %v3186
        %4369 = vmatprep.subr.bf16.mxu0 %v3211
        %4370 = vmatpush1.bf16.msra.mxu0 %v3210
        %4371 = vmatprep.subr.bf16.mxu0 %v3235
        %4372 = vmatpush1.bf16.msra.mxu0 %v3234
        %4373 = vmatprep.subr.bf16.mxu0 %v3259
        %4374 = vmatpush1.bf16.msra.mxu0 %v3258
        %4375 = vmatprep.subr.bf16.mxu0 %v3283
        %4376 = vmatpush1.bf16.msra.mxu0 %v3282
        %4377 = vmatprep.subr.bf16.mxu0 %v3307
        %4378 = vmatpush1.bf16.msra.mxu0 %v3306
        %4379 = vmatprep.subr.bf16.mxu0 %v3331
        %4380 = vmatpush1.bf16.msra.mxu0 %v3330
        %4381 = vmatprep.subr.bf16.mxu0 %v3355
        %4382 = vmatpush1.bf16.msra.mxu0 %v3354
        %4383 = vmatprep.subr.bf16.mxu0 %v3379
        %4384 = vmatpush1.bf16.msra.mxu0 %v3378
        %4385 = vmatprep.subr.bf16.mxu0 0
        %4386 = vmatpush1.bf16.msra.mxu0 0
        %4387 = vmatprep.subr.bf16.mxu0 0
        %4388 = vmatpush1.bf16.msra.mxu0 0
        %4389 = vmatprep.subr.bf16.mxu0 0
        %4390 = vmatpush1.bf16.msra.mxu0 0
        %4391 = vmatprep.subr.bf16.mxu0 0
        %4392 = vmatpush1.bf16.msra.mxu0 0
        %4393 = vmatprep.subr.bf16.mxu0 0
        %4394 = vmatpush1.bf16.msra.mxu0 0
        %4395 = vmatprep.subr.bf16.mxu0 0
        %4396 = vmatpush1.bf16.msra.mxu0 0
        %4397 = vmatprep.subr.bf16.mxu0 0
        %4398 = vmatpush1.bf16.msra.mxu0 0
        %4399 = vmatprep.mubr.bf16.mxu0 %v3996
        %4400 = vmatmul.mubr.bf16.gmra.mrb[0].mxu0 %v266
        %v4401 = vpop.f32.mrb[0].mxu0
        %v4402 = vadd.f32 %v4361, %v4401
        %v4403 = vpop.f32.mrb[0].mxu0
        %v4404 = vadd.f32 %v4363, %v4403
        %v4405 = vpop.f32.mrb[0].mxu0
        %v4406 = vpop.f32.mrb[0].mxu0
        %4407 = vdwg.mxu0
        %4408 = vmatprep.subr.bf16.mxu0 %v2805
        %4409 = vmatpush1.bf16.msra.mxu0 %v2804
        %4410 = vmatprep.subr.bf16.mxu0 %v2829
        %4411 = vmatpush1.bf16.msra.mxu0 %v2828
        %4412 = vmatprep.subr.bf16.mxu0 %v2853
        %4413 = vmatpush1.bf16.msra.mxu0 %v2852
        %4414 = vmatprep.subr.bf16.mxu0 %v2877
        %4415 = vmatpush1.bf16.msra.mxu0 %v2876
        %4416 = vmatprep.subr.bf16.mxu0 %v2901
        %4417 = vmatpush1.bf16.msra.mxu0 %v2900
        %4418 = vmatprep.subr.bf16.mxu0 %v2925
        %4419 = vmatpush1.bf16.msra.mxu0 %v2924
        %4420 = vmatprep.subr.bf16.mxu0 %v2949
        %4421 = vmatpush1.bf16.msra.mxu0 %v2948
        %4422 = vmatprep.subr.bf16.mxu0 %v2973
        %4423 = vmatpush1.bf16.msra.mxu0 %v2972
        %4424 = vmatprep.subr.bf16.mxu0 %v2997
        %4425 = vmatpush1.bf16.msra.mxu0 %v2996
        %4426 = vmatprep.subr.bf16.mxu0 %v3021
        %4427 = vmatpush1.bf16.msra.mxu0 %v3020
        %4428 = vmatprep.subr.bf16.mxu0 %v3045
        %4429 = vmatpush1.bf16.msra.mxu0 %v3044
        %4430 = vmatprep.subr.bf16.mxu0 %v3069
        %4431 = vmatpush1.bf16.msra.mxu0 %v3068
        %4432 = vmatprep.subr.bf16.mxu0 %v3093
        %4433 = vmatpush1.bf16.msra.mxu0 %v3092
        %4434 = vmatprep.subr.bf16.mxu0 %v3117
        %4435 = vmatpush1.bf16.msra.mxu0 %v3116
        %4436 = vmatprep.subr.bf16.mxu0 %v3141
        %4437 = vmatpush1.bf16.msra.mxu0 %v3140
        %4438 = vmatprep.subr.bf16.mxu0 %v3165
        %4439 = vmatpush1.bf16.msra.mxu0 %v3164
        %4440 = vmatprep.mubr.bf16.mxu0 %v265
        %4441 = vmatmul.mubr.bf16.gmra.mrb[0].mxu0 %v264
        %v4442 = vpop.f32.mrb[0].mxu0
        %v4443 = vadd.f32 %v917, %v4442
        %v4444 = vpop.f32.mrb[0].mxu0
        %v4445 = vadd.f32 %v921, %v4444
        %v4446 = vpop.f32.mrb[0].mxu0
        %v4447 = vpop.f32.mrb[0].mxu0
        %4448 = vdwg.mxu0
        %4449 = vmatprep.subr.bf16.mxu0 %v3189
        %4450 = vmatpush1.bf16.msra.mxu0 %v3188
        %4451 = vmatprep.subr.bf16.mxu0 %v3213
        %4452 = vmatpush1.bf16.msra.mxu0 %v3212
        %4453 = vmatprep.subr.bf16.mxu0 %v3237
        %4454 = vmatpush1.bf16.msra.mxu0 %v3236
        %4455 = vmatprep.subr.bf16.mxu0 %v3261
        %4456 = vmatpush1.bf16.msra.mxu0 %v3260
        %4457 = vmatprep.subr.bf16.mxu0 %v3285
        %4458 = vmatpush1.bf16.msra.mxu0 %v3284
        %4459 = vmatprep.subr.bf16.mxu0 %v3309
        %4460 = vmatpush1.bf16.msra.mxu0 %v3308
        %4461 = vmatprep.subr.bf16.mxu0 %v3333
        %4462 = vmatpush1.bf16.msra.mxu0 %v3332
        %4463 = vmatprep.subr.bf16.mxu0 %v3357
        %4464 = vmatpush1.bf16.msra.mxu0 %v3356
        %4465 = vmatprep.subr.bf16.mxu0 %v3381
        %4466 = vmatpush1.bf16.msra.mxu0 %v3380
        %4467 = vmatprep.subr.bf16.mxu0 0
        %4468 = vmatpush1.bf16.msra.mxu0 0
        %4469 = vmatprep.subr.bf16.mxu0 0
        %4470 = vmatpush1.bf16.msra.mxu0 0
        %4471 = vmatprep.subr.bf16.mxu0 0
        %4472 = vmatpush1.bf16.msra.mxu0 0
        %4473 = vmatprep.subr.bf16.mxu0 0
        %4474 = vmatpush1.bf16.msra.mxu0 0
        %4475 = vmatprep.subr.bf16.mxu0 0
        %4476 = vmatpush1.bf16.msra.mxu0 0
        %4477 = vmatprep.subr.bf16.mxu0 0
        %4478 = vmatpush1.bf16.msra.mxu0 0
        %4479 = vmatprep.subr.bf16.mxu0 0
        %4480 = vmatpush1.bf16.msra.mxu0 0
        %4481 = vmatprep.mubr.bf16.mxu0 %v3996
        %4482 = vmatmul.mubr.bf16.gmra.mrb[0].mxu0 %v266
        %v4483 = vpop.f32.mrb[0].mxu0
        %v4484 = vadd.f32 %v4443, %v4483
        %v4485 = vpop.f32.mrb[0].mxu0
        %v4486 = vadd.f32 %v4445, %v4485
        %v4487 = vpop.f32.mrb[0].mxu0
        %v4488 = vpop.f32.mrb[0].mxu0
        %4489 = vdwg.mxu0
        %4490 = vmatprep.subr.bf16.mxu0 %v2807
        %4491 = vmatpush1.bf16.msra.mxu0 %v2806
        %4492 = vmatprep.subr.bf16.mxu0 %v2831
        %4493 = vmatpush1.bf16.msra.mxu0 %v2830
        %4494 = vmatprep.subr.bf16.mxu0 %v2855
        %4495 = vmatpush1.bf16.msra.mxu0 %v2854
        %4496 = vmatprep.subr.bf16.mxu0 %v2879
        %4497 = vmatpush1.bf16.msra.mxu0 %v2878
        %4498 = vmatprep.subr.bf16.mxu0 %v2903
        %4499 = vmatpush1.bf16.msra.mxu0 %v2902
        %4500 = vmatprep.subr.bf16.mxu0 %v2927
        %4501 = vmatpush1.bf16.msra.mxu0 %v2926
        %4502 = vmatprep.subr.bf16.mxu0 %v2951
        %4503 = vmatpush1.bf16.msra.mxu0 %v2950
        %4504 = vmatprep.subr.bf16.mxu0 %v2975
        %4505 = vmatpush1.bf16.msra.mxu0 %v2974
        %4506 = vmatprep.subr.bf16.mxu0 %v2999
        %4507 = vmatpush1.bf16.msra.mxu0 %v2998
        %4508 = vmatprep.subr.bf16.mxu0 %v3023
        %4509 = vmatpush1.bf16.msra.mxu0 %v3022
        %4510 = vmatprep.subr.bf16.mxu0 %v3047
        %4511 = vmatpush1.bf16.msra.mxu0 %v3046
        %4512 = vmatprep.subr.bf16.mxu0 %v3071
        %4513 = vmatpush1.bf16.msra.mxu0 %v3070
        %4514 = vmatprep.subr.bf16.mxu0 %v3095
        %4515 = vmatpush1.bf16.msra.mxu0 %v3094
        %4516 = vmatprep.subr.bf16.mxu0 %v3119
        %4517 = vmatpush1.bf16.msra.mxu0 %v3118
        %4518 = vmatprep.subr.bf16.mxu0 %v3143
        %4519 = vmatpush1.bf16.msra.mxu0 %v3142
        %4520 = vmatprep.subr.bf16.mxu0 %v3167
        %4521 = vmatpush1.bf16.msra.mxu0 %v3166
        %4522 = vmatprep.mubr.bf16.mxu0 %v265
        %4523 = vmatmul.mubr.bf16.gmra.mrb[0].mxu0 %v264
        %v4524 = vpop.f32.mrb[0].mxu0
        %v4525 = vadd.f32 %v925, %v4524
        %v4526 = vpop.f32.mrb[0].mxu0
        %v4527 = vadd.f32 %v929, %v4526
        %v4528 = vpop.f32.mrb[0].mxu0
        %v4529 = vpop.f32.mrb[0].mxu0
        %4530 = vdwg.mxu0
        %4531 = vmatprep.subr.bf16.mxu0 %v3191
        %4532 = vmatpush1.bf16.msra.mxu0 %v3190
        %4533 = vmatprep.subr.bf16.mxu0 %v3215
        %4534 = vmatpush1.bf16.msra.mxu0 %v3214
        %4535 = vmatprep.subr.bf16.mxu0 %v3239
        %4536 = vmatpush1.bf16.msra.mxu0 %v3238
        %4537 = vmatprep.subr.bf16.mxu0 %v3263
        %4538 = vmatpush1.bf16.msra.mxu0 %v3262
        %4539 = vmatprep.subr.bf16.mxu0 %v3287
        %4540 = vmatpush1.bf16.msra.mxu0 %v3286
        %4541 = vmatprep.subr.bf16.mxu0 %v3311
        %4542 = vmatpush1.bf16.msra.mxu0 %v3310
        %4543 = vmatprep.subr.bf16.mxu0 %v3335
        %4544 = vmatpush1.bf16.msra.mxu0 %v3334
        %4545 = vmatprep.subr.bf16.mxu0 %v3359
        %4546 = vmatpush1.bf16.msra.mxu0 %v3358
        %4547 = vmatprep.subr.bf16.mxu0 %v3383
        %4548 = vmatpush1.bf16.msra.mxu0 %v3382
        %4549 = vmatprep.subr.bf16.mxu0 0
        %4550 = vmatpush1.bf16.msra.mxu0 0
        %4551 = vmatprep.subr.bf16.mxu0 0
        %4552 = vmatpush1.bf16.msra.mxu0 0
        %4553 = vmatprep.subr.bf16.mxu0 0
        %4554 = vmatpush1.bf16.msra.mxu0 0
        %4555 = vmatprep.subr.bf16.mxu0 0
        %4556 = vmatpush1.bf16.msra.mxu0 0
        %4557 = vmatprep.subr.bf16.mxu0 0
        %4558 = vmatpush1.bf16.msra.mxu0 0
        %4559 = vmatprep.subr.bf16.mxu0 0
        %4560 = vmatpush1.bf16.msra.mxu0 0
        %4561 = vmatprep.subr.bf16.mxu0 0
        %4562 = vmatpush1.bf16.msra.mxu0 0
        %4563 = vmatprep.mubr.bf16.mxu0 %v3996
        %4564 = vmatmul.mubr.bf16.gmra.mrb[0].mxu0 %v266
        %v4565 = vpop.f32.mrb[0].mxu0
        %v4566 = vadd.f32 %v4525, %v4565
        %v4567 = vpop.f32.mrb[0].mxu0
        %v4568 = vadd.f32 %v4527, %v4567
        %v4569 = vpop.f32.mrb[0].mxu0
        %v4570 = vpop.f32.mrb[0].mxu0
        %4571 = vdwg.mxu0
        %4572 = vmatprep.subr.bf16.mxu0 %v2809
        %4573 = vmatpush1.bf16.msra.mxu0 %v2808
        %4574 = vmatprep.subr.bf16.mxu0 %v2833
        %4575 = vmatpush1.bf16.msra.mxu0 %v2832
        %4576 = vmatprep.subr.bf16.mxu0 %v2857
        %4577 = vmatpush1.bf16.msra.mxu0 %v2856
        %4578 = vmatprep.subr.bf16.mxu0 %v2881
        %4579 = vmatpush1.bf16.msra.mxu0 %v2880
        %4580 = vmatprep.subr.bf16.mxu0 %v2905
        %4581 = vmatpush1.bf16.msra.mxu0 %v2904
        %4582 = vmatprep.subr.bf16.mxu0 %v2929
        %4583 = vmatpush1.bf16.msra.mxu0 %v2928
        %4584 = vmatprep.subr.bf16.mxu0 %v2953
        %4585 = vmatpush1.bf16.msra.mxu0 %v2952
        %4586 = vmatprep.subr.bf16.mxu0 %v2977
        %4587 = vmatpush1.bf16.msra.mxu0 %v2976
        %4588 = vmatprep.subr.bf16.mxu0 %v3001
        %4589 = vmatpush1.bf16.msra.mxu0 %v3000
        %4590 = vmatprep.subr.bf16.mxu0 %v3025
        %4591 = vmatpush1.bf16.msra.mxu0 %v3024
        %4592 = vmatprep.subr.bf16.mxu0 %v3049
        %4593 = vmatpush1.bf16.msra.mxu0 %v3048
        %4594 = vmatprep.subr.bf16.mxu0 %v3073
        %4595 = vmatpush1.bf16.msra.mxu0 %v3072
        %4596 = vmatprep.subr.bf16.mxu0 %v3097
        %4597 = vmatpush1.bf16.msra.mxu0 %v3096
        %4598 = vmatprep.subr.bf16.mxu0 %v3121
        %4599 = vmatpush1.bf16.msra.mxu0 %v3120
        %4600 = vmatprep.subr.bf16.mxu0 %v3145
        %4601 = vmatpush1.bf16.msra.mxu0 %v3144
        %4602 = vmatprep.subr.bf16.mxu0 %v3169
        %4603 = vmatpush1.bf16.msra.mxu0 %v3168
        %4604 = vmatprep.mubr.bf16.mxu0 %v265
        %4605 = vmatmul.mubr.bf16.gmra.mrb[0].mxu0 %v264
        %v4606 = vpop.f32.mrb[0].mxu0
        %v4607 = vadd.f32 %v933, %v4606
        %v4608 = vpop.f32.mrb[0].mxu0
        %v4609 = vadd.f32 %v937, %v4608
        %v4610 = vpop.f32.mrb[0].mxu0
        %v4611 = vpop.f32.mrb[0].mxu0
        %4612 = vdwg.mxu0
        %4613 = vmatprep.subr.bf16.mxu0 %v3193
        %4614 = vmatpush1.bf16.msra.mxu0 %v3192
        %4615 = vmatprep.subr.bf16.mxu0 %v3217
        %4616 = vmatpush1.bf16.msra.mxu0 %v3216
        %4617 = vmatprep.subr.bf16.mxu0 %v3241
        %4618 = vmatpush1.bf16.msra.mxu0 %v3240
        %4619 = vmatprep.subr.bf16.mxu0 %v3265
        %4620 = vmatpush1.bf16.msra.mxu0 %v3264
        %4621 = vmatprep.subr.bf16.mxu0 %v3289
        %4622 = vmatpush1.bf16.msra.mxu0 %v3288
        %4623 = vmatprep.subr.bf16.mxu0 %v3313
        %4624 = vmatpush1.bf16.msra.mxu0 %v3312
        %4625 = vmatprep.subr.bf16.mxu0 %v3337
        %4626 = vmatpush1.bf16.msra.mxu0 %v3336
        %4627 = vmatprep.subr.bf16.mxu0 %v3361
        %4628 = vmatpush1.bf16.msra.mxu0 %v3360
        %4629 = vmatprep.subr.bf16.mxu0 %v3385
        %4630 = vmatpush1.bf16.msra.mxu0 %v3384
        %4631 = vmatprep.subr.bf16.mxu0 0
        %4632 = vmatpush1.bf16.msra.mxu0 0
        %4633 = vmatprep.subr.bf16.mxu0 0
        %4634 = vmatpush1.bf16.msra.mxu0 0
        %4635 = vmatprep.subr.bf16.mxu0 0
        %4636 = vmatpush1.bf16.msra.mxu0 0
        %4637 = vmatprep.subr.bf16.mxu0 0
        %4638 = vmatpush1.bf16.msra.mxu0 0
        %4639 = vmatprep.subr.bf16.mxu0 0
        %4640 = vmatpush1.bf16.msra.mxu0 0
        %4641 = vmatprep.subr.bf16.mxu0 0
        %4642 = vmatpush1.bf16.msra.mxu0 0
        %4643 = vmatprep.subr.bf16.mxu0 0
        %4644 = vmatpush1.bf16.msra.mxu0 0
        %4645 = vmatprep.mubr.bf16.mxu0 %v3996
        %4646 = vmatmul.mubr.bf16.gmra.mrb[0].mxu0 %v266
        %v4647 = vpop.f32.mrb[0].mxu0
        %v4648 = vadd.f32 %v4607, %v4647
        %v4649 = vpop.f32.mrb[0].mxu0
        %v4650 = vadd.f32 %v4609, %v4649
        %v4651 = vpop.f32.mrb[0].mxu0
        %v4652 = vpop.f32.mrb[0].mxu0
        %4653 = vdwg.mxu0
        %4654 = vmatprep.subr.bf16.mxu0 %v2811
        %4655 = vmatpush1.bf16.msra.mxu0 %v2810
        %4656 = vmatprep.subr.bf16.mxu0 %v2835
        %4657 = vmatpush1.bf16.msra.mxu0 %v2834
        %4658 = vmatprep.subr.bf16.mxu0 %v2859
        %4659 = vmatpush1.bf16.msra.mxu0 %v2858
        %4660 = vmatprep.subr.bf16.mxu0 %v2883
        %4661 = vmatpush1.bf16.msra.mxu0 %v2882
        %4662 = vmatprep.subr.bf16.mxu0 %v2907
        %4663 = vmatpush1.bf16.msra.mxu0 %v2906
        %4664 = vmatprep.subr.bf16.mxu0 %v2931
        %4665 = vmatpush1.bf16.msra.mxu0 %v2930
        %4666 = vmatprep.subr.bf16.mxu0 %v2955
        %4667 = vmatpush1.bf16.msra.mxu0 %v2954
        %4668 = vmatprep.subr.bf16.mxu0 %v2979
        %4669 = vmatpush1.bf16.msra.mxu0 %v2978
        %4670 = vmatprep.subr.bf16.mxu0 %v3003
        %4671 = vmatpush1.bf16.msra.mxu0 %v3002
        %4672 = vmatprep.subr.bf16.mxu0 %v3027
        %4673 = vmatpush1.bf16.msra.mxu0 %v3026
        %4674 = vmatprep.subr.bf16.mxu0 %v3051
        %4675 = vmatpush1.bf16.msra.mxu0 %v3050
        %4676 = vmatprep.subr.bf16.mxu0 %v3075
        %4677 = vmatpush1.bf16.msra.mxu0 %v3074
        %4678 = vmatprep.subr.bf16.mxu0 %v3099
        %4679 = vmatpush1.bf16.msra.mxu0 %v3098
        %4680 = vmatprep.subr.bf16.mxu0 %v3123
        %4681 = vmatpush1.bf16.msra.mxu0 %v3122
        %4682 = vmatprep.subr.bf16.mxu0 %v3147
        %4683 = vmatpush1.bf16.msra.mxu0 %v3146
        %4684 = vmatprep.subr.bf16.mxu0 %v3171
        %4685 = vmatpush1.bf16.msra.mxu0 %v3170
        %4686 = vmatprep.mubr.bf16.mxu0 %v265
        %4687 = vmatmul.mubr.bf16.gmra.mrb[0].mxu0 %v264
        %v4688 = vpop.f32.mrb[0].mxu0
        %v4689 = vadd.f32 %v941, %v4688
        %v4690 = vpop.f32.mrb[0].mxu0
        %v4691 = vadd.f32 %v945, %v4690
        %v4692 = vpop.f32.mrb[0].mxu0
        %v4693 = vpop.f32.mrb[0].mxu0
        %4694 = vdwg.mxu0
        %4695 = vmatprep.subr.bf16.mxu0 %v3195
        %4696 = vmatpush1.bf16.msra.mxu0 %v3194
        %4697 = vmatprep.subr.bf16.mxu0 %v3219
        %4698 = vmatpush1.bf16.msra.mxu0 %v3218
        %4699 = vmatprep.subr.bf16.mxu0 %v3243
        %4700 = vmatpush1.bf16.msra.mxu0 %v3242
        %4701 = vmatprep.subr.bf16.mxu0 %v3267
        %4702 = vmatpush1.bf16.msra.mxu0 %v3266
        %4703 = vmatprep.subr.bf16.mxu0 %v3291
        %4704 = vmatpush1.bf16.msra.mxu0 %v3290
        %4705 = vmatprep.subr.bf16.mxu0 %v3315
        %4706 = vmatpush1.bf16.msra.mxu0 %v3314
        %4707 = vmatprep.subr.bf16.mxu0 %v3339
        %4708 = vmatpush1.bf16.msra.mxu0 %v3338
        %4709 = vmatprep.subr.bf16.mxu0 %v3363
        %4710 = vmatpush1.bf16.msra.mxu0 %v3362
        %4711 = vmatprep.subr.bf16.mxu0 %v3387
        %4712 = vmatpush1.bf16.msra.mxu0 %v3386
        %4713 = vmatprep.subr.bf16.mxu0 0
        %4714 = vmatpush1.bf16.msra.mxu0 0
        %4715 = vmatprep.subr.bf16.mxu0 0
        %4716 = vmatpush1.bf16.msra.mxu0 0
        %4717 = vmatprep.subr.bf16.mxu0 0
        %4718 = vmatpush1.bf16.msra.mxu0 0
        %4719 = vmatprep.subr.bf16.mxu0 0
        %4720 = vmatpush1.bf16.msra.mxu0 0
        %4721 = vmatprep.subr.bf16.mxu0 0
        %4722 = vmatpush1.bf16.msra.mxu0 0
        %4723 = vmatprep.subr.bf16.mxu0 0
        %4724 = vmatpush1.bf16.msra.mxu0 0
        %4725 = vmatprep.subr.bf16.mxu0 0
        %4726 = vmatpush1.bf16.msra.mxu0 0
        %4727 = vmatprep.mubr.bf16.mxu0 %v3996
        %4728 = vmatmul.mubr.bf16.gmra.mrb[0].mxu0 %v266
        %v4729 = vpop.f32.mrb[0].mxu0
        %v4730 = vadd.f32 %v4689, %v4729
        %v4731 = vpop.f32.mrb[0].mxu0
        %v4732 = vadd.f32 %v4691, %v4731
        %v4733 = vpop.f32.mrb[0].mxu0
        %v4734 = vpop.f32.mrb[0].mxu0
        %4735 = vdwg.mxu0
        %4736 = vmatprep.subr.bf16.mxu0 %v2813
        %4737 = vmatpush1.bf16.msra.mxu0 %v2812
        %4738 = vmatprep.subr.bf16.mxu0 %v2837
        %4739 = vmatpush1.bf16.msra.mxu0 %v2836
        %4740 = vmatprep.subr.bf16.mxu0 %v2861
        %4741 = vmatpush1.bf16.msra.mxu0 %v2860
        %4742 = vmatprep.subr.bf16.mxu0 %v2885
        %4743 = vmatpush1.bf16.msra.mxu0 %v2884
        %4744 = vmatprep.subr.bf16.mxu0 %v2909
        %4745 = vmatpush1.bf16.msra.mxu0 %v2908
        %4746 = vmatprep.subr.bf16.mxu0 %v2933
        %4747 = vmatpush1.bf16.msra.mxu0 %v2932
        %4748 = vmatprep.subr.bf16.mxu0 %v2957
        %4749 = vmatpush1.bf16.msra.mxu0 %v2956
        %4750 = vmatprep.subr.bf16.mxu0 %v2981
        %4751 = vmatpush1.bf16.msra.mxu0 %v2980
        %4752 = vmatprep.subr.bf16.mxu0 %v3005
        %4753 = vmatpush1.bf16.msra.mxu0 %v3004
        %4754 = vmatprep.subr.bf16.mxu0 %v3029
        %4755 = vmatpush1.bf16.msra.mxu0 %v3028
        %4756 = vmatprep.subr.bf16.mxu0 %v3053
        %4757 = vmatpush1.bf16.msra.mxu0 %v3052
        %4758 = vmatprep.subr.bf16.mxu0 %v3077
        %4759 = vmatpush1.bf16.msra.mxu0 %v3076
        %4760 = vmatprep.subr.bf16.mxu0 %v3101
        %4761 = vmatpush1.bf16.msra.mxu0 %v3100
        %4762 = vmatprep.subr.bf16.mxu0 %v3125
        %4763 = vmatpush1.bf16.msra.mxu0 %v3124
        %4764 = vmatprep.subr.bf16.mxu0 %v3149
        %4765 = vmatpush1.bf16.msra.mxu0 %v3148
        %4766 = vmatprep.subr.bf16.mxu0 %v3173
        %4767 = vmatpush1.bf16.msra.mxu0 %v3172
        %4768 = vmatprep.mubr.bf16.mxu0 %v265
        %4769 = vmatmul.mubr.bf16.gmra.mrb[0].mxu0 %v264
        %v4770 = vpop.f32.mrb[0].mxu0
        %v4771 = vadd.f32 %v949, %v4770
        %v4772 = vpop.f32.mrb[0].mxu0
        %v4773 = vadd.f32 %v953, %v4772
        %v4774 = vpop.f32.mrb[0].mxu0
        %v4775 = vpop.f32.mrb[0].mxu0
        %4776 = vdwg.mxu0
        %4777 = vmatprep.subr.bf16.mxu0 %v3197
        %4778 = vmatpush1.bf16.msra.mxu0 %v3196
        %4779 = vmatprep.subr.bf16.mxu0 %v3221
        %4780 = vmatpush1.bf16.msra.mxu0 %v3220
        %4781 = vmatprep.subr.bf16.mxu0 %v3245
        %4782 = vmatpush1.bf16.msra.mxu0 %v3244
        %4783 = vmatprep.subr.bf16.mxu0 %v3269
        %4784 = vmatpush1.bf16.msra.mxu0 %v3268
        %4785 = vmatprep.subr.bf16.mxu0 %v3293
        %4786 = vmatpush1.bf16.msra.mxu0 %v3292
        %4787 = vmatprep.subr.bf16.mxu0 %v3317
        %4788 = vmatpush1.bf16.msra.mxu0 %v3316
        %4789 = vmatprep.subr.bf16.mxu0 %v3341
        %4790 = vmatpush1.bf16.msra.mxu0 %v3340
        %4791 = vmatprep.subr.bf16.mxu0 %v3365
        %4792 = vmatpush1.bf16.msra.mxu0 %v3364
        %4793 = vmatprep.subr.bf16.mxu0 %v3389
        %4794 = vmatpush1.bf16.msra.mxu0 %v3388
        %4795 = vmatprep.subr.bf16.mxu0 0
        %4796 = vmatpush1.bf16.msra.mxu0 0
        %4797 = vmatprep.subr.bf16.mxu0 0
        %4798 = vmatpush1.bf16.msra.mxu0 0
        %4799 = vmatprep.subr.bf16.mxu0 0
        %4800 = vmatpush1.bf16.msra.mxu0 0
        %4801 = vmatprep.subr.bf16.mxu0 0
        %4802 = vmatpush1.bf16.msra.mxu0 0
        %4803 = vmatprep.subr.bf16.mxu0 0
        %4804 = vmatpush1.bf16.msra.mxu0 0
        %4805 = vmatprep.subr.bf16.mxu0 0
        %4806 = vmatpush1.bf16.msra.mxu0 0
        %4807 = vmatprep.subr.bf16.mxu0 0
        %4808 = vmatpush1.bf16.msra.mxu0 0
        %4809 = vmatprep.mubr.bf16.mxu0 %v3996
        %4810 = vmatmul.mubr.bf16.gmra.mrb[0].mxu0 %v266
        %v4811 = vpop.f32.mrb[0].mxu0
        %v4812 = vadd.f32 %v4771, %v4811
        %v4813 = vpop.f32.mrb[0].mxu0
        %v4814 = vadd.f32 %v4773, %v4813
        %v4815 = vpop.f32.mrb[0].mxu0
        %v4816 = vpop.f32.mrb[0].mxu0
        %4817 = vdwg.mxu0
        %4818 = vmatprep.subr.bf16.mxu0 %v2815
        %4819 = vmatpush1.bf16.msra.mxu0 %v2814
        %4820 = vmatprep.subr.bf16.mxu0 %v2839
        %4821 = vmatpush1.bf16.msra.mxu0 %v2838
        %4822 = vmatprep.subr.bf16.mxu0 %v2863
        %4823 = vmatpush1.bf16.msra.mxu0 %v2862
        %4824 = vmatprep.subr.bf16.mxu0 %v2887
        %4825 = vmatpush1.bf16.msra.mxu0 %v2886
        %4826 = vmatprep.subr.bf16.mxu0 %v2911
        %4827 = vmatpush1.bf16.msra.mxu0 %v2910
        %4828 = vmatprep.subr.bf16.mxu0 %v2935
        %4829 = vmatpush1.bf16.msra.mxu0 %v2934
        %4830 = vmatprep.subr.bf16.mxu0 %v2959
        %4831 = vmatpush1.bf16.msra.mxu0 %v2958
        %4832 = vmatprep.subr.bf16.mxu0 %v2983
        %4833 = vmatpush1.bf16.msra.mxu0 %v2982
        %4834 = vmatprep.subr.bf16.mxu0 %v3007
        %4835 = vmatpush1.bf16.msra.mxu0 %v3006
        %4836 = vmatprep.subr.bf16.mxu0 %v3031
        %4837 = vmatpush1.bf16.msra.mxu0 %v3030
        %4838 = vmatprep.subr.bf16.mxu0 %v3055
        %4839 = vmatpush1.bf16.msra.mxu0 %v3054
        %4840 = vmatprep.subr.bf16.mxu0 %v3079
        %4841 = vmatpush1.bf16.msra.mxu0 %v3078
        %4842 = vmatprep.subr.bf16.mxu0 %v3103
        %4843 = vmatpush1.bf16.msra.mxu0 %v3102
        %4844 = vmatprep.subr.bf16.mxu0 %v3127
        %4845 = vmatpush1.bf16.msra.mxu0 %v3126
        %4846 = vmatprep.subr.bf16.mxu0 %v3151
        %4847 = vmatpush1.bf16.msra.mxu0 %v3150
        %4848 = vmatprep.subr.bf16.mxu0 %v3175
        %4849 = vmatpush1.bf16.msra.mxu0 %v3174
        %4850 = vmatprep.mubr.bf16.mxu0 %v265
        %4851 = vmatmul.mubr.bf16.gmra.mrb[0].mxu0 %v264
        %v4852 = vpop.f32.mrb[0].mxu0
        %v4853 = vadd.f32 %v957, %v4852
        %v4854 = vpop.f32.mrb[0].mxu0
        %v4855 = vadd.f32 %v961, %v4854
        %v4856 = vpop.f32.mrb[0].mxu0
        %v4857 = vpop.f32.mrb[0].mxu0
        %4858 = vdwg.mxu0
        %4859 = vmatprep.subr.bf16.mxu0 %v3199
        %4860 = vmatpush1.bf16.msra.mxu0 %v3198
        %4861 = vmatprep.subr.bf16.mxu0 %v3223
        %4862 = vmatpush1.bf16.msra.mxu0 %v3222
        %4863 = vmatprep.subr.bf16.mxu0 %v3247
        %4864 = vmatpush1.bf16.msra.mxu0 %v3246
        %4865 = vmatprep.subr.bf16.mxu0 %v3271
        %4866 = vmatpush1.bf16.msra.mxu0 %v3270
        %4867 = vmatprep.subr.bf16.mxu0 %v3295
        %4868 = vmatpush1.bf16.msra.mxu0 %v3294
        %4869 = vmatprep.subr.bf16.mxu0 %v3319
        %4870 = vmatpush1.bf16.msra.mxu0 %v3318
        %4871 = vmatprep.subr.bf16.mxu0 %v3343
        %4872 = vmatpush1.bf16.msra.mxu0 %v3342
        %4873 = vmatprep.subr.bf16.mxu0 %v3367
        %4874 = vmatpush1.bf16.msra.mxu0 %v3366
        %4875 = vmatprep.subr.bf16.mxu0 %v3391
        %4876 = vmatpush1.bf16.msra.mxu0 %v3390
        %4877 = vmatprep.subr.bf16.mxu0 0
        %4878 = vmatpush1.bf16.msra.mxu0 0
        %4879 = vmatprep.subr.bf16.mxu0 0
        %4880 = vmatpush1.bf16.msra.mxu0 0
        %4881 = vmatprep.subr.bf16.mxu0 0
        %4882 = vmatpush1.bf16.msra.mxu0 0
        %4883 = vmatprep.subr.bf16.mxu0 0
        %4884 = vmatpush1.bf16.msra.mxu0 0
        %4885 = vmatprep.subr.bf16.mxu0 0
        %4886 = vmatpush1.bf16.msra.mxu0 0
        %4887 = vmatprep.subr.bf16.mxu0 0
        %4888 = vmatpush1.bf16.msra.mxu0 0
        %4889 = vmatprep.subr.bf16.mxu0 0
        %4890 = vmatpush1.bf16.msra.mxu0 0
        %4891 = vmatprep.mubr.bf16.mxu0 %v3996
        %4892 = vmatmul.mubr.bf16.gmra.mrb[0].mxu0 %v266
        %v4893 = vpop.f32.mrb[0].mxu0
        %v4894 = vadd.f32 %v4853, %v4893
        %v4895 = vpop.f32.mrb[0].mxu0
        %v4896 = vadd.f32 %v4855, %v4895
        %v4897 = vpop.f32.mrb[0].mxu0
        %v4898 = vpop.f32.mrb[0].mxu0
        %4899 = vdwg.mxu0
        %4900 = vmatprep.subr.bf16.mxu0 %v2817
        %4901 = vmatpush1.bf16.msra.mxu0 %v2816
        %4902 = vmatprep.subr.bf16.mxu0 %v2841
        %4903 = vmatpush1.bf16.msra.mxu0 %v2840
        %4904 = vmatprep.subr.bf16.mxu0 %v2865
        %4905 = vmatpush1.bf16.msra.mxu0 %v2864
        %4906 = vmatprep.subr.bf16.mxu0 %v2889
        %4907 = vmatpush1.bf16.msra.mxu0 %v2888
        %4908 = vmatprep.subr.bf16.mxu0 %v2913
        %4909 = vmatpush1.bf16.msra.mxu0 %v2912
        %4910 = vmatprep.subr.bf16.mxu0 %v2937
        %4911 = vmatpush1.bf16.msra.mxu0 %v2936
        %4912 = vmatprep.subr.bf16.mxu0 %v2961
        %4913 = vmatpush1.bf16.msra.mxu0 %v2960
        %4914 = vmatprep.subr.bf16.mxu0 %v2985
        %4915 = vmatpush1.bf16.msra.mxu0 %v2984
        %4916 = vmatprep.subr.bf16.mxu0 %v3009
        %4917 = vmatpush1.bf16.msra.mxu0 %v3008
        %4918 = vmatprep.subr.bf16.mxu0 %v3033
        %4919 = vmatpush1.bf16.msra.mxu0 %v3032
        %4920 = vmatprep.subr.bf16.mxu0 %v3057
        %4921 = vmatpush1.bf16.msra.mxu0 %v3056
        %4922 = vmatprep.subr.bf16.mxu0 %v3081
        %4923 = vmatpush1.bf16.msra.mxu0 %v3080
        %4924 = vmatprep.subr.bf16.mxu0 %v3105
        %4925 = vmatpush1.bf16.msra.mxu0 %v3104
        %4926 = vmatprep.subr.bf16.mxu0 %v3129
        %4927 = vmatpush1.bf16.msra.mxu0 %v3128
        %4928 = vmatprep.subr.bf16.mxu0 %v3153
        %4929 = vmatpush1.bf16.msra.mxu0 %v3152
        %4930 = vmatprep.subr.bf16.mxu0 %v3177
        %4931 = vmatpush1.bf16.msra.mxu0 %v3176
        %4932 = vmatprep.mubr.bf16.mxu0 %v265
        %4933 = vmatmul.mubr.bf16.gmra.mrb[0].mxu0 %v264
        %v4934 = vpop.f32.mrb[0].mxu0
        %v4935 = vadd.f32 %v965, %v4934
        %v4936 = vpop.f32.mrb[0].mxu0
        %v4937 = vadd.f32 %v969, %v4936
        %v4938 = vpop.f32.mrb[0].mxu0
        %v4939 = vpop.f32.mrb[0].mxu0
        %4940 = vdwg.mxu0
        %4941 = vmatprep.subr.bf16.mxu0 %v3201
        %4942 = vmatpush1.bf16.msra.mxu0 %v3200
        %4943 = vmatprep.subr.bf16.mxu0 %v3225
        %4944 = vmatpush1.bf16.msra.mxu0 %v3224
        %4945 = vmatprep.subr.bf16.mxu0 %v3249
        %4946 = vmatpush1.bf16.msra.mxu0 %v3248
        %4947 = vmatprep.subr.bf16.mxu0 %v3273
        %4948 = vmatpush1.bf16.msra.mxu0 %v3272
        %4949 = vmatprep.subr.bf16.mxu0 %v3297
        %4950 = vmatpush1.bf16.msra.mxu0 %v3296
        %4951 = vmatprep.subr.bf16.mxu0 %v3321
        %4952 = vmatpush1.bf16.msra.mxu0 %v3320
        %4953 = vmatprep.subr.bf16.mxu0 %v3345
        %4954 = vmatpush1.bf16.msra.mxu0 %v3344
        %4955 = vmatprep.subr.bf16.mxu0 %v3369
        %4956 = vmatpush1.bf16.msra.mxu0 %v3368
        %4957 = vmatprep.subr.bf16.mxu0 %v3393
        %4958 = vmatpush1.bf16.msra.mxu0 %v3392
        %4959 = vmatprep.subr.bf16.mxu0 0
        %4960 = vmatpush1.bf16.msra.mxu0 0
        %4961 = vmatprep.subr.bf16.mxu0 0
        %4962 = vmatpush1.bf16.msra.mxu0 0
        %4963 = vmatprep.subr.bf16.mxu0 0
        %4964 = vmatpush1.bf16.msra.mxu0 0
        %4965 = vmatprep.subr.bf16.mxu0 0
        %4966 = vmatpush1.bf16.msra.mxu0 0
        %4967 = vmatprep.subr.bf16.mxu0 0
        %4968 = vmatpush1.bf16.msra.mxu0 0
        %4969 = vmatprep.subr.bf16.mxu0 0
        %4970 = vmatpush1.bf16.msra.mxu0 0
        %4971 = vmatprep.subr.bf16.mxu0 0
        %4972 = vmatpush1.bf16.msra.mxu0 0
        %4973 = vmatprep.mubr.bf16.mxu0 %v3996
        %4974 = vmatmul.mubr.bf16.gmra.mrb[0].mxu0 %v266
        %v4975 = vpop.f32.mrb[0].mxu0
        %v4976 = vadd.f32 %v4935, %v4975
        %v4977 = vpop.f32.mrb[0].mxu0
        %v4978 = vadd.f32 %v4937, %v4977
        %v4979 = vpop.f32.mrb[0].mxu0
        %v4980 = vpop.f32.mrb[0].mxu0
        %4981 = vdwg.mxu0
        %v5006 = vcombine.low %v4074, %v4076
        %v5007 = vcombine.low %v4156, %v4158
        %v5009 = vunpack.c.l.s4 1983009808
        %v5010 = vunpack.c.0.s8 %v5009
        %v5011 = vlaneseq
        %v5012 = vshrl.u32 %v5011, 7
        %v5013 = vsub.s32 %v5010, %v5012
        %v5014 = vrot.slane %v5006, %v5013
        %v5016 = vunpack.c.l.s4 1983009808
        %v5017 = vunpack.c.0.s8 %v5016
        %v5018 = vlaneseq
        %v5019 = vshrl.u32 %v5018, 7
        %v5020 = vsub.s32 %v5017, %v5019
        %v5021 = vrot.slane %v5007, %v5020
        %v5022 = vcombine.low %v5014, %v5021
        %v5023 = vcombine.low %v4238, %v4240
        %v5024 = vcombine.low %v4320, %v4322
        %v5026 = vunpack.c.l.s4 1983009808
        %v5027 = vunpack.c.0.s8 %v5026
        %v5028 = vlaneseq
        %v5029 = vshrl.u32 %v5028, 7
        %v5030 = vsub.s32 %v5027, %v5029
        %v5031 = vrot.slane %v5023, %v5030
        %v5033 = vunpack.c.l.s4 1983009808
        %v5034 = vunpack.c.0.s8 %v5033
        %v5035 = vlaneseq
        %v5036 = vshrl.u32 %v5035, 7
        %v5037 = vsub.s32 %v5034, %v5036
        %v5038 = vrot.slane %v5024, %v5037
        %v5039 = vcombine.low %v5031, %v5038
        %v5040 = vcombine.low %v4402, %v4404
        %v5041 = vcombine.low %v4484, %v4486
        %v5043 = vunpack.c.l.s4 1983009808
        %v5044 = vunpack.c.0.s8 %v5043
        %v5045 = vlaneseq
        %v5046 = vshrl.u32 %v5045, 7
        %v5047 = vsub.s32 %v5044, %v5046
        %v5048 = vrot.slane %v5040, %v5047
        %v5050 = vunpack.c.l.s4 1983009808
        %v5051 = vunpack.c.0.s8 %v5050
        %v5052 = vlaneseq
        %v5053 = vshrl.u32 %v5052, 7
        %v5054 = vsub.s32 %v5051, %v5053
        %v5055 = vrot.slane %v5041, %v5054
        %v5056 = vcombine.low %v5048, %v5055
        %v5057 = vcombine.low %v4566, %v4568
        %v5058 = vcombine.low %v4648, %v4650
        %v5060 = vunpack.c.l.s4 1983009808
        %v5061 = vunpack.c.0.s8 %v5060
        %v5062 = vlaneseq
        %v5063 = vshrl.u32 %v5062, 7
        %v5064 = vsub.s32 %v5061, %v5063
        %v5065 = vrot.slane %v5057, %v5064
        %v5067 = vunpack.c.l.s4 1983009808
        %v5068 = vunpack.c.0.s8 %v5067
        %v5069 = vlaneseq
        %v5070 = vshrl.u32 %v5069, 7
        %v5071 = vsub.s32 %v5068, %v5070
        %v5072 = vrot.slane %v5058, %v5071
        %v5073 = vcombine.low %v5065, %v5072
        %v5074 = vcombine.low %v4730, %v4732
        %v5075 = vcombine.low %v4812, %v4814
        %v5077 = vunpack.c.l.s4 1983009808
        %v5078 = vunpack.c.0.s8 %v5077
        %v5079 = vlaneseq
        %v5080 = vshrl.u32 %v5079, 7
        %v5081 = vsub.s32 %v5078, %v5080
        %v5082 = vrot.slane %v5074, %v5081
        %v5084 = vunpack.c.l.s4 1983009808
        %v5085 = vunpack.c.0.s8 %v5084
        %v5086 = vlaneseq
        %v5087 = vshrl.u32 %v5086, 7
        %v5088 = vsub.s32 %v5085, %v5087
        %v5089 = vrot.slane %v5075, %v5088
        %v5090 = vcombine.low %v5082, %v5089
        %v5091 = vcombine.low %v4894, %v4896
        %v5092 = vcombine.low %v4976, %v4978
        %v5094 = vunpack.c.l.s4 1983009808
        %v5095 = vunpack.c.0.s8 %v5094
        %v5096 = vlaneseq
        %v5097 = vshrl.u32 %v5096, 7
        %v5098 = vsub.s32 %v5095, %v5097
        %v5099 = vrot.slane %v5091, %v5098
        %v5101 = vunpack.c.l.s4 1983009808
        %v5102 = vunpack.c.0.s8 %v5101
        %v5103 = vlaneseq
        %v5104 = vshrl.u32 %v5103, 7
        %v5105 = vsub.s32 %v5102, %v5104
        %v5106 = vrot.slane %v5092, %v5105
        %v5107 = vcombine.low %v5099, %v5106
        %5114 = vst [vmem:[%s236] sm:$0xff] %v5022
        %5115 = vst [vmem:[%s236 + $0x8] sm:$0xff] %v5039
        %5116 = vst [vmem:[%s236 + $0x10] sm:$0xff] %v5056
        %5117 = vst [vmem:[%s236 + $0x18] sm:$0xff] %v5073
        %5118 = vst [vmem:[%s236 + $0x20] sm:$0xff] %v5090
        %5119 = vst [vmem:[%s236 + $0x28] sm:$0xff] %v5107
        %s5120 = sand.u32 %s102, 1
        %s5121 = scalar_lea.sflag [#allocation4], %s5120
        %s5122 = sand.u32 %s102, 1
        %s5123 = smul.addr %s5122, 48
        %s5124 = scalar_lea.vmem [#allocation8], %s5123
        // Predicated region
        $region45: #{tpu_custom_call.1} parent=31 // pred_check
          %p5125 = pneg %p112
        $region46: #{tpu_custom_call.1} parent=31 // pred_check_branch
          %5127 = sbr.rel (%p5125) target = $region48
        $region47: #{tpu_custom_call.1} parent=31 // pred_region
          %s5128 = smul.u32 24, %s21
          %s5130 = ssub.s32 768, 768
          %5131 = vsyncadd %s5121, %s5130
          %s5132 = smul.addr %s5128, 32
          %s5133 = scalar_lea.hbm %s3, %s5132
          %s5135 = sshll.u32 %s5124, 4
          %s5136 = int_to_ptr.vmem [resolvable:$true] %s5135
          %5138 = dma.vmem_to_hbm [thread:$0]  %s5136, 768, %s5133, %s5121
        $region48: #{tpu_custom_call.1} parent=31 // pred_fallthru
          _
      $region32: #{tpu_custom_call.1} parent=5 // pred_fallthru
        _
      %p5139 = scmp.le.s32.totalorder 2, %s16
      // Predicated region
      $region49: #{tpu_custom_call.1} parent=5 // pred_check
        %p5140 = pneg %p5139
      $region50: #{tpu_custom_call.1} parent=5 // pred_check_branch
        %5142 = sbr.rel (%p5140) target = $region52
      $region51: #{tpu_custom_call.1} parent=5 // pred_region
        %s5143 = ssub.s32 %s16, 2
        // Predicated region
        $region53: #{tpu_custom_call.1} parent=51 // pred_check
          %p5144 = pneg %p118
        $region54: #{tpu_custom_call.1} parent=51 // pred_check_branch
          %5146 = sbr.rel (%p5144) target = $region56
        $region55: #{tpu_custom_call.1} parent=51 // pred_region
          %s5147 = sand.u32 %s103, 1
          %s5148 = scalar_lea.sflag [#allocation4], %s5147
          %s5149 = sand.u32 %s103, 1
          %s5150 = smul.addr %s5149, 48
          %s5151 = scalar_lea.vmem [#allocation8], %s5150
          %5152 = dma.done %s5148, 768
        $region56: #{tpu_custom_call.1} parent=51 // pred_fallthru
          _
      $region52: #{tpu_custom_call.1} parent=5 // pred_fallthru
        _
    $region6: #{tpu_custom_call.1} parent=1 // loop_footer
      %s20 = sadd.s32 1, %s16
    $region7: #{tpu_custom_call.1} parent=1 // loop_footer_branch
      %15 = sbr.rel target = $region3
    $region8: #{tpu_custom_call.1} parent=1 // loop_exit
      _
    %5153 = vsyncpa [#allocation3], 1
    %s5154 = scalar_lea.sflag [#allocation3], 1
    %5155 = vsyncpa %s5154, 1
    %5156 = vsyncpa [#allocation6], 1
    %s5157 = scalar_lea.sflag [#allocation6], 1
    %5158 = vsyncpa %s5157, 1
    %5159 = vsyncpa [#allocation4], 1
    %s5160 = scalar_lea.sflag [#allocation4], 1
    %5161 = vsyncpa %s5160, 1

</llo_original>
